<compile_context>
chip_gen: v7x
topology: tpu7x:2x2x1
jax: 0.10.0
libtpu: 0.0.40
codegen_flags: <defaults>
</compile_context>

<pallas_src>
import functools

import jax
import jax.numpy as jnp
from jax.experimental import pallas as pl
from jax.experimental.pallas import tpu as pltpu


_CK_PAD = 32     # im2col K (=C*9=27) padded for bf16 sublane packing / MXU K
_LANE = 128      # lane-dense width used for F and E


def _encoder_kernel(patches_ref, wc_ref, bc_ref, wl_ref, bl_ref,
                    gamma_ref, beta_ref, out_ref, *, b, t_blk, hw, eps):
    # patches_ref: (T_blk*B*HW, CKp) bf16, rows ordered (t, b, h*w)
    # wc_ref:      (CKp, Fp)  bf16  conv weight (im2col layout, zero-padded)
    # bc_ref:      (1, Fp)    f32   conv bias
    # wl_ref:      (Fp, Ep)   bf16  linear weight^T, pre-scaled by 1/HW
    # bl_ref:      (1, Ep)    f32   linear bias
    # gamma_ref:   (1, Ep)    f32   BN weight
    # beta_ref:    (1, Ep)    f32   BN bias
    # out_ref:     (T_blk*B, Ep) f32  (flat, sublane/lane-aligned store)
    Fp = wc_ref.shape[1]
    Ep = out_ref.shape[1]

    # "ResNet" stand-in: 3x3 conv as one im2col matmul (f32 accumulation),
    # bias + ReLU in f32 (v5e has no bf16 VPU).
    conv = jnp.dot(patches_ref[...], wc_ref[...],
                   preferred_element_type=jnp.float32)               # (Rb, Fp)
    conv = jnp.maximum(conv + bc_ref[...], 0.0)

    # Global sum-pool over spatial positions (the 1/HW scale is folded into wl).
    # (Rb, Fp) -> (T_blk*B, HW, Fp) is an (8,128)-aligned regrouping: free.
    feat = jnp.sum(conv.reshape(t_blk * b, hw, Fp), axis=1)          # (T_blk*B, Fp)

    # Linear head: feat @ (W^T / HW) + b.
    z = jnp.dot(feat.astype(wl_ref.dtype), wl_ref[...],
                preferred_element_type=jnp.float32) + bl_ref[...]    # (T_blk*B, Ep)

    # BatchNorm1d (training-mode semantics: per-timestep stats over the batch,
    # biased variance).  Stats are computed on an in-register reshape; the
    # store stays flat 2-D so the vst is unmasked.
    z3 = z.reshape(t_blk, b, Ep)
    mean = jnp.mean(z3, axis=1, keepdims=True)                       # (T_blk, 1, Ep)
    var = jnp.mean((z3 - mean) ** 2, axis=1, keepdims=True)
    zn = ((z3 - mean) * jax.lax.rsqrt(var + eps)).reshape(t_blk * b, Ep)
    out_ref[...] = zn * gamma_ref[...] + beta_ref[...]               # (T_blk*B, Ep)


def _pad_axis(x, axis, size):
    pad = [(0, 0)] * x.ndim
    pad[axis] = (0, size - x.shape[axis])
    return jnp.pad(x, pad)


def _im2col_3x3(images):
    # images: (B, T, C, H, W) -> (B, T, H*W, C*9), zero "same" padding.
    B, T, C, H, W = images.shape
    xp = jnp.pad(images, ((0, 0), (0, 0), (0, 0), (1, 1), (1, 1)))
    cols = [xp[..., dy:dy + H, dx:dx + W] for dy in range(3) for dx in range(3)]
    patches = jnp.stack(cols, axis=-1)                    # (B,T,C,H,W,9)
    patches = patches.transpose(0, 1, 3, 4, 2, 5)         # (B,T,H,W,C,9)
    return patches.reshape(B, T, H * W, C * 9)


def _prepare(images, params):
    """Builds the (bf16 / lane-padded, timestep-major) operands shared by the
    kernel and the quantized reference."""
    B, T, C, H, W = images.shape
    F = params["conv_w"].shape[0]
    hw = H * W

    # TODO(synk): at real ResNet scale this host-side im2col (9x HBM blow-up)
    # should move in-kernel: DMA the zero-padded image block (memory_space=
    # pl.ANY + make_async_copy) and build the 9 shifted taps with static VMEM
    # slices, cutting conv-operand HBM traffic ~9x.  At these toy shapes the
    # bf16 cast already keeps the patch matrix tiny.
    patches = _im2col_3x3(images)                                    # (B,T,HW,CK)
    patches = patches.transpose(1, 0, 2, 3)                          # (T,B,HW,CK): t-major rows
    patches = _pad_axis(patches, 3, _CK_PAD).astype(jnp.bfloat16)

    wc = params["conv_w"].reshape(F, -1).T                           # (CK, F)
    wc = _pad_axis(_pad_axis(wc, 0, _CK_PAD), 1, _LANE).astype(jnp.bfloat16)
    bc = _pad_axis(params["conv_b"].reshape(1, -1), 1, _LANE)        # (1, Fp) f32

    wl = (params["lin_w"] / hw).T                                    # (F, E), pool scale folded in
    wl = _pad_axis(_pad_axis(wl, 0, _LANE), 1, _LANE).astype(jnp.bfloat16)
    bl = _pad_axis(params["lin_b"].reshape(1, -1), 1, _LANE)
    gamma = _pad_axis(params["bn_w"].reshape(1, -1), 1, _LANE)
    beta = _pad_axis(params["bn_b"].reshape(1, -1), 1, _LANE)
    return patches, wc, bc, wl, bl, gamma, beta


def _pick_t_block(B, T):
    """Largest divisor of T that (a) gives >= 2 grid steps so double-buffering
    and v7x megacore sharding actually engage and (b) keeps B*T_blk a multiple
    of 8 so the output block is a full (8,128) tile (unmasked vst)."""
    divisors = [tb for tb in range(1, T + 1) if T % tb == 0]
    good = [tb for tb in divisors if tb < T and (B * tb) % 8 == 0]
    if good:
        return max(good)
    ok = [tb for tb in divisors if tb < T]
    return max(ok) if ok else T


def encoder_cnn_forward(images, params, *, eps=1e-5, t_block=None):
    """images: (B, T, C, H, W) float32 -> (B, T, embed_size) float32."""
    B, T, C, H, W = images.shape
    E = params["lin_w"].shape[0]
    hw = H * W
    # TODO(synk): if hw stops being a multiple of 8 at real backbone shapes
    # (e.g. 7x7=49), the in-kernel (Rb,Fp)->(T_blk*B,hw,Fp) reshape becomes a
    # materialized relayout; pad hw on the host (and mask the conv-bias rows).
    assert hw % 8 == 0, "spatial positions must stay sublane-aligned"

    t_blk = _pick_t_block(B, T) if t_block is None else t_block
    assert T % t_blk == 0, (T, t_blk)
    n_blocks = T // t_blk

    patches, wc, bc, wl, bl, gamma, beta = _prepare(images, params)
    R = T * B * hw
    Rb = t_blk * B * hw
    CKp, Fp, Ep = patches.shape[-1], wc.shape[1], wl.shape[1]
    patches_flat = patches.reshape(R, CKp)                 # rows ordered (t,b,hw)

    kernel = functools.partial(_encoder_kernel, b=B, t_blk=t_blk, hw=hw, eps=eps)

    # Advisory cost: the two MXU matmuls + BN rsqrt and the HBM bytes moved.
    flops = 2 * R * CKp * Fp + 2 * (T * B) * Fp * Ep
    bytes_accessed = (patches_flat.size * 2 + wc.size * 2 + wl.size * 2
                      + (bc.size + bl.size + gamma.size + beta.size) * 4
                      + T * B * Ep * 4)
    cost = pl.CostEstimate(flops=flops, transcendentals=T * Ep,
                           bytes_accessed=bytes_accessed)

    # Grid-invariant weight specs: constant index maps, so the pipeline skips
    # their re-DMA after step 0.
    # TODO(synk): once VMEM gets tight at real scale (v7x: 64 MiB physical),
    # add pipeline_mode=pl.Buffered(1) to these specs to drop the dead second
    # buffer; negligible at these shapes.
    const2d = lambda shape: pl.BlockSpec(shape, lambda i: (0, 0))

    out_flat = pl.pallas_call(
        kernel,
        out_shape=jax.ShapeDtypeStruct((T * B, Ep), jnp.float32),
        grid_spec=pltpu.PrefetchScalarGridSpec(
            num_scalar_prefetch=0,
            grid=(n_blocks,),                               # one step per timestep block
            in_specs=[
                pl.BlockSpec((Rb, CKp), lambda i: (i, 0)),  # patches: advances per block
                const2d((CKp, Fp)),                         # conv weight
                const2d((1, Fp)),                           # conv bias
                const2d((Fp, Ep)),                          # linear weight (pre-scaled)
                const2d((1, Ep)),                           # linear bias
                const2d((1, Ep)),                           # BN gamma
                const2d((1, Ep)),                           # BN beta
            ],
            out_specs=pl.BlockSpec((t_blk * B, Ep), lambda i: (i, 0)),
        ),
        compiler_params=pltpu.CompilerParams(
            # Timestep blocks are fully independent (BN stats are per-timestep
            # over the batch and each block holds all B rows of its timesteps),
            # so this axis is parallel -> megacore sharding on v7x.
            dimension_semantics=("parallel",),
            vmem_limit_bytes=32 * 1024 * 1024,
        ),
        cost_estimate=cost,
    )(patches_flat, wc, bc, wl, bl, gamma, beta)

    # (T*B, Ep) -> (B, T, E): tiny host-side reshape/transpose + drop lane pad.
    return out_flat.reshape(T, B, Ep)[..., :E].transpose(1, 0, 2)


def _reference(images, params, eps=1e-5):
    # Pure-JAX replica of the per-timestep PyTorch forward, using the same
    # quantized (bf16) operands / folded pooling scale as the kernel.
    B, T, C, H, W = images.shape
    E = params["lin_w"].shape[0]
    hw = H * W
    patches, wc, bc, wl, bl, gamma, beta = _prepare(images, params)
    outs = []
    for t in range(T):
        p = patches[t].reshape(B * hw, -1)
        conv = jnp.maximum(
            jnp.dot(p, wc, preferred_element_type=jnp.float32) + bc, 0.0)
        feat = jnp.sum(conv.reshape(B, hw, -1), axis=1)
        z = jnp.dot(feat.astype(wl.dtype), wl,
                    preferred_element_type=jnp.float32) + bl
        m = jnp.mean(z, axis=0, keepdims=True)
        v = jnp.mean((z - m) ** 2, axis=0, keepdims=True)
        outs.append((z - m) * jax.lax.rsqrt(v + eps) * gamma + beta)
    return jnp.stack(outs, axis=1)[..., :E]


if __name__ == "__main__":
    key = jax.random.PRNGKey(0)
    B, T, C, H, W = 2, 8, 3, 16, 16
    F = 32            # stand-in backbone feature dim (ResNet-152's 2048 in the original)
    E = 16            # embed_size

    k_img, k_cw, k_cb, k_lw, k_lb, k_g, k_b = jax.random.split(key, 7)
    images = jax.random.normal(k_img, (B, T, C, H, W), dtype=jnp.float32)
    params = {
        "conv_w": 0.1 * jax.random.normal(k_cw, (F, C, 3, 3), dtype=jnp.float32),
        "conv_b": 0.1 * jax.random.normal(k_cb, (F,), dtype=jnp.float32),
        "lin_w": 0.1 * jax.random.normal(k_lw, (E, F), dtype=jnp.float32),
        "lin_b": 0.1 * jax.random.normal(k_lb, (E,), dtype=jnp.float32),
        "bn_w": 1.0 + 0.1 * jax.random.normal(k_g, (E,), dtype=jnp.float32),
        "bn_b": 0.1 * jax.random.normal(k_b, (E,), dtype=jnp.float32),
    }

    out = jax.block_until_ready(encoder_cnn_forward(images, params))
    ref = jax.block_until_ready(_reference(images, params))

    assert out.shape == (B, T, E), out.shape
    err = float(jnp.max(jnp.abs(out - ref)))
    assert jnp.allclose(out, ref, atol=2e-3, rtol=2e-3), err
    print("KERNEL_OK")
</pallas_src>

<mosaic_0001>
module attributes {stable_mosaic.version = 11 : i64} {
  func.func @_encoder_kernel(%arg0: i32, %arg1: memref<2048x32xbf16, #tpu.memory_space<vmem>>, %arg2: memref<32x128xbf16, #tpu.memory_space<vmem>>, %arg3: memref<1x128xf32, #tpu.memory_space<vmem>>, %arg4: memref<128x128xbf16, #tpu.memory_space<vmem>>, %arg5: memref<1x128xf32, #tpu.memory_space<vmem>>, %arg6: memref<1x128xf32, #tpu.memory_space<vmem>>, %arg7: memref<1x128xf32, #tpu.memory_space<vmem>>, %arg8: memref<8x128xf32, #tpu.memory_space<vmem>>) attributes {dimension_semantics = [#tpu.dimension_semantics<parallel>], iteration_bounds = array<i64: 2>, scalar_prefetch = 0 : i64, scratch_operands = 0 : i64, tpu.core_type = #tpu.core_type<tc>, window_params = [{transform_indices = @transform_0, window_bounds = array<i64: 2048, 32>}, {pipeline_mode = #tpu.pipeline_mode<synchronous>, transform_indices = @transform_1, window_bounds = array<i64: 32, 128>}, {pipeline_mode = #tpu.pipeline_mode<synchronous>, transform_indices = @transform_2, window_bounds = array<i64: 1, 128>}, {pipeline_mode = #tpu.pipeline_mode<synchronous>, transform_indices = @transform_3, window_bounds = array<i64: 128, 128>}, {pipeline_mode = #tpu.pipeline_mode<synchronous>, transform_indices = @transform_4, window_bounds = array<i64: 1, 128>}, {pipeline_mode = #tpu.pipeline_mode<synchronous>, transform_indices = @transform_5, window_bounds = array<i64: 1, 128>}, {pipeline_mode = #tpu.pipeline_mode<synchronous>, transform_indices = @transform_6, window_bounds = array<i64: 1, 128>}, {transform_indices = @transform_7, window_bounds = array<i64: 8, 128>}]} {
    %c0 = arith.constant 0 : index
    %c0_0 = arith.constant 0 : index
    %0 = vector.load %arg1[%c0, %c0_0] : memref<2048x32xbf16, #tpu.memory_space<vmem>>, vector<2048x32xbf16>
    %c0_1 = arith.constant 0 : index
    %c0_2 = arith.constant 0 : index
    %1 = vector.load %arg2[%c0_1, %c0_2] : memref<32x128xbf16, #tpu.memory_space<vmem>>, vector<32x128xbf16>
    %cst = arith.constant dense<0.000000e+00> : vector<2048x128xf32>
    %2 = tpu.matmul %0, %1, %cst {dimension_numbers = #tpu.dot_dimension_numbers<[1], [0], [0], [1], [0, 0, 1, 1], [], []>} : vector<2048x32xbf16>, vector<32x128xbf16>, vector<2048x128xf32> -> vector<2048x128xf32>
    %c0_3 = arith.constant 0 : index
    %c0_4 = arith.constant 0 : index
    %3 = vector.load %arg3[%c0_3, %c0_4] : memref<1x128xf32, #tpu.memory_space<vmem>>, vector<1x128xf32>
    %4 = vector.broadcast %3 : vector<1x128xf32> to vector<2048x128xf32>
    %5 = arith.addf %2, %4 : vector<2048x128xf32>
    %cst_5 = arith.constant 0.000000e+00 : f32
    %6 = vector.broadcast %cst_5 : f32 to vector<2048x128xf32>
    %7 = arith.maximumf %5, %6 : vector<2048x128xf32>
    %8 = vector.shape_cast %7 : vector<2048x128xf32> to vector<8x256x128xf32>
    %cst_6 = arith.constant dense<0.000000e+00> : vector<8x128xf32>
    %9 = vector.multi_reduction <add>, %8, %cst_6 [1] : vector<8x256x128xf32> to vector<8x128xf32>
    %10 = arith.truncf %9 : vector<8x128xf32> to vector<8x128xbf16>
    %c0_7 = arith.constant 0 : index
    %c0_8 = arith.constant 0 : index
    %11 = vector.load %arg4[%c0_7, %c0_8] : memref<128x128xbf16, #tpu.memory_space<vmem>>, vector<128x128xbf16>
    %cst_9 = arith.constant dense<0.000000e+00> : vector<8x128xf32>
    %12 = tpu.matmul %10, %11, %cst_9 {dimension_numbers = #tpu.dot_dimension_numbers<[1], [0], [0], [1], [0, 0, 1, 1], [], []>} : vector<8x128xbf16>, vector<128x128xbf16>, vector<8x128xf32> -> vector<8x128xf32>
    %c0_10 = arith.constant 0 : index
    %c0_11 = arith.constant 0 : index
    %13 = vector.load %arg5[%c0_10, %c0_11] : memref<1x128xf32, #tpu.memory_space<vmem>>, vector<1x128xf32>
    %14 = vector.broadcast %13 : vector<1x128xf32> to vector<8x128xf32>
    %15 = arith.addf %12, %14 : vector<8x128xf32>
    %16 = vector.shape_cast %15 : vector<8x128xf32> to vector<4x2x128xf32>
    %cst_12 = arith.constant dense<0.000000e+00> : vector<4x128xf32>
    %17 = vector.multi_reduction <add>, %16, %cst_12 [1] : vector<4x2x128xf32> to vector<4x128xf32>
    %18 = vector.shape_cast %17 : vector<4x128xf32> to vector<4x1x128xf32>
    %cst_13 = arith.constant 2.000000e+00 : f32
    %19 = vector.broadcast %cst_13 : f32 to vector<4x1x128xf32>
    %20 = arith.divf %18, %19 : vector<4x1x128xf32>
    %21 = vector.broadcast %20 : vector<4x1x128xf32> to vector<4x2x128xf32>
    %22 = arith.subf %16, %21 : vector<4x2x128xf32>
    %23 = arith.mulf %22, %22 : vector<4x2x128xf32>
    %cst_14 = arith.constant dense<0.000000e+00> : vector<4x128xf32>
    %24 = vector.multi_reduction <add>, %23, %cst_14 [1] : vector<4x2x128xf32> to vector<4x128xf32>
    %25 = vector.shape_cast %24 : vector<4x128xf32> to vector<4x1x128xf32>
    %cst_15 = arith.constant 2.000000e+00 : f32
    %26 = vector.broadcast %cst_15 : f32 to vector<4x1x128xf32>
    %27 = arith.divf %25, %26 : vector<4x1x128xf32>
    %28 = vector.broadcast %20 : vector<4x1x128xf32> to vector<4x2x128xf32>
    %29 = arith.subf %16, %28 : vector<4x2x128xf32>
    %cst_16 = arith.constant 9.99999974E-6 : f32
    %30 = vector.broadcast %cst_16 : f32 to vector<4x1x128xf32>
    %31 = arith.addf %27, %30 : vector<4x1x128xf32>
    %32 = math.rsqrt %31 : vector<4x1x128xf32>
    %33 = vector.broadcast %32 : vector<4x1x128xf32> to vector<4x2x128xf32>
    %34 = arith.mulf %29, %33 : vector<4x2x128xf32>
    %35 = vector.shape_cast %34 : vector<4x2x128xf32> to vector<8x128xf32>
    %c0_17 = arith.constant 0 : index
    %c0_18 = arith.constant 0 : index
    %36 = vector.load %arg6[%c0_17, %c0_18] : memref<1x128xf32, #tpu.memory_space<vmem>>, vector<1x128xf32>
    %37 = vector.broadcast %36 : vector<1x128xf32> to vector<8x128xf32>
    %38 = arith.mulf %35, %37 : vector<8x128xf32>
    %c0_19 = arith.constant 0 : index
    %c0_20 = arith.constant 0 : index
    %39 = vector.load %arg7[%c0_19, %c0_20] : memref<1x128xf32, #tpu.memory_space<vmem>>, vector<1x128xf32>
    %40 = vector.broadcast %39 : vector<1x128xf32> to vector<8x128xf32>
    %41 = arith.addf %38, %40 : vector<8x128xf32>
    %c0_21 = arith.constant 0 : index
    %c0_22 = arith.constant 0 : index
    %42 = vector.load %arg8[%c0_21, %c0_22] : memref<8x128xf32, #tpu.memory_space<vmem>>, vector<8x128xf32>
    tpu.vector_store %arg8[%c0_21, %c0_22], %41 {strides = array<i32>} : memref<8x128xf32, #tpu.memory_space<vmem>>, vector<8x128xf32>,
    return
  }
  func.func @transform_0(%arg0: i32) -> (i32, i32) {
    %c0_i32 = arith.constant 0 : i32
    %c0_i32_0 = arith.constant 0 : i32
    return %arg0, %c0_i32 : i32, i32
  }
  func.func @transform_1(%arg0: i32) -> (i32, i32) {
    %c0_i32 = arith.constant 0 : i32
    %c0_i32_0 = arith.constant 0 : i32
    %c0_i32_1 = arith.constant 0 : i32
    return %c0_i32, %c0_i32_0 : i32, i32
  }
  func.func @transform_2(%arg0: i32) -> (i32, i32) {
    %c0_i32 = arith.constant 0 : i32
    %c0_i32_0 = arith.constant 0 : i32
    %c0_i32_1 = arith.constant 0 : i32
    return %c0_i32, %c0_i32_0 : i32, i32
  }
  func.func @transform_3(%arg0: i32) -> (i32, i32) {
    %c0_i32 = arith.constant 0 : i32
    %c0_i32_0 = arith.constant 0 : i32
    %c0_i32_1 = arith.constant 0 : i32
    return %c0_i32, %c0_i32_0 : i32, i32
  }
  func.func @transform_4(%arg0: i32) -> (i32, i32) {
    %c0_i32 = arith.constant 0 : i32
    %c0_i32_0 = arith.constant 0 : i32
    %c0_i32_1 = arith.constant 0 : i32
    return %c0_i32, %c0_i32_0 : i32, i32
  }
  func.func @transform_5(%arg0: i32) -> (i32, i32) {
    %c0_i32 = arith.constant 0 : i32
    %c0_i32_0 = arith.constant 0 : i32
    %c0_i32_1 = arith.constant 0 : i32
    return %c0_i32, %c0_i32_0 : i32, i32
  }
  func.func @transform_6(%arg0: i32) -> (i32, i32) {
    %c0_i32 = arith.constant 0 : i32
    %c0_i32_0 = arith.constant 0 : i32
    %c0_i32_1 = arith.constant 0 : i32
    return %c0_i32, %c0_i32_0 : i32, i32
  }
  func.func @transform_7(%arg0: i32) -> (i32, i32) {
    %c0_i32 = arith.constant 0 : i32
    %c0_i32_0 = arith.constant 0 : i32
    return %arg0, %c0_i32 : i32, i32
  }
}

</mosaic_0001>

<llo_original>
// kernel: tpu_custom_call.1
$region0: #{tpu_custom_call.1}
  #allocation0 [shape = 'u32[]', space=smem, size = 0x4, offset = 0x4, fixed_abs, tag = 'smem constant byte address 0x4 - core index']
  #allocation1 [shape = 'u32[144,128]{1,0:T(1,128)}', space=vmem, size = 0x12000, scoped, tag = 'internal scratch']
  %s0 = inlined_call_operand.vmem [shape: bf16[4096,32], index: 0, kind: input, shape index: {}]
  %s1 = inlined_call_operand.vmem [shape: bf16[32,128], index: 1, kind: input, shape index: {}]
  %s2 = inlined_call_operand.vmem [shape: f32[1,128], index: 2, kind: input, shape index: {}]
  %s3 = inlined_call_operand.vmem [shape: bf16[128,128], index: 3, kind: input, shape index: {}]
  %s4 = inlined_call_operand.vmem [shape: f32[1,128], index: 4, kind: input, shape index: {}]
  %s5 = inlined_call_operand.vmem [shape: f32[1,128], index: 5, kind: input, shape index: {}]
  %s6 = inlined_call_operand.vmem [shape: f32[1,128], index: 6, kind: input, shape index: {}]
  %s7 = inlined_call_operand.hbm [shape: f32[16,128], index: 7, kind: output, shape index: {}]
  %s8 = sld [smem:[#allocation0]]
  $region61: #{tpu_custom_call.1} parent=0
    _
  %s10 = ssub.s32 1, %s8
  %s11 = scalar_select 0, %s10, %s8
  $region1: #{tpu_custom_call.1} parent=0
    #allocation2 [shape = 'u8[8192]{0}', space=vmem, size = 0x2000, scoped, tag = 'output window, operand 0']
    #allocation3 [shape = 's32[2]{0}', space=sflag, size = 0x8, scoped, tag = 'scoped memory for tpu_custom_call.1']
    %12 = vsyncpa [#allocation3], 0
    %s13 = scalar_lea.sflag [#allocation3], 1
    %14 = vsyncpa %s13, 0
    loop: start=0, step=1, limit=4
    $region2: #{tpu_custom_call.1} parent=1 // loop_pre_header
      _
    $region3: #{tpu_custom_call.1} parent=1 // loop_header
      %s16 = sphi 0, %s20
      %p17 = scmp.ge.s32.totalorder %s16, 4
      %s26 = sphi 0, %s28
      %s29 = sphi 0, %s26
      %s30 = sphi 0, %s29
      %s46 = sphi 0, %s30
      %s50 = sphi 0, %s50
      %s52 = sphi 0, %s50
      %s53 = sphi 0, %s52
      %s67 = sphi 0, %s53
      %s71 = sphi 0, %s71
      %s73 = sphi 0, %s71
      %s74 = sphi 0, %s73
      %s88 = sphi 0, %s74
      %s92 = sphi 0, %s92
      %s94 = sphi 0, %s92
      %s95 = sphi 0, %s94
      %s109 = sphi 0, %s95
      %s113 = sphi 0, %s113
      %s115 = sphi 0, %s113
      %s116 = sphi 0, %s115
      %s130 = sphi 0, %s116
      %s134 = sphi 0, %s134
      %s136 = sphi 0, %s134
      %s137 = sphi 0, %s136
      %s151 = sphi 0, %s137
      %s155 = sphi 0, %s155
      %s157 = sphi 0, %s155
      %s158 = sphi 0, %s157
      %s172 = sphi 0, %s158
      %s178 = sphi 0, %s180
      %s181 = sphi 0, %s178
      %s182 = sphi 0, %s181
      %s198 = sphi 0, %s182
    $region4: #{tpu_custom_call.1} parent=1 // loop_header_branch
      %19 = sbr.rel (%p17) target = $region8
    $region5: #{tpu_custom_call.1} parent=1 // loop_body
      %s21 = ssub.s32 %s16, 1
      %s22 = ssub.s32 %s16, 2
      %s23 = sadd.s32 %s16, 1
      %s24 = ssub.s32 %s16, %s23
      %p25 = scmp.eq.s32.totalorder %s24, 0
      %s27 = sadd.s32 %s26, 1
      %s28 = scalar_select %p25, %s26, %s27
      %p31 = pneg %p25
      %p32 = scmp.eq.s32.totalorder %s16, 1
      %p33 = por %p31, %p32
      %p34 = scmp.ne.s32.totalorder %s26, %s29
      %p35 = scmp.eq.s32.totalorder %s16, 0
      %p36 = por %p34, %p35
      %p37 = scmp.ne.s32.totalorder %s26, %s29
      %p38 = scmp.eq.s32.totalorder %s21, 1
      %p39 = por %p37, %p38
      %p40 = scmp.ne.s32.totalorder %s29, %s30
      %p41 = scmp.eq.s32.totalorder %s21, 0
      %p42 = por %p40, %p41
      %p43 = scmp.ne.s32.totalorder %s29, %s30
      %p44 = scmp.eq.s32.totalorder %s22, 1
      %p45 = por %p43, %p44
      %p47 = scmp.ne.s32.totalorder %s30, %s46
      %p48 = scmp.eq.s32.totalorder %s22, 0
      %p49 = por %p47, %p48
      %s51 = sadd.s32 %s50, 1
      %p54 = scmp.eq.s32.totalorder %s16, 1
      %p55 = scmp.ne.s32.totalorder %s50, %s52
      %p56 = scmp.eq.s32.totalorder %s16, 0
      %p57 = por %p55, %p56
      %p58 = scmp.ne.s32.totalorder %s50, %s52
      %p59 = scmp.eq.s32.totalorder %s21, 1
      %p60 = por %p58, %p59
      %p61 = scmp.ne.s32.totalorder %s52, %s53
      %p62 = scmp.eq.s32.totalorder %s21, 0
      %p63 = por %p61, %p62
      %p64 = scmp.ne.s32.totalorder %s52, %s53
      %p65 = scmp.eq.s32.totalorder %s22, 1
      %p66 = por %p64, %p65
      %p68 = scmp.ne.s32.totalorder %s53, %s67
      %p69 = scmp.eq.s32.totalorder %s22, 0
      %p70 = por %p68, %p69
      %s72 = sadd.s32 %s71, 1
      %p75 = scmp.eq.s32.totalorder %s16, 1
      %p76 = scmp.ne.s32.totalorder %s71, %s73
      %p77 = scmp.eq.s32.totalorder %s16, 0
      %p78 = por %p76, %p77
      %p79 = scmp.ne.s32.totalorder %s71, %s73
      %p80 = scmp.eq.s32.totalorder %s21, 1
      %p81 = por %p79, %p80
      %p82 = scmp.ne.s32.totalorder %s73, %s74
      %p83 = scmp.eq.s32.totalorder %s21, 0
      %p84 = por %p82, %p83
      %p85 = scmp.ne.s32.totalorder %s73, %s74
      %p86 = scmp.eq.s32.totalorder %s22, 1
      %p87 = por %p85, %p86
      %p89 = scmp.ne.s32.totalorder %s74, %s88
      %p90 = scmp.eq.s32.totalorder %s22, 0
      %p91 = por %p89, %p90
      %s93 = sadd.s32 %s92, 1
      %p96 = scmp.eq.s32.totalorder %s16, 1
      %p97 = scmp.ne.s32.totalorder %s92, %s94
      %p98 = scmp.eq.s32.totalorder %s16, 0
      %p99 = por %p97, %p98
      %p100 = scmp.ne.s32.totalorder %s92, %s94
      %p101 = scmp.eq.s32.totalorder %s21, 1
      %p102 = por %p100, %p101
      %p103 = scmp.ne.s32.totalorder %s94, %s95
      %p104 = scmp.eq.s32.totalorder %s21, 0
      %p105 = por %p103, %p104
      %p106 = scmp.ne.s32.totalorder %s94, %s95
      %p107 = scmp.eq.s32.totalorder %s22, 1
      %p108 = por %p106, %p107
      %p110 = scmp.ne.s32.totalorder %s95, %s109
      %p111 = scmp.eq.s32.totalorder %s22, 0
      %p112 = por %p110, %p111
      %s114 = sadd.s32 %s113, 1
      %p117 = scmp.eq.s32.totalorder %s16, 1
      %p118 = scmp.ne.s32.totalorder %s113, %s115
      %p119 = scmp.eq.s32.totalorder %s16, 0
      %p120 = por %p118, %p119
      %p121 = scmp.ne.s32.totalorder %s113, %s115
      %p122 = scmp.eq.s32.totalorder %s21, 1
      %p123 = por %p121, %p122
      %p124 = scmp.ne.s32.totalorder %s115, %s116
      %p125 = scmp.eq.s32.totalorder %s21, 0
      %p126 = por %p124, %p125
      %p127 = scmp.ne.s32.totalorder %s115, %s116
      %p128 = scmp.eq.s32.totalorder %s22, 1
      %p129 = por %p127, %p128
      %p131 = scmp.ne.s32.totalorder %s116, %s130
      %p132 = scmp.eq.s32.totalorder %s22, 0
      %p133 = por %p131, %p132
      %s135 = sadd.s32 %s134, 1
      %p138 = scmp.eq.s32.totalorder %s16, 1
      %p139 = scmp.ne.s32.totalorder %s134, %s136
      %p140 = scmp.eq.s32.totalorder %s16, 0
      %p141 = por %p139, %p140
      %p142 = scmp.ne.s32.totalorder %s134, %s136
      %p143 = scmp.eq.s32.totalorder %s21, 1
      %p144 = por %p142, %p143
      %p145 = scmp.ne.s32.totalorder %s136, %s137
      %p146 = scmp.eq.s32.totalorder %s21, 0
      %p147 = por %p145, %p146
      %p148 = scmp.ne.s32.totalorder %s136, %s137
      %p149 = scmp.eq.s32.totalorder %s22, 1
      %p150 = por %p148, %p149
      %p152 = scmp.ne.s32.totalorder %s137, %s151
      %p153 = scmp.eq.s32.totalorder %s22, 0
      %p154 = por %p152, %p153
      %s156 = sadd.s32 %s155, 1
      %p159 = scmp.eq.s32.totalorder %s16, 1
      %p160 = scmp.ne.s32.totalorder %s155, %s157
      %p161 = scmp.eq.s32.totalorder %s16, 0
      %p162 = por %p160, %p161
      %p163 = scmp.ne.s32.totalorder %s155, %s157
      %p164 = scmp.eq.s32.totalorder %s21, 1
      %p165 = por %p163, %p164
      %p166 = scmp.ne.s32.totalorder %s157, %s158
      %p167 = scmp.eq.s32.totalorder %s21, 0
      %p168 = por %p166, %p167
      %p169 = scmp.ne.s32.totalorder %s157, %s158
      %p170 = scmp.eq.s32.totalorder %s22, 1
      %p171 = por %p169, %p170
      %p173 = scmp.ne.s32.totalorder %s158, %s172
      %p174 = scmp.eq.s32.totalorder %s22, 0
      %p175 = por %p173, %p174
      %s176 = ssub.s32 %s16, %s23
      %p177 = scmp.eq.s32.totalorder %s176, 0
      %s179 = sadd.s32 %s178, 1
      %s180 = scalar_select %p177, %s178, %s179
      %p183 = pneg %p177
      %p184 = scmp.eq.s32.totalorder %s16, 1
      %p185 = por %p183, %p184
      %p186 = scmp.ne.s32.totalorder %s178, %s181
      %p187 = scmp.eq.s32.totalorder %s16, 0
      %p188 = por %p186, %p187
      %p189 = scmp.ne.s32.totalorder %s178, %s181
      %p190 = scmp.eq.s32.totalorder %s21, 1
      %p191 = por %p189, %p190
      %p192 = scmp.ne.s32.totalorder %s181, %s182
      %p193 = scmp.eq.s32.totalorder %s21, 0
      %p194 = por %p192, %p193
      %p195 = scmp.ne.s32.totalorder %s181, %s182
      %p196 = scmp.eq.s32.totalorder %s22, 1
      %p197 = por %p195, %p196
      %p199 = scmp.ne.s32.totalorder %s182, %s198
      %p200 = scmp.eq.s32.totalorder %s22, 0
      %p201 = por %p199, %p200
      %p202 = scmp.le.s32.totalorder 1, %s16
      %p203 = scmp.lt.s32.totalorder %s16, 3
      %p204 = pnand %p202, %p203
      %p205 = pneg %p204
      // Predicated region
      $region9: #{tpu_custom_call.1} parent=5 // pred_check
        _
      $region10: #{tpu_custom_call.1} parent=5 // pred_check_branch
        %207 = sbr.rel (%p204) target = $region12
      $region11: #{tpu_custom_call.1} parent=5 // pred_region
        %s208 = ssub.s32 %s16, 1
        // Predicated region
        $region13: #{tpu_custom_call.1} parent=11 // pred_check
          %p209 = pneg %p63
        $region14: #{tpu_custom_call.1} parent=11 // pred_check_branch
          %211 = sbr.rel (%p209) target = $region16
        $region15: #{tpu_custom_call.1} parent=11 // pred_region
          _
        $region16: #{tpu_custom_call.1} parent=11 // pred_fallthru
          _
        // Predicated region
        $region17: #{tpu_custom_call.1} parent=11 // pred_check
          %p212 = pneg %p84
        $region18: #{tpu_custom_call.1} parent=11 // pred_check_branch
          %214 = sbr.rel (%p212) target = $region20
        $region19: #{tpu_custom_call.1} parent=11 // pred_region
          _
        $region20: #{tpu_custom_call.1} parent=11 // pred_fallthru
          _
        // Predicated region
        $region21: #{tpu_custom_call.1} parent=11 // pred_check
          %p215 = pneg %p105
        $region22: #{tpu_custom_call.1} parent=11 // pred_check_branch
          %217 = sbr.rel (%p215) target = $region24
        $region23: #{tpu_custom_call.1} parent=11 // pred_region
          _
        $region24: #{tpu_custom_call.1} parent=11 // pred_fallthru
          _
        // Predicated region
        $region25: #{tpu_custom_call.1} parent=11 // pred_check
          %p218 = pneg %p126
        $region26: #{tpu_custom_call.1} parent=11 // pred_check_branch
          %220 = sbr.rel (%p218) target = $region28
        $region27: #{tpu_custom_call.1} parent=11 // pred_region
          _
        $region28: #{tpu_custom_call.1} parent=11 // pred_fallthru
          _
        // Predicated region
        $region29: #{tpu_custom_call.1} parent=11 // pred_check
          %p221 = pneg %p147
        $region30: #{tpu_custom_call.1} parent=11 // pred_check_branch
          %223 = sbr.rel (%p221) target = $region32
        $region31: #{tpu_custom_call.1} parent=11 // pred_region
          _
        $region32: #{tpu_custom_call.1} parent=11 // pred_fallthru
          _
        // Predicated region
        $region33: #{tpu_custom_call.1} parent=11 // pred_check
          %p224 = pneg %p168
        $region34: #{tpu_custom_call.1} parent=11 // pred_check_branch
          %226 = sbr.rel (%p224) target = $region36
        $region35: #{tpu_custom_call.1} parent=11 // pred_region
          _
        $region36: #{tpu_custom_call.1} parent=11 // pred_fallthru
          _
      $region12: #{tpu_custom_call.1} parent=5 // pred_fallthru
        _
      %p227 = scmp.lt.s32.totalorder %s16, 2
      // Predicated region
      $region37: #{tpu_custom_call.1} parent=5 // pred_check
        %p228 = pneg %p227
      $region38: #{tpu_custom_call.1} parent=5 // pred_check_branch
        %230 = sbr.rel (%p228) target = $region40
      $region39: #{tpu_custom_call.1} parent=5 // pred_region
        // Predicated region
        $region41: #{tpu_custom_call.1} parent=39 // pred_check
          %p231 = pneg %p36
        $region42: #{tpu_custom_call.1} parent=39 // pred_check_branch
          %233 = sbr.rel (%p231) target = $region44
        $region43: #{tpu_custom_call.1} parent=39 // pred_region
          %s234 = smul.u32 256, %s16
          %p235 = scmp.lt.s32.totalorder %s234, 511
          %s236 = scalar_select %p235, %s234, 511
          %s237 = smul.addr %s236, 4
          %s238 = scalar_lea.vmem %s0, %s237
          %s239 = smul.u32 256, %s16
        $region44: #{tpu_custom_call.1} parent=39 // pred_fallthru
          _
      $region40: #{tpu_custom_call.1} parent=5 // pred_fallthru
        _
      %p240 = scmp.le.s32.totalorder 1, %s16
      %p241 = scmp.lt.s32.totalorder %s16, 3
      %p242 = pnand %p240, %p241
      %p243 = pneg %p242
      // Predicated region
      $region45: #{tpu_custom_call.1} parent=5 // pred_check
        _
      $region46: #{tpu_custom_call.1} parent=5 // pred_check_branch
        %245 = sbr.rel (%p242) target = $region48
      $region47: #{tpu_custom_call.1} parent=5 // pred_region
        %s246 = ssub.s32 %s16, 1
        %s247 = smul.u32 256, %s21
        %p248 = scmp.lt.s32.totalorder %s247, 511
        %s249 = scalar_select %p248, %s247, 511
        %s250 = smul.addr %s249, 4
        %s251 = scalar_lea.vmem %s0, %s250
        %p252 = pneg %p42
        %p253 = pneg %p39
        %p254 = pneg %p63
        %p255 = pneg %p60
        %p256 = pneg %p84
        %p257 = pneg %p81
        %p258 = pneg %p105
        %p259 = pneg %p102
        %p260 = pneg %p126
        %p261 = pneg %p123
        %p262 = pneg %p147
        %p263 = pneg %p144
        %p264 = pneg %p168
        %p265 = pneg %p165
        %p266 = pneg %p194
        %p267 = pneg %p191
        %s268 = sand.u32 %s181, 1
        %s269 = scalar_lea.sflag [#allocation3], %s268
        %s270 = sand.u32 %s181, 1
        %s271 = smul.addr %s270, 8
        %s272 = scalar_lea.vmem [#allocation2], %s271
        %s273 = smul.u32 256, %s21
        %p274 = scmp.lt.s32.totalorder %s273, 511
        %s275 = scalar_select %p274, %s273, 511
        %s276 = smul.addr %s275, 4
        %s277 = scalar_lea.vmem %s0, %s276
        %s278 = smul.u32 256, %s21
        %v280 = vld [vmem:[%s277] sm:$0xf]
        %v281 = vld [vmem:[%s277 + $0x4] sm:$0xf]
        %v282 = vld [vmem:[%s277 + $0x8] sm:$0xf]
        %v283 = vld [vmem:[%s277 + $0xc] sm:$0xf]
        %v284 = vld [vmem:[%s277 + $0x10] sm:$0xf]
        %v285 = vld [vmem:[%s277 + $0x14] sm:$0xf]
        %v286 = vld [vmem:[%s277 + $0x18] sm:$0xf]
        %v287 = vld [vmem:[%s277 + $0x1c] sm:$0xf]
        %v288 = vld [vmem:[%s277 + $0x20] sm:$0xf]
        %v289 = vld [vmem:[%s277 + $0x24] sm:$0xf]
        %v290 = vld [vmem:[%s277 + $0x28] sm:$0xf]
        %v291 = vld [vmem:[%s277 + $0x2c] sm:$0xf]
        %v292 = vld [vmem:[%s277 + $0x30] sm:$0xf]
        %v293 = vld [vmem:[%s277 + $0x34] sm:$0xf]
        %v294 = vld [vmem:[%s277 + $0x38] sm:$0xf]
        %v295 = vld [vmem:[%s277 + $0x3c] sm:$0xf]
        %v296 = vld [vmem:[%s277 + $0x40] sm:$0xf]
        %v297 = vld [vmem:[%s277 + $0x44] sm:$0xf]
        %v298 = vld [vmem:[%s277 + $0x48] sm:$0xf]
        %v299 = vld [vmem:[%s277 + $0x4c] sm:$0xf]
        %v300 = vld [vmem:[%s277 + $0x50] sm:$0xf]
        %v301 = vld [vmem:[%s277 + $0x54] sm:$0xf]
        %v302 = vld [vmem:[%s277 + $0x58] sm:$0xf]
        %v303 = vld [vmem:[%s277 + $0x5c] sm:$0xf]
        %v304 = vld [vmem:[%s277 + $0x60] sm:$0xf]
        %v305 = vld [vmem:[%s277 + $0x64] sm:$0xf]
        %v306 = vld [vmem:[%s277 + $0x68] sm:$0xf]
        %v307 = vld [vmem:[%s277 + $0x6c] sm:$0xf]
        %v308 = vld [vmem:[%s277 + $0x70] sm:$0xf]
        %v309 = vld [vmem:[%s277 + $0x74] sm:$0xf]
        %v310 = vld [vmem:[%s277 + $0x78] sm:$0xf]
        %v311 = vld [vmem:[%s277 + $0x7c] sm:$0xf]
        %v312 = vld [vmem:[%s277 + $0x80] sm:$0xf]
        %v313 = vld [vmem:[%s277 + $0x84] sm:$0xf]
        %v314 = vld [vmem:[%s277 + $0x88] sm:$0xf]
        %v315 = vld [vmem:[%s277 + $0x8c] sm:$0xf]
        %v316 = vld [vmem:[%s277 + $0x90] sm:$0xf]
        %v317 = vld [vmem:[%s277 + $0x94] sm:$0xf]
        %v318 = vld [vmem:[%s277 + $0x98] sm:$0xf]
        %v319 = vld [vmem:[%s277 + $0x9c] sm:$0xf]
        %v320 = vld [vmem:[%s277 + $0xa0] sm:$0xf]
        %v321 = vld [vmem:[%s277 + $0xa4] sm:$0xf]
        %v322 = vld [vmem:[%s277 + $0xa8] sm:$0xf]
        %v323 = vld [vmem:[%s277 + $0xac] sm:$0xf]
        %v324 = vld [vmem:[%s277 + $0xb0] sm:$0xf]
        %v325 = vld [vmem:[%s277 + $0xb4] sm:$0xf]
        %v326 = vld [vmem:[%s277 + $0xb8] sm:$0xf]
        %v327 = vld [vmem:[%s277 + $0xbc] sm:$0xf]
        %v328 = vld [vmem:[%s277 + $0xc0] sm:$0xf]
        %v329 = vld [vmem:[%s277 + $0xc4] sm:$0xf]
        %v330 = vld [vmem:[%s277 + $0xc8] sm:$0xf]
        %v331 = vld [vmem:[%s277 + $0xcc] sm:$0xf]
        %v332 = vld [vmem:[%s277 + $0xd0] sm:$0xf]
        %v333 = vld [vmem:[%s277 + $0xd4] sm:$0xf]
        %v334 = vld [vmem:[%s277 + $0xd8] sm:$0xf]
        %v335 = vld [vmem:[%s277 + $0xdc] sm:$0xf]
        %v336 = vld [vmem:[%s277 + $0xe0] sm:$0xf]
        %v337 = vld [vmem:[%s277 + $0xe4] sm:$0xf]
        %v338 = vld [vmem:[%s277 + $0xe8] sm:$0xf]
        %v339 = vld [vmem:[%s277 + $0xec] sm:$0xf]
        %v340 = vld [vmem:[%s277 + $0xf0] sm:$0xf]
        %v341 = vld [vmem:[%s277 + $0xf4] sm:$0xf]
        %v342 = vld [vmem:[%s277 + $0xf8] sm:$0xf]
        %v343 = vld [vmem:[%s277 + $0xfc] sm:$0xf]
        %v344 = vld [vmem:[%s277 + $0x100] sm:$0xf]
        %v345 = vld [vmem:[%s277 + $0x104] sm:$0xf]
        %v346 = vld [vmem:[%s277 + $0x108] sm:$0xf]
        %v347 = vld [vmem:[%s277 + $0x10c] sm:$0xf]
        %v348 = vld [vmem:[%s277 + $0x110] sm:$0xf]
        %v349 = vld [vmem:[%s277 + $0x114] sm:$0xf]
        %v350 = vld [vmem:[%s277 + $0x118] sm:$0xf]
        %v351 = vld [vmem:[%s277 + $0x11c] sm:$0xf]
        %v352 = vld [vmem:[%s277 + $0x120] sm:$0xf]
        %v353 = vld [vmem:[%s277 + $0x124] sm:$0xf]
        %v354 = vld [vmem:[%s277 + $0x128] sm:$0xf]
        %v355 = vld [vmem:[%s277 + $0x12c] sm:$0xf]
        %v356 = vld [vmem:[%s277 + $0x130] sm:$0xf]
        %v357 = vld [vmem:[%s277 + $0x134] sm:$0xf]
        %v358 = vld [vmem:[%s277 + $0x138] sm:$0xf]
        %v359 = vld [vmem:[%s277 + $0x13c] sm:$0xf]
        %v360 = vld [vmem:[%s277 + $0x140] sm:$0xf]
        %v361 = vld [vmem:[%s277 + $0x144] sm:$0xf]
        %v362 = vld [vmem:[%s277 + $0x148] sm:$0xf]
        %v363 = vld [vmem:[%s277 + $0x14c] sm:$0xf]
        %v364 = vld [vmem:[%s277 + $0x150] sm:$0xf]
        %v365 = vld [vmem:[%s277 + $0x154] sm:$0xf]
        %v366 = vld [vmem:[%s277 + $0x158] sm:$0xf]
        %v367 = vld [vmem:[%s277 + $0x15c] sm:$0xf]
        %v368 = vld [vmem:[%s277 + $0x160] sm:$0xf]
        %v369 = vld [vmem:[%s277 + $0x164] sm:$0xf]
        %v370 = vld [vmem:[%s277 + $0x168] sm:$0xf]
        %v371 = vld [vmem:[%s277 + $0x16c] sm:$0xf]
        %v372 = vld [vmem:[%s277 + $0x170] sm:$0xf]
        %v373 = vld [vmem:[%s277 + $0x174] sm:$0xf]
        %v374 = vld [vmem:[%s277 + $0x178] sm:$0xf]
        %v375 = vld [vmem:[%s277 + $0x17c] sm:$0xf]
        %v376 = vld [vmem:[%s277 + $0x180] sm:$0xf]
        %v377 = vld [vmem:[%s277 + $0x184] sm:$0xf]
        %v378 = vld [vmem:[%s277 + $0x188] sm:$0xf]
        %v379 = vld [vmem:[%s277 + $0x18c] sm:$0xf]
        %v380 = vld [vmem:[%s277 + $0x190] sm:$0xf]
        %v381 = vld [vmem:[%s277 + $0x194] sm:$0xf]
        %v382 = vld [vmem:[%s277 + $0x198] sm:$0xf]
        %v383 = vld [vmem:[%s277 + $0x19c] sm:$0xf]
        %v384 = vld [vmem:[%s277 + $0x1a0] sm:$0xf]
        %v385 = vld [vmem:[%s277 + $0x1a4] sm:$0xf]
        %v386 = vld [vmem:[%s277 + $0x1a8] sm:$0xf]
        %v387 = vld [vmem:[%s277 + $0x1ac] sm:$0xf]
        %v388 = vld [vmem:[%s277 + $0x1b0] sm:$0xf]
        %v389 = vld [vmem:[%s277 + $0x1b4] sm:$0xf]
        %v390 = vld [vmem:[%s277 + $0x1b8] sm:$0xf]
        %v391 = vld [vmem:[%s277 + $0x1bc] sm:$0xf]
        %v392 = vld [vmem:[%s277 + $0x1c0] sm:$0xf]
        %v393 = vld [vmem:[%s277 + $0x1c4] sm:$0xf]
        %v394 = vld [vmem:[%s277 + $0x1c8] sm:$0xf]
        %v395 = vld [vmem:[%s277 + $0x1cc] sm:$0xf]
        %v396 = vld [vmem:[%s277 + $0x1d0] sm:$0xf]
        %v397 = vld [vmem:[%s277 + $0x1d4] sm:$0xf]
        %v398 = vld [vmem:[%s277 + $0x1d8] sm:$0xf]
        %v399 = vld [vmem:[%s277 + $0x1dc] sm:$0xf]
        %v400 = vld [vmem:[%s277 + $0x1e0] sm:$0xf]
        %v401 = vld [vmem:[%s277 + $0x1e4] sm:$0xf]
        %v402 = vld [vmem:[%s277 + $0x1e8] sm:$0xf]
        %v403 = vld [vmem:[%s277 + $0x1ec] sm:$0xf]
        %v404 = vld [vmem:[%s277 + $0x1f0] sm:$0xf]
        %v405 = vld [vmem:[%s277 + $0x1f4] sm:$0xf]
        %v406 = vld [vmem:[%s277 + $0x1f8] sm:$0xf]
        %v407 = vld [vmem:[%s277 + $0x1fc] sm:$0xf]
        %v408 = vld [vmem:[%s277 + $0x200] sm:$0xf]
        %v409 = vld [vmem:[%s277 + $0x204] sm:$0xf]
        %v410 = vld [vmem:[%s277 + $0x208] sm:$0xf]
        %v411 = vld [vmem:[%s277 + $0x20c] sm:$0xf]
        %v412 = vld [vmem:[%s277 + $0x210] sm:$0xf]
        %v413 = vld [vmem:[%s277 + $0x214] sm:$0xf]
        %v414 = vld [vmem:[%s277 + $0x218] sm:$0xf]
        %v415 = vld [vmem:[%s277 + $0x21c] sm:$0xf]
        %v416 = vld [vmem:[%s277 + $0x220] sm:$0xf]
        %v417 = vld [vmem:[%s277 + $0x224] sm:$0xf]
        %v418 = vld [vmem:[%s277 + $0x228] sm:$0xf]
        %v419 = vld [vmem:[%s277 + $0x22c] sm:$0xf]
        %v420 = vld [vmem:[%s277 + $0x230] sm:$0xf]
        %v421 = vld [vmem:[%s277 + $0x234] sm:$0xf]
        %v422 = vld [vmem:[%s277 + $0x238] sm:$0xf]
        %v423 = vld [vmem:[%s277 + $0x23c] sm:$0xf]
        %v424 = vld [vmem:[%s277 + $0x240] sm:$0xf]
        %v425 = vld [vmem:[%s277 + $0x244] sm:$0xf]
        %v426 = vld [vmem:[%s277 + $0x248] sm:$0xf]
        %v427 = vld [vmem:[%s277 + $0x24c] sm:$0xf]
        %v428 = vld [vmem:[%s277 + $0x250] sm:$0xf]
        %v429 = vld [vmem:[%s277 + $0x254] sm:$0xf]
        %v430 = vld [vmem:[%s277 + $0x258] sm:$0xf]
        %v431 = vld [vmem:[%s277 + $0x25c] sm:$0xf]
        %v432 = vld [vmem:[%s277 + $0x260] sm:$0xf]
        %v433 = vld [vmem:[%s277 + $0x264] sm:$0xf]
        %v434 = vld [vmem:[%s277 + $0x268] sm:$0xf]
        %v435 = vld [vmem:[%s277 + $0x26c] sm:$0xf]
        %v436 = vld [vmem:[%s277 + $0x270] sm:$0xf]
        %v437 = vld [vmem:[%s277 + $0x274] sm:$0xf]
        %v438 = vld [vmem:[%s277 + $0x278] sm:$0xf]
        %v439 = vld [vmem:[%s277 + $0x27c] sm:$0xf]
        %v440 = vld [vmem:[%s277 + $0x280] sm:$0xf]
        %v441 = vld [vmem:[%s277 + $0x284] sm:$0xf]
        %v442 = vld [vmem:[%s277 + $0x288] sm:$0xf]
        %v443 = vld [vmem:[%s277 + $0x28c] sm:$0xf]
        %v444 = vld [vmem:[%s277 + $0x290] sm:$0xf]
        %v445 = vld [vmem:[%s277 + $0x294] sm:$0xf]
        %v446 = vld [vmem:[%s277 + $0x298] sm:$0xf]
        %v447 = vld [vmem:[%s277 + $0x29c] sm:$0xf]
        %v448 = vld [vmem:[%s277 + $0x2a0] sm:$0xf]
        %v449 = vld [vmem:[%s277 + $0x2a4] sm:$0xf]
        %v450 = vld [vmem:[%s277 + $0x2a8] sm:$0xf]
        %v451 = vld [vmem:[%s277 + $0x2ac] sm:$0xf]
        %v452 = vld [vmem:[%s277 + $0x2b0] sm:$0xf]
        %v453 = vld [vmem:[%s277 + $0x2b4] sm:$0xf]
        %v454 = vld [vmem:[%s277 + $0x2b8] sm:$0xf]
        %v455 = vld [vmem:[%s277 + $0x2bc] sm:$0xf]
        %v456 = vld [vmem:[%s277 + $0x2c0] sm:$0xf]
        %v457 = vld [vmem:[%s277 + $0x2c4] sm:$0xf]
        %v458 = vld [vmem:[%s277 + $0x2c8] sm:$0xf]
        %v459 = vld [vmem:[%s277 + $0x2cc] sm:$0xf]
        %v460 = vld [vmem:[%s277 + $0x2d0] sm:$0xf]
        %v461 = vld [vmem:[%s277 + $0x2d4] sm:$0xf]
        %v462 = vld [vmem:[%s277 + $0x2d8] sm:$0xf]
        %v463 = vld [vmem:[%s277 + $0x2dc] sm:$0xf]
        %v464 = vld [vmem:[%s277 + $0x2e0] sm:$0xf]
        %v465 = vld [vmem:[%s277 + $0x2e4] sm:$0xf]
        %v466 = vld [vmem:[%s277 + $0x2e8] sm:$0xf]
        %v467 = vld [vmem:[%s277 + $0x2ec] sm:$0xf]
        %v468 = vld [vmem:[%s277 + $0x2f0] sm:$0xf]
        %v469 = vld [vmem:[%s277 + $0x2f4] sm:$0xf]
        %v470 = vld [vmem:[%s277 + $0x2f8] sm:$0xf]
        %v471 = vld [vmem:[%s277 + $0x2fc] sm:$0xf]
        %v472 = vld [vmem:[%s277 + $0x300] sm:$0xf]
        %v473 = vld [vmem:[%s277 + $0x304] sm:$0xf]
        %v474 = vld [vmem:[%s277 + $0x308] sm:$0xf]
        %v475 = vld [vmem:[%s277 + $0x30c] sm:$0xf]
        %v476 = vld [vmem:[%s277 + $0x310] sm:$0xf]
        %v477 = vld [vmem:[%s277 + $0x314] sm:$0xf]
        %v478 = vld [vmem:[%s277 + $0x318] sm:$0xf]
        %v479 = vld [vmem:[%s277 + $0x31c] sm:$0xf]
        %v480 = vld [vmem:[%s277 + $0x320] sm:$0xf]
        %v481 = vld [vmem:[%s277 + $0x324] sm:$0xf]
        %v482 = vld [vmem:[%s277 + $0x328] sm:$0xf]
        %v483 = vld [vmem:[%s277 + $0x32c] sm:$0xf]
        %v484 = vld [vmem:[%s277 + $0x330] sm:$0xf]
        %v485 = vld [vmem:[%s277 + $0x334] sm:$0xf]
        %v486 = vld [vmem:[%s277 + $0x338] sm:$0xf]
        %v487 = vld [vmem:[%s277 + $0x33c] sm:$0xf]
        %v488 = vld [vmem:[%s277 + $0x340] sm:$0xf]
        %v489 = vld [vmem:[%s277 + $0x344] sm:$0xf]
        %v490 = vld [vmem:[%s277 + $0x348] sm:$0xf]
        %v491 = vld [vmem:[%s277 + $0x34c] sm:$0xf]
        %v492 = vld [vmem:[%s277 + $0x350] sm:$0xf]
        %v493 = vld [vmem:[%s277 + $0x354] sm:$0xf]
        %v494 = vld [vmem:[%s277 + $0x358] sm:$0xf]
        %v495 = vld [vmem:[%s277 + $0x35c] sm:$0xf]
        %v496 = vld [vmem:[%s277 + $0x360] sm:$0xf]
        %v497 = vld [vmem:[%s277 + $0x364] sm:$0xf]
        %v498 = vld [vmem:[%s277 + $0x368] sm:$0xf]
        %v499 = vld [vmem:[%s277 + $0x36c] sm:$0xf]
        %v500 = vld [vmem:[%s277 + $0x370] sm:$0xf]
        %v501 = vld [vmem:[%s277 + $0x374] sm:$0xf]
        %v502 = vld [vmem:[%s277 + $0x378] sm:$0xf]
        %v503 = vld [vmem:[%s277 + $0x37c] sm:$0xf]
        %v504 = vld [vmem:[%s277 + $0x380] sm:$0xf]
        %v505 = vld [vmem:[%s277 + $0x384] sm:$0xf]
        %v506 = vld [vmem:[%s277 + $0x388] sm:$0xf]
        %v507 = vld [vmem:[%s277 + $0x38c] sm:$0xf]
        %v508 = vld [vmem:[%s277 + $0x390] sm:$0xf]
        %v509 = vld [vmem:[%s277 + $0x394] sm:$0xf]
        %v510 = vld [vmem:[%s277 + $0x398] sm:$0xf]
        %v511 = vld [vmem:[%s277 + $0x39c] sm:$0xf]
        %v512 = vld [vmem:[%s277 + $0x3a0] sm:$0xf]
        %v513 = vld [vmem:[%s277 + $0x3a4] sm:$0xf]
        %v514 = vld [vmem:[%s277 + $0x3a8] sm:$0xf]
        %v515 = vld [vmem:[%s277 + $0x3ac] sm:$0xf]
        %v516 = vld [vmem:[%s277 + $0x3b0] sm:$0xf]
        %v517 = vld [vmem:[%s277 + $0x3b4] sm:$0xf]
        %v518 = vld [vmem:[%s277 + $0x3b8] sm:$0xf]
        %v519 = vld [vmem:[%s277 + $0x3bc] sm:$0xf]
        %v520 = vld [vmem:[%s277 + $0x3c0] sm:$0xf]
        %v521 = vld [vmem:[%s277 + $0x3c4] sm:$0xf]
        %v522 = vld [vmem:[%s277 + $0x3c8] sm:$0xf]
        %v523 = vld [vmem:[%s277 + $0x3cc] sm:$0xf]
        %v524 = vld [vmem:[%s277 + $0x3d0] sm:$0xf]
        %v525 = vld [vmem:[%s277 + $0x3d4] sm:$0xf]
        %v526 = vld [vmem:[%s277 + $0x3d8] sm:$0xf]
        %v527 = vld [vmem:[%s277 + $0x3dc] sm:$0xf]
        %v528 = vld [vmem:[%s277 + $0x3e0] sm:$0xf]
        %v529 = vld [vmem:[%s277 + $0x3e4] sm:$0xf]
        %v530 = vld [vmem:[%s277 + $0x3e8] sm:$0xf]
        %v531 = vld [vmem:[%s277 + $0x3ec] sm:$0xf]
        %v532 = vld [vmem:[%s277 + $0x3f0] sm:$0xf]
        %v533 = vld [vmem:[%s277 + $0x3f4] sm:$0xf]
        %v534 = vld [vmem:[%s277 + $0x3f8] sm:$0xf]
        %v535 = vld [vmem:[%s277 + $0x3fc] sm:$0xf]
        %v536 = vld [vmem:[%s1] sm:$0xf]
        %v537 = vld [vmem:[%s1 + $0x4] sm:$0xf]
        %v538 = vld [vmem:[%s1 + $0x8] sm:$0xf]
        %v539 = vld [vmem:[%s1 + $0xc] sm:$0xf]
        %v540 = vld [vmem:[%s2] sm:$0x1]
        %v542 = vlaneseq
        %v543 = vshrl.u32 %v542, 7
        %v544 = vsub.s32 0, %v543
        %v545 = vrot.slane %v540, %v544
        %v803 = vunpack.c.l.b16 %v280
        %v804 = vunpack.c.l.b16 %v281
        %v805 = vunpack.c.l.b16 %v282
        %v806 = vunpack.c.l.b16 %v283
        %v807 = vunpack.c.l.b16 %v284
        %v808 = vunpack.c.l.b16 %v285
        %v809 = vunpack.c.l.b16 %v286
        %v810 = vunpack.c.l.b16 %v287
        %v811 = vunpack.c.l.b16 %v288
        %v812 = vunpack.c.l.b16 %v289
        %v813 = vunpack.c.l.b16 %v290
        %v814 = vunpack.c.l.b16 %v291
        %v815 = vunpack.c.l.b16 %v292
        %v816 = vunpack.c.l.b16 %v293
        %v817 = vunpack.c.l.b16 %v294
        %v818 = vunpack.c.l.b16 %v295
        %v819 = vunpack.c.l.b16 %v296
        %v820 = vunpack.c.l.b16 %v297
        %v821 = vunpack.c.l.b16 %v298
        %v822 = vunpack.c.l.b16 %v299
        %v823 = vunpack.c.l.b16 %v300
        %v824 = vunpack.c.l.b16 %v301
        %v825 = vunpack.c.l.b16 %v302
        %v826 = vunpack.c.l.b16 %v303
        %v827 = vunpack.c.l.b16 %v304
        %v828 = vunpack.c.l.b16 %v305
        %v829 = vunpack.c.l.b16 %v306
        %v830 = vunpack.c.l.b16 %v307
        %v831 = vunpack.c.l.b16 %v308
        %v832 = vunpack.c.l.b16 %v309
        %v833 = vunpack.c.l.b16 %v310
        %v834 = vunpack.c.l.b16 %v311
        %v835 = vunpack.c.l.b16 %v312
        %v836 = vunpack.c.l.b16 %v313
        %v837 = vunpack.c.l.b16 %v314
        %v838 = vunpack.c.l.b16 %v315
        %v839 = vunpack.c.l.b16 %v316
        %v840 = vunpack.c.l.b16 %v317
        %v841 = vunpack.c.l.b16 %v318
        %v842 = vunpack.c.l.b16 %v319
        %v843 = vunpack.c.l.b16 %v320
        %v844 = vunpack.c.l.b16 %v321
        %v845 = vunpack.c.l.b16 %v322
        %v846 = vunpack.c.l.b16 %v323
        %v847 = vunpack.c.l.b16 %v324
        %v848 = vunpack.c.l.b16 %v325
        %v849 = vunpack.c.l.b16 %v326
        %v850 = vunpack.c.l.b16 %v327
        %v851 = vunpack.c.l.b16 %v328
        %v852 = vunpack.c.l.b16 %v329
        %v853 = vunpack.c.l.b16 %v330
        %v854 = vunpack.c.l.b16 %v331
        %v855 = vunpack.c.l.b16 %v332
        %v856 = vunpack.c.l.b16 %v333
        %v857 = vunpack.c.l.b16 %v334
        %v858 = vunpack.c.l.b16 %v335
        %v859 = vunpack.c.l.b16 %v336
        %v860 = vunpack.c.l.b16 %v337
        %v861 = vunpack.c.l.b16 %v338
        %v862 = vunpack.c.l.b16 %v339
        %v863 = vunpack.c.l.b16 %v340
        %v864 = vunpack.c.l.b16 %v341
        %v865 = vunpack.c.l.b16 %v342
        %v866 = vunpack.c.l.b16 %v343
        %v867 = vunpack.c.l.b16 %v344
        %v868 = vunpack.c.l.b16 %v345
        %v869 = vunpack.c.l.b16 %v346
        %v870 = vunpack.c.l.b16 %v347
        %v871 = vunpack.c.l.b16 %v348
        %v872 = vunpack.c.l.b16 %v349
        %v873 = vunpack.c.l.b16 %v350
        %v874 = vunpack.c.l.b16 %v351
        %v875 = vunpack.c.l.b16 %v352
        %v876 = vunpack.c.l.b16 %v353
        %v877 = vunpack.c.l.b16 %v354
        %v878 = vunpack.c.l.b16 %v355
        %v879 = vunpack.c.l.b16 %v356
        %v880 = vunpack.c.l.b16 %v357
        %v881 = vunpack.c.l.b16 %v358
        %v882 = vunpack.c.l.b16 %v359
        %v883 = vunpack.c.l.b16 %v360
        %v884 = vunpack.c.l.b16 %v361
        %v885 = vunpack.c.l.b16 %v362
        %v886 = vunpack.c.l.b16 %v363
        %v887 = vunpack.c.l.b16 %v364
        %v888 = vunpack.c.l.b16 %v365
        %v889 = vunpack.c.l.b16 %v366
        %v890 = vunpack.c.l.b16 %v367
        %v891 = vunpack.c.l.b16 %v368
        %v892 = vunpack.c.l.b16 %v369
        %v893 = vunpack.c.l.b16 %v370
        %v894 = vunpack.c.l.b16 %v371
        %v895 = vunpack.c.l.b16 %v372
        %v896 = vunpack.c.l.b16 %v373
        %v897 = vunpack.c.l.b16 %v374
        %v898 = vunpack.c.l.b16 %v375
        %v899 = vunpack.c.l.b16 %v376
        %v900 = vunpack.c.l.b16 %v377
        %v901 = vunpack.c.l.b16 %v378
        %v902 = vunpack.c.l.b16 %v379
        %v903 = vunpack.c.l.b16 %v380
        %v904 = vunpack.c.l.b16 %v381
        %v905 = vunpack.c.l.b16 %v382
        %v906 = vunpack.c.l.b16 %v383
        %v907 = vunpack.c.l.b16 %v384
        %v908 = vunpack.c.l.b16 %v385
        %v909 = vunpack.c.l.b16 %v386
        %v910 = vunpack.c.l.b16 %v387
        %v911 = vunpack.c.l.b16 %v388
        %v912 = vunpack.c.l.b16 %v389
        %v913 = vunpack.c.l.b16 %v390
        %v914 = vunpack.c.l.b16 %v391
        %v915 = vunpack.c.l.b16 %v392
        %v916 = vunpack.c.l.b16 %v393
        %v917 = vunpack.c.l.b16 %v394
        %v918 = vunpack.c.l.b16 %v395
        %v919 = vunpack.c.l.b16 %v396
        %v920 = vunpack.c.l.b16 %v397
        %v921 = vunpack.c.l.b16 %v398
        %v922 = vunpack.c.l.b16 %v399
        %v923 = vunpack.c.l.b16 %v400
        %v924 = vunpack.c.l.b16 %v401
        %v925 = vunpack.c.l.b16 %v402
        %v926 = vunpack.c.l.b16 %v403
        %v927 = vunpack.c.l.b16 %v404
        %v928 = vunpack.c.l.b16 %v405
        %v929 = vunpack.c.l.b16 %v406
        %v930 = vunpack.c.l.b16 %v407
        %v931 = vunpack.c.l.b16 %v408
        %v932 = vunpack.c.l.b16 %v409
        %v933 = vunpack.c.l.b16 %v410
        %v934 = vunpack.c.l.b16 %v411
        %v935 = vunpack.c.l.b16 %v412
        %v936 = vunpack.c.l.b16 %v413
        %v937 = vunpack.c.l.b16 %v414
        %v938 = vunpack.c.l.b16 %v415
        %v939 = vunpack.c.l.b16 %v416
        %v940 = vunpack.c.l.b16 %v417
        %v941 = vunpack.c.l.b16 %v418
        %v942 = vunpack.c.l.b16 %v419
        %v943 = vunpack.c.l.b16 %v420
        %v944 = vunpack.c.l.b16 %v421
        %v945 = vunpack.c.l.b16 %v422
        %v946 = vunpack.c.l.b16 %v423
        %v947 = vunpack.c.l.b16 %v424
        %v948 = vunpack.c.l.b16 %v425
        %v949 = vunpack.c.l.b16 %v426
        %v950 = vunpack.c.l.b16 %v427
        %v951 = vunpack.c.l.b16 %v428
        %v952 = vunpack.c.l.b16 %v429
        %v953 = vunpack.c.l.b16 %v430
        %v954 = vunpack.c.l.b16 %v431
        %v955 = vunpack.c.l.b16 %v432
        %v956 = vunpack.c.l.b16 %v433
        %v957 = vunpack.c.l.b16 %v434
        %v958 = vunpack.c.l.b16 %v435
        %v959 = vunpack.c.l.b16 %v436
        %v960 = vunpack.c.l.b16 %v437
        %v961 = vunpack.c.l.b16 %v438
        %v962 = vunpack.c.l.b16 %v439
        %v963 = vunpack.c.l.b16 %v440
        %v964 = vunpack.c.l.b16 %v441
        %v965 = vunpack.c.l.b16 %v442
        %v966 = vunpack.c.l.b16 %v443
        %v967 = vunpack.c.l.b16 %v444
        %v968 = vunpack.c.l.b16 %v445
        %v969 = vunpack.c.l.b16 %v446
        %v970 = vunpack.c.l.b16 %v447
        %v971 = vunpack.c.l.b16 %v448
        %v972 = vunpack.c.l.b16 %v449
        %v973 = vunpack.c.l.b16 %v450
        %v974 = vunpack.c.l.b16 %v451
        %v975 = vunpack.c.l.b16 %v452
        %v976 = vunpack.c.l.b16 %v453
        %v977 = vunpack.c.l.b16 %v454
        %v978 = vunpack.c.l.b16 %v455
        %v979 = vunpack.c.l.b16 %v456
        %v980 = vunpack.c.l.b16 %v457
        %v981 = vunpack.c.l.b16 %v458
        %v982 = vunpack.c.l.b16 %v459
        %v983 = vunpack.c.l.b16 %v460
        %v984 = vunpack.c.l.b16 %v461
        %v985 = vunpack.c.l.b16 %v462
        %v986 = vunpack.c.l.b16 %v463
        %v987 = vunpack.c.l.b16 %v464
        %v988 = vunpack.c.l.b16 %v465
        %v989 = vunpack.c.l.b16 %v466
        %v990 = vunpack.c.l.b16 %v467
        %v991 = vunpack.c.l.b16 %v468
        %v992 = vunpack.c.l.b16 %v469
        %v993 = vunpack.c.l.b16 %v470
        %v994 = vunpack.c.l.b16 %v471
        %v995 = vunpack.c.l.b16 %v472
        %v996 = vunpack.c.l.b16 %v473
        %v997 = vunpack.c.l.b16 %v474
        %v998 = vunpack.c.l.b16 %v475
        %v999 = vunpack.c.l.b16 %v476
        %v1000 = vunpack.c.l.b16 %v477
        %v1001 = vunpack.c.l.b16 %v478
        %v1002 = vunpack.c.l.b16 %v479
        %v1003 = vunpack.c.l.b16 %v480
        %v1004 = vunpack.c.l.b16 %v481
        %v1005 = vunpack.c.l.b16 %v482
        %v1006 = vunpack.c.l.b16 %v483
        %v1007 = vunpack.c.l.b16 %v484
        %v1008 = vunpack.c.l.b16 %v485
        %v1009 = vunpack.c.l.b16 %v486
        %v1010 = vunpack.c.l.b16 %v487
        %v1011 = vunpack.c.l.b16 %v488
        %v1012 = vunpack.c.l.b16 %v489
        %v1013 = vunpack.c.l.b16 %v490
        %v1014 = vunpack.c.l.b16 %v491
        %v1015 = vunpack.c.l.b16 %v492
        %v1016 = vunpack.c.l.b16 %v493
        %v1017 = vunpack.c.l.b16 %v494
        %v1018 = vunpack.c.l.b16 %v495
        %v1019 = vunpack.c.l.b16 %v496
        %v1020 = vunpack.c.l.b16 %v497
        %v1021 = vunpack.c.l.b16 %v498
        %v1022 = vunpack.c.l.b16 %v499
        %v1023 = vunpack.c.l.b16 %v500
        %v1024 = vunpack.c.l.b16 %v501
        %v1025 = vunpack.c.l.b16 %v502
        %v1026 = vunpack.c.l.b16 %v503
        %v1027 = vunpack.c.l.b16 %v504
        %v1028 = vunpack.c.l.b16 %v505
        %v1029 = vunpack.c.l.b16 %v506
        %v1030 = vunpack.c.l.b16 %v507
        %v1031 = vunpack.c.l.b16 %v508
        %v1032 = vunpack.c.l.b16 %v509
        %v1033 = vunpack.c.l.b16 %v510
        %v1034 = vunpack.c.l.b16 %v511
        %v1035 = vunpack.c.l.b16 %v512
        %v1036 = vunpack.c.l.b16 %v513
        %v1037 = vunpack.c.l.b16 %v514
        %v1038 = vunpack.c.l.b16 %v515
        %v1039 = vunpack.c.l.b16 %v516
        %v1040 = vunpack.c.l.b16 %v517
        %v1041 = vunpack.c.l.b16 %v518
        %v1042 = vunpack.c.l.b16 %v519
        %v1043 = vunpack.c.l.b16 %v520
        %v1044 = vunpack.c.l.b16 %v521
        %v1045 = vunpack.c.l.b16 %v522
        %v1046 = vunpack.c.l.b16 %v523
        %v1047 = vunpack.c.l.b16 %v524
        %v1048 = vunpack.c.l.b16 %v525
        %v1049 = vunpack.c.l.b16 %v526
        %v1050 = vunpack.c.l.b16 %v527
        %v1051 = vunpack.c.l.b16 %v528
        %v1052 = vunpack.c.l.b16 %v529
        %v1053 = vunpack.c.l.b16 %v530
        %v1054 = vunpack.c.l.b16 %v531
        %v1055 = vunpack.c.l.b16 %v532
        %v1056 = vunpack.c.l.b16 %v533
        %v1057 = vunpack.c.l.b16 %v534
        %v1058 = vunpack.c.l.b16 %v535
        %v1059 = vpack.c.b16 %v804, %v803
        %v1060 = vpack.c.b16 %v806, %v805
        %v1061 = vpack.c.b16 %v808, %v807
        %v1062 = vpack.c.b16 %v810, %v809
        %v1063 = vpack.c.b16 %v812, %v811
        %v1064 = vpack.c.b16 %v814, %v813
        %v1065 = vpack.c.b16 %v816, %v815
        %v1066 = vpack.c.b16 %v818, %v817
        %v1067 = vpack.c.b16 %v820, %v819
        %v1068 = vpack.c.b16 %v822, %v821
        %v1069 = vpack.c.b16 %v824, %v823
        %v1070 = vpack.c.b16 %v826, %v825
        %v1071 = vpack.c.b16 %v828, %v827
        %v1072 = vpack.c.b16 %v830, %v829
        %v1073 = vpack.c.b16 %v832, %v831
        %v1074 = vpack.c.b16 %v834, %v833
        %v1075 = vpack.c.b16 %v836, %v835
        %v1076 = vpack.c.b16 %v838, %v837
        %v1077 = vpack.c.b16 %v840, %v839
        %v1078 = vpack.c.b16 %v842, %v841
        %v1079 = vpack.c.b16 %v844, %v843
        %v1080 = vpack.c.b16 %v846, %v845
        %v1081 = vpack.c.b16 %v848, %v847
        %v1082 = vpack.c.b16 %v850, %v849
        %v1083 = vpack.c.b16 %v852, %v851
        %v1084 = vpack.c.b16 %v854, %v853
        %v1085 = vpack.c.b16 %v856, %v855
        %v1086 = vpack.c.b16 %v858, %v857
        %v1087 = vpack.c.b16 %v860, %v859
        %v1088 = vpack.c.b16 %v862, %v861
        %v1089 = vpack.c.b16 %v864, %v863
        %v1090 = vpack.c.b16 %v866, %v865
        %v1091 = vpack.c.b16 %v868, %v867
        %v1092 = vpack.c.b16 %v870, %v869
        %v1093 = vpack.c.b16 %v872, %v871
        %v1094 = vpack.c.b16 %v874, %v873
        %v1095 = vpack.c.b16 %v876, %v875
        %v1096 = vpack.c.b16 %v878, %v877
        %v1097 = vpack.c.b16 %v880, %v879
        %v1098 = vpack.c.b16 %v882, %v881
        %v1099 = vpack.c.b16 %v884, %v883
        %v1100 = vpack.c.b16 %v886, %v885
        %v1101 = vpack.c.b16 %v888, %v887
        %v1102 = vpack.c.b16 %v890, %v889
        %v1103 = vpack.c.b16 %v892, %v891
        %v1104 = vpack.c.b16 %v894, %v893
        %v1105 = vpack.c.b16 %v896, %v895
        %v1106 = vpack.c.b16 %v898, %v897
        %v1107 = vpack.c.b16 %v900, %v899
        %v1108 = vpack.c.b16 %v902, %v901
        %v1109 = vpack.c.b16 %v904, %v903
        %v1110 = vpack.c.b16 %v906, %v905
        %v1111 = vpack.c.b16 %v908, %v907
        %v1112 = vpack.c.b16 %v910, %v909
        %v1113 = vpack.c.b16 %v912, %v911
        %v1114 = vpack.c.b16 %v914, %v913
        %v1115 = vpack.c.b16 %v916, %v915
        %v1116 = vpack.c.b16 %v918, %v917
        %v1117 = vpack.c.b16 %v920, %v919
        %v1118 = vpack.c.b16 %v922, %v921
        %v1119 = vpack.c.b16 %v924, %v923
        %v1120 = vpack.c.b16 %v926, %v925
        %v1121 = vpack.c.b16 %v928, %v927
        %v1122 = vpack.c.b16 %v930, %v929
        %v1123 = vpack.c.b16 %v932, %v931
        %v1124 = vpack.c.b16 %v934, %v933
        %v1125 = vpack.c.b16 %v936, %v935
        %v1126 = vpack.c.b16 %v938, %v937
        %v1127 = vpack.c.b16 %v940, %v939
        %v1128 = vpack.c.b16 %v942, %v941
        %v1129 = vpack.c.b16 %v944, %v943
        %v1130 = vpack.c.b16 %v946, %v945
        %v1131 = vpack.c.b16 %v948, %v947
        %v1132 = vpack.c.b16 %v950, %v949
        %v1133 = vpack.c.b16 %v952, %v951
        %v1134 = vpack.c.b16 %v954, %v953
        %v1135 = vpack.c.b16 %v956, %v955
        %v1136 = vpack.c.b16 %v958, %v957
        %v1137 = vpack.c.b16 %v960, %v959
        %v1138 = vpack.c.b16 %v962, %v961
        %v1139 = vpack.c.b16 %v964, %v963
        %v1140 = vpack.c.b16 %v966, %v965
        %v1141 = vpack.c.b16 %v968, %v967
        %v1142 = vpack.c.b16 %v970, %v969
        %v1143 = vpack.c.b16 %v972, %v971
        %v1144 = vpack.c.b16 %v974, %v973
        %v1145 = vpack.c.b16 %v976, %v975
        %v1146 = vpack.c.b16 %v978, %v977
        %v1147 = vpack.c.b16 %v980, %v979
        %v1148 = vpack.c.b16 %v982, %v981
        %v1149 = vpack.c.b16 %v984, %v983
        %v1150 = vpack.c.b16 %v986, %v985
        %v1151 = vpack.c.b16 %v988, %v987
        %v1152 = vpack.c.b16 %v990, %v989
        %v1153 = vpack.c.b16 %v992, %v991
        %v1154 = vpack.c.b16 %v994, %v993
        %v1155 = vpack.c.b16 %v996, %v995
        %v1156 = vpack.c.b16 %v998, %v997
        %v1157 = vpack.c.b16 %v1000, %v999
        %v1158 = vpack.c.b16 %v1002, %v1001
        %v1159 = vpack.c.b16 %v1004, %v1003
        %v1160 = vpack.c.b16 %v1006, %v1005
        %v1161 = vpack.c.b16 %v1008, %v1007
        %v1162 = vpack.c.b16 %v1010, %v1009
        %v1163 = vpack.c.b16 %v1012, %v1011
        %v1164 = vpack.c.b16 %v1014, %v1013
        %v1165 = vpack.c.b16 %v1016, %v1015
        %v1166 = vpack.c.b16 %v1018, %v1017
        %v1167 = vpack.c.b16 %v1020, %v1019
        %v1168 = vpack.c.b16 %v1022, %v1021
        %v1169 = vpack.c.b16 %v1024, %v1023
        %v1170 = vpack.c.b16 %v1026, %v1025
        %v1171 = vpack.c.b16 %v1028, %v1027
        %v1172 = vpack.c.b16 %v1030, %v1029
        %v1173 = vpack.c.b16 %v1032, %v1031
        %v1174 = vpack.c.b16 %v1034, %v1033
        %v1175 = vpack.c.b16 %v1036, %v1035
        %v1176 = vpack.c.b16 %v1038, %v1037
        %v1177 = vpack.c.b16 %v1040, %v1039
        %v1178 = vpack.c.b16 %v1042, %v1041
        %v1179 = vpack.c.b16 %v1044, %v1043
        %v1180 = vpack.c.b16 %v1046, %v1045
        %v1181 = vpack.c.b16 %v1048, %v1047
        %v1182 = vpack.c.b16 %v1050, %v1049
        %v1183 = vpack.c.b16 %v1052, %v1051
        %v1184 = vpack.c.b16 %v1054, %v1053
        %v1185 = vpack.c.b16 %v1056, %v1055
        %v1186 = vpack.c.b16 %v1058, %v1057
        %v1191 = vunpack.c.l.b16 %v536
        %v1192 = vunpack.c.l.b16 %v537
        %v1193 = vunpack.c.l.b16 %v538
        %v1194 = vunpack.c.l.b16 %v539
        %v1195 = vpack.c.b16 %v1192, %v1191
        %v1196 = vpack.c.b16 %v1194, %v1193
        %vm1199 = vcmask 261120
        %v1201 = vsel %vm1199, %v1059, 0
        %v1204 = vsel %vm1199, %v1060, 0
        %v1207 = vsel %vm1199, %v1061, 0
        %v1210 = vsel %vm1199, %v1062, 0
        %v1213 = vsel %vm1199, %v1063, 0
        %v1216 = vsel %vm1199, %v1064, 0
        %v1219 = vsel %vm1199, %v1065, 0
        %v1222 = vsel %vm1199, %v1066, 0
        %v1225 = vsel %vm1199, %v1067, 0
        %v1228 = vsel %vm1199, %v1068, 0
        %v1231 = vsel %vm1199, %v1069, 0
        %v1234 = vsel %vm1199, %v1070, 0
        %v1237 = vsel %vm1199, %v1071, 0
        %v1240 = vsel %vm1199, %v1072, 0
        %v1243 = vsel %vm1199, %v1073, 0
        %v1246 = vsel %vm1199, %v1074, 0
        %v1249 = vsel %vm1199, %v1075, 0
        %v1252 = vsel %vm1199, %v1076, 0
        %v1255 = vsel %vm1199, %v1077, 0
        %v1258 = vsel %vm1199, %v1078, 0
        %v1261 = vsel %vm1199, %v1079, 0
        %v1264 = vsel %vm1199, %v1080, 0
        %v1267 = vsel %vm1199, %v1081, 0
        %v1270 = vsel %vm1199, %v1082, 0
        %v1273 = vsel %vm1199, %v1083, 0
        %v1276 = vsel %vm1199, %v1084, 0
        %v1279 = vsel %vm1199, %v1085, 0
        %v1282 = vsel %vm1199, %v1086, 0
        %v1285 = vsel %vm1199, %v1087, 0
        %v1288 = vsel %vm1199, %v1088, 0
        %v1291 = vsel %vm1199, %v1089, 0
        %v1294 = vsel %vm1199, %v1090, 0
        %v1297 = vsel %vm1199, %v1091, 0
        %v1300 = vsel %vm1199, %v1092, 0
        %v1303 = vsel %vm1199, %v1093, 0
        %v1306 = vsel %vm1199, %v1094, 0
        %v1309 = vsel %vm1199, %v1095, 0
        %v1312 = vsel %vm1199, %v1096, 0
        %v1315 = vsel %vm1199, %v1097, 0
        %v1318 = vsel %vm1199, %v1098, 0
        %v1321 = vsel %vm1199, %v1099, 0
        %v1324 = vsel %vm1199, %v1100, 0
        %v1327 = vsel %vm1199, %v1101, 0
        %v1330 = vsel %vm1199, %v1102, 0
        %v1333 = vsel %vm1199, %v1103, 0
        %v1336 = vsel %vm1199, %v1104, 0
        %v1339 = vsel %vm1199, %v1105, 0
        %v1342 = vsel %vm1199, %v1106, 0
        %v1345 = vsel %vm1199, %v1107, 0
        %v1348 = vsel %vm1199, %v1108, 0
        %v1351 = vsel %vm1199, %v1109, 0
        %v1354 = vsel %vm1199, %v1110, 0
        %v1357 = vsel %vm1199, %v1111, 0
        %v1360 = vsel %vm1199, %v1112, 0
        %v1363 = vsel %vm1199, %v1113, 0
        %v1366 = vsel %vm1199, %v1114, 0
        %v1369 = vsel %vm1199, %v1115, 0
        %v1372 = vsel %vm1199, %v1116, 0
        %v1375 = vsel %vm1199, %v1117, 0
        %v1378 = vsel %vm1199, %v1118, 0
        %v1381 = vsel %vm1199, %v1119, 0
        %v1384 = vsel %vm1199, %v1120, 0
        %v1387 = vsel %vm1199, %v1121, 0
        %v1390 = vsel %vm1199, %v1122, 0
        %v1393 = vsel %vm1199, %v1123, 0
        %v1396 = vsel %vm1199, %v1124, 0
        %v1399 = vsel %vm1199, %v1125, 0
        %v1402 = vsel %vm1199, %v1126, 0
        %v1405 = vsel %vm1199, %v1127, 0
        %v1408 = vsel %vm1199, %v1128, 0
        %v1411 = vsel %vm1199, %v1129, 0
        %v1414 = vsel %vm1199, %v1130, 0
        %v1417 = vsel %vm1199, %v1131, 0
        %v1420 = vsel %vm1199, %v1132, 0
        %v1423 = vsel %vm1199, %v1133, 0
        %v1426 = vsel %vm1199, %v1134, 0
        %v1429 = vsel %vm1199, %v1135, 0
        %v1432 = vsel %vm1199, %v1136, 0
        %v1435 = vsel %vm1199, %v1137, 0
        %v1438 = vsel %vm1199, %v1138, 0
        %v1441 = vsel %vm1199, %v1139, 0
        %v1444 = vsel %vm1199, %v1140, 0
        %v1447 = vsel %vm1199, %v1141, 0
        %v1450 = vsel %vm1199, %v1142, 0
        %v1453 = vsel %vm1199, %v1143, 0
        %v1456 = vsel %vm1199, %v1144, 0
        %v1459 = vsel %vm1199, %v1145, 0
        %v1462 = vsel %vm1199, %v1146, 0
        %v1465 = vsel %vm1199, %v1147, 0
        %v1468 = vsel %vm1199, %v1148, 0
        %v1471 = vsel %vm1199, %v1149, 0
        %v1474 = vsel %vm1199, %v1150, 0
        %v1477 = vsel %vm1199, %v1151, 0
        %v1480 = vsel %vm1199, %v1152, 0
        %v1483 = vsel %vm1199, %v1153, 0
        %v1486 = vsel %vm1199, %v1154, 0
        %v1489 = vsel %vm1199, %v1155, 0
        %v1492 = vsel %vm1199, %v1156, 0
        %v1495 = vsel %vm1199, %v1157, 0
        %v1498 = vsel %vm1199, %v1158, 0
        %v1501 = vsel %vm1199, %v1159, 0
        %v1504 = vsel %vm1199, %v1160, 0
        %v1507 = vsel %vm1199, %v1161, 0
        %v1510 = vsel %vm1199, %v1162, 0
        %v1513 = vsel %vm1199, %v1163, 0
        %v1516 = vsel %vm1199, %v1164, 0
        %v1519 = vsel %vm1199, %v1165, 0
        %v1522 = vsel %vm1199, %v1166, 0
        %v1525 = vsel %vm1199, %v1167, 0
        %v1528 = vsel %vm1199, %v1168, 0
        %v1531 = vsel %vm1199, %v1169, 0
        %v1534 = vsel %vm1199, %v1170, 0
        %v1537 = vsel %vm1199, %v1171, 0
        %v1540 = vsel %vm1199, %v1172, 0
        %v1543 = vsel %vm1199, %v1173, 0
        %v1546 = vsel %vm1199, %v1174, 0
        %v1549 = vsel %vm1199, %v1175, 0
        %v1552 = vsel %vm1199, %v1176, 0
        %v1555 = vsel %vm1199, %v1177, 0
        %v1558 = vsel %vm1199, %v1178, 0
        %v1561 = vsel %vm1199, %v1179, 0
        %v1564 = vsel %vm1199, %v1180, 0
        %v1567 = vsel %vm1199, %v1181, 0
        %v1570 = vsel %vm1199, %v1182, 0
        %v1573 = vsel %vm1199, %v1183, 0
        %v1576 = vsel %vm1199, %v1184, 0
        %v1579 = vsel %vm1199, %v1185, 0
        %v1582 = vsel %vm1199, %v1186, 0
        %1584 = vmatprep.subr.bf16.mxu0 0
        %1585 = vmatpush1.bf16.msra.mxu0 %v1195
        %1586 = vmatprep.subr.bf16.mxu0 0
        %1587 = vmatpush1.bf16.msra.mxu0 %v1196
        %1588 = vmatprep.subr.bf16.mxu0 0
        %1589 = vmatpush1.bf16.msra.mxu0 0
        %1590 = vmatprep.subr.bf16.mxu0 0
        %1591 = vmatpush1.bf16.msra.mxu0 0
        %1592 = vmatprep.subr.bf16.mxu0 0
        %1593 = vmatpush1.bf16.msra.mxu0 0
        %1594 = vmatprep.subr.bf16.mxu0 0
        %1595 = vmatpush1.bf16.msra.mxu0 0
        %1596 = vmatprep.subr.bf16.mxu0 0
        %1597 = vmatpush1.bf16.msra.mxu0 0
        %1598 = vmatprep.subr.bf16.mxu0 0
        %1599 = vmatpush1.bf16.msra.mxu0 0
        %1600 = vmatprep.subr.bf16.mxu0 0
        %1601 = vmatpush1.bf16.msra.mxu0 0
        %1602 = vmatprep.subr.bf16.mxu0 0
        %1603 = vmatpush1.bf16.msra.mxu0 0
        %1604 = vmatprep.subr.bf16.mxu0 0
        %1605 = vmatpush1.bf16.msra.mxu0 0
        %1606 = vmatprep.subr.bf16.mxu0 0
        %1607 = vmatpush1.bf16.msra.mxu0 0
        %1608 = vmatprep.subr.bf16.mxu0 0
        %1609 = vmatpush1.bf16.msra.mxu0 0
        %1610 = vmatprep.subr.bf16.mxu0 0
        %1611 = vmatpush1.bf16.msra.mxu0 0
        %1612 = vmatprep.subr.bf16.mxu0 0
        %1613 = vmatpush1.bf16.msra.mxu0 0
        %1614 = vmatprep.subr.bf16.mxu0 0
        %1615 = vmatpush1.bf16.msra.mxu0 0
        %1616 = vmatprep.mubr.bf16.mxu0 0
        %1617 = vmatmul.mubr.bf16.gmra.mrb[0].mxu0 %v1201
        %v1618 = vpop.f32.mrb[0].mxu0
        %v1619 = vadd.f32 %v545, %v1618
        %v1620 = vpop.f32.mrb[0].mxu0
        %v1621 = vpop.f32.mrb[0].mxu0
        %v1622 = vadd.f32 %v545, %v1621
        %v1623 = vpop.f32.mrb[0].mxu0
        %1624 = vmatprep.mubr.bf16.mxu0 0
        %1625 = vmatmul.mubr.bf16.gmra.mrb[0].mxu0 %v1204
        %v1626 = vpop.f32.mrb[0].mxu0
        %v1627 = vadd.f32 %v545, %v1626
        %v1628 = vpop.f32.mrb[0].mxu0
        %v1629 = vpop.f32.mrb[0].mxu0
        %v1630 = vadd.f32 %v545, %v1629
        %v1631 = vpop.f32.mrb[0].mxu0
        %1632 = vmatprep.mubr.bf16.mxu0 0
        %1633 = vmatmul.mubr.bf16.gmra.mrb[0].mxu0 %v1207
        %v1634 = vpop.f32.mrb[0].mxu0
        %v1635 = vadd.f32 %v545, %v1634
        %v1636 = vpop.f32.mrb[0].mxu0
        %v1637 = vpop.f32.mrb[0].mxu0
        %v1638 = vadd.f32 %v545, %v1637
        %v1639 = vpop.f32.mrb[0].mxu0
        %1640 = vmatprep.mubr.bf16.mxu0 0
        %1641 = vmatmul.mubr.bf16.gmra.mrb[0].mxu0 %v1210
        %v1642 = vpop.f32.mrb[0].mxu0
        %v1643 = vadd.f32 %v545, %v1642
        %v1644 = vpop.f32.mrb[0].mxu0
        %v1645 = vpop.f32.mrb[0].mxu0
        %v1646 = vadd.f32 %v545, %v1645
        %v1647 = vpop.f32.mrb[0].mxu0
        %1648 = vmatprep.mubr.bf16.mxu0 0
        %1649 = vmatmul.mubr.bf16.gmra.mrb[0].mxu0 %v1213
        %v1650 = vpop.f32.mrb[0].mxu0
        %v1651 = vadd.f32 %v545, %v1650
        %v1652 = vpop.f32.mrb[0].mxu0
        %v1653 = vpop.f32.mrb[0].mxu0
        %v1654 = vadd.f32 %v545, %v1653
        %v1655 = vpop.f32.mrb[0].mxu0
        %1656 = vmatprep.mubr.bf16.mxu0 0
        %1657 = vmatmul.mubr.bf16.gmra.mrb[0].mxu0 %v1216
        %v1658 = vpop.f32.mrb[0].mxu0
        %v1659 = vadd.f32 %v545, %v1658
        %v1660 = vpop.f32.mrb[0].mxu0
        %v1661 = vpop.f32.mrb[0].mxu0
        %v1662 = vadd.f32 %v545, %v1661
        %v1663 = vpop.f32.mrb[0].mxu0
        %1664 = vmatprep.mubr.bf16.mxu0 0
        %1665 = vmatmul.mubr.bf16.gmra.mrb[0].mxu0 %v1219
        %v1666 = vpop.f32.mrb[0].mxu0
        %v1667 = vadd.f32 %v545, %v1666
        %v1668 = vpop.f32.mrb[0].mxu0
        %v1669 = vpop.f32.mrb[0].mxu0
        %v1670 = vadd.f32 %v545, %v1669
        %v1671 = vpop.f32.mrb[0].mxu0
        %1672 = vmatprep.mubr.bf16.mxu0 0
        %1673 = vmatmul.mubr.bf16.gmra.mrb[0].mxu0 %v1222
        %v1674 = vpop.f32.mrb[0].mxu0
        %v1675 = vadd.f32 %v545, %v1674
        %v1676 = vpop.f32.mrb[0].mxu0
        %v1677 = vpop.f32.mrb[0].mxu0
        %v1678 = vadd.f32 %v545, %v1677
        %v1679 = vpop.f32.mrb[0].mxu0
        %1680 = vmatprep.mubr.bf16.mxu0 0
        %1681 = vmatmul.mubr.bf16.gmra.mrb[0].mxu0 %v1225
        %v1682 = vpop.f32.mrb[0].mxu0
        %v1683 = vadd.f32 %v545, %v1682
        %v1684 = vpop.f32.mrb[0].mxu0
        %v1685 = vpop.f32.mrb[0].mxu0
        %v1686 = vadd.f32 %v545, %v1685
        %v1687 = vpop.f32.mrb[0].mxu0
        %1688 = vmatprep.mubr.bf16.mxu0 0
        %1689 = vmatmul.mubr.bf16.gmra.mrb[0].mxu0 %v1228
        %v1690 = vpop.f32.mrb[0].mxu0
        %v1691 = vadd.f32 %v545, %v1690
        %v1692 = vpop.f32.mrb[0].mxu0
        %v1693 = vpop.f32.mrb[0].mxu0
        %v1694 = vadd.f32 %v545, %v1693
        %v1695 = vpop.f32.mrb[0].mxu0
        %1696 = vmatprep.mubr.bf16.mxu0 0
        %1697 = vmatmul.mubr.bf16.gmra.mrb[0].mxu0 %v1231
        %v1698 = vpop.f32.mrb[0].mxu0
        %v1699 = vadd.f32 %v545, %v1698
        %v1700 = vpop.f32.mrb[0].mxu0
        %v1701 = vpop.f32.mrb[0].mxu0
        %v1702 = vadd.f32 %v545, %v1701
        %v1703 = vpop.f32.mrb[0].mxu0
        %1704 = vmatprep.mubr.bf16.mxu0 0
        %1705 = vmatmul.mubr.bf16.gmra.mrb[0].mxu0 %v1234
        %v1706 = vpop.f32.mrb[0].mxu0
        %v1707 = vadd.f32 %v545, %v1706
        %v1708 = vpop.f32.mrb[0].mxu0
        %v1709 = vpop.f32.mrb[0].mxu0
        %v1710 = vadd.f32 %v545, %v1709
        %v1711 = vpop.f32.mrb[0].mxu0
        %1712 = vmatprep.mubr.bf16.mxu0 0
        %1713 = vmatmul.mubr.bf16.gmra.mrb[0].mxu0 %v1237
        %v1714 = vpop.f32.mrb[0].mxu0
        %v1715 = vadd.f32 %v545, %v1714
        %v1716 = vpop.f32.mrb[0].mxu0
        %v1717 = vpop.f32.mrb[0].mxu0
        %v1718 = vadd.f32 %v545, %v1717
        %v1719 = vpop.f32.mrb[0].mxu0
        %1720 = vmatprep.mubr.bf16.mxu0 0
        %1721 = vmatmul.mubr.bf16.gmra.mrb[0].mxu0 %v1240
        %v1722 = vpop.f32.mrb[0].mxu0
        %v1723 = vadd.f32 %v545, %v1722
        %v1724 = vpop.f32.mrb[0].mxu0
        %v1725 = vpop.f32.mrb[0].mxu0
        %v1726 = vadd.f32 %v545, %v1725
        %v1727 = vpop.f32.mrb[0].mxu0
        %1728 = vmatprep.mubr.bf16.mxu0 0
        %1729 = vmatmul.mubr.bf16.gmra.mrb[0].mxu0 %v1243
        %v1730 = vpop.f32.mrb[0].mxu0
        %v1731 = vadd.f32 %v545, %v1730
        %v1732 = vpop.f32.mrb[0].mxu0
        %v1733 = vpop.f32.mrb[0].mxu0
        %v1734 = vadd.f32 %v545, %v1733
        %v1735 = vpop.f32.mrb[0].mxu0
        %1736 = vmatprep.mubr.bf16.mxu0 0
        %1737 = vmatmul.mubr.bf16.gmra.mrb[0].mxu0 %v1246
        %v1738 = vpop.f32.mrb[0].mxu0
        %v1739 = vadd.f32 %v545, %v1738
        %v1740 = vpop.f32.mrb[0].mxu0
        %v1741 = vpop.f32.mrb[0].mxu0
        %v1742 = vadd.f32 %v545, %v1741
        %v1743 = vpop.f32.mrb[0].mxu0
        %1744 = vmatprep.mubr.bf16.mxu0 0
        %1745 = vmatmul.mubr.bf16.gmra.mrb[0].mxu0 %v1249
        %v1746 = vpop.f32.mrb[0].mxu0
        %v1747 = vadd.f32 %v545, %v1746
        %v1748 = vpop.f32.mrb[0].mxu0
        %v1749 = vpop.f32.mrb[0].mxu0
        %v1750 = vadd.f32 %v545, %v1749
        %v1751 = vpop.f32.mrb[0].mxu0
        %1752 = vmatprep.mubr.bf16.mxu0 0
        %1753 = vmatmul.mubr.bf16.gmra.mrb[0].mxu0 %v1252
        %v1754 = vpop.f32.mrb[0].mxu0
        %v1755 = vadd.f32 %v545, %v1754
        %v1756 = vpop.f32.mrb[0].mxu0
        %v1757 = vpop.f32.mrb[0].mxu0
        %v1758 = vadd.f32 %v545, %v1757
        %v1759 = vpop.f32.mrb[0].mxu0
        %1760 = vmatprep.mubr.bf16.mxu0 0
        %1761 = vmatmul.mubr.bf16.gmra.mrb[0].mxu0 %v1255
        %v1762 = vpop.f32.mrb[0].mxu0
        %v1763 = vadd.f32 %v545, %v1762
        %v1764 = vpop.f32.mrb[0].mxu0
        %v1765 = vpop.f32.mrb[0].mxu0
        %v1766 = vadd.f32 %v545, %v1765
        %v1767 = vpop.f32.mrb[0].mxu0
        %1768 = vmatprep.mubr.bf16.mxu0 0
        %1769 = vmatmul.mubr.bf16.gmra.mrb[0].mxu0 %v1258
        %v1770 = vpop.f32.mrb[0].mxu0
        %v1771 = vadd.f32 %v545, %v1770
        %v1772 = vpop.f32.mrb[0].mxu0
        %v1773 = vpop.f32.mrb[0].mxu0
        %v1774 = vadd.f32 %v545, %v1773
        %v1775 = vpop.f32.mrb[0].mxu0
        %1776 = vmatprep.mubr.bf16.mxu0 0
        %1777 = vmatmul.mubr.bf16.gmra.mrb[0].mxu0 %v1261
        %v1778 = vpop.f32.mrb[0].mxu0
        %v1779 = vadd.f32 %v545, %v1778
        %v1780 = vpop.f32.mrb[0].mxu0
        %v1781 = vpop.f32.mrb[0].mxu0
        %v1782 = vadd.f32 %v545, %v1781
        %v1783 = vpop.f32.mrb[0].mxu0
        %1784 = vmatprep.mubr.bf16.mxu0 0
        %1785 = vmatmul.mubr.bf16.gmra.mrb[0].mxu0 %v1264
        %v1786 = vpop.f32.mrb[0].mxu0
        %v1787 = vadd.f32 %v545, %v1786
        %v1788 = vpop.f32.mrb[0].mxu0
        %v1789 = vpop.f32.mrb[0].mxu0
        %v1790 = vadd.f32 %v545, %v1789
        %v1791 = vpop.f32.mrb[0].mxu0
        %1792 = vmatprep.mubr.bf16.mxu0 0
        %1793 = vmatmul.mubr.bf16.gmra.mrb[0].mxu0 %v1267
        %v1794 = vpop.f32.mrb[0].mxu0
        %v1795 = vadd.f32 %v545, %v1794
        %v1796 = vpop.f32.mrb[0].mxu0
        %v1797 = vpop.f32.mrb[0].mxu0
        %v1798 = vadd.f32 %v545, %v1797
        %v1799 = vpop.f32.mrb[0].mxu0
        %1800 = vmatprep.mubr.bf16.mxu0 0
        %1801 = vmatmul.mubr.bf16.gmra.mrb[0].mxu0 %v1270
        %v1802 = vpop.f32.mrb[0].mxu0
        %v1803 = vadd.f32 %v545, %v1802
        %v1804 = vpop.f32.mrb[0].mxu0
        %v1805 = vpop.f32.mrb[0].mxu0
        %v1806 = vadd.f32 %v545, %v1805
        %v1807 = vpop.f32.mrb[0].mxu0
        %1808 = vmatprep.mubr.bf16.mxu0 0
        %1809 = vmatmul.mubr.bf16.gmra.mrb[0].mxu0 %v1273
        %v1810 = vpop.f32.mrb[0].mxu0
        %v1811 = vadd.f32 %v545, %v1810
        %v1812 = vpop.f32.mrb[0].mxu0
        %v1813 = vpop.f32.mrb[0].mxu0
        %v1814 = vadd.f32 %v545, %v1813
        %v1815 = vpop.f32.mrb[0].mxu0
        %1816 = vmatprep.mubr.bf16.mxu0 0
        %1817 = vmatmul.mubr.bf16.gmra.mrb[0].mxu0 %v1276
        %v1818 = vpop.f32.mrb[0].mxu0
        %v1819 = vadd.f32 %v545, %v1818
        %v1820 = vpop.f32.mrb[0].mxu0
        %v1821 = vpop.f32.mrb[0].mxu0
        %v1822 = vadd.f32 %v545, %v1821
        %v1823 = vpop.f32.mrb[0].mxu0
        %1824 = vmatprep.mubr.bf16.mxu0 0
        %1825 = vmatmul.mubr.bf16.gmra.mrb[0].mxu0 %v1279
        %v1826 = vpop.f32.mrb[0].mxu0
        %v1827 = vadd.f32 %v545, %v1826
        %v1828 = vpop.f32.mrb[0].mxu0
        %v1829 = vpop.f32.mrb[0].mxu0
        %v1830 = vadd.f32 %v545, %v1829
        %v1831 = vpop.f32.mrb[0].mxu0
        %1832 = vmatprep.mubr.bf16.mxu0 0
        %1833 = vmatmul.mubr.bf16.gmra.mrb[0].mxu0 %v1282
        %v1834 = vpop.f32.mrb[0].mxu0
        %v1835 = vadd.f32 %v545, %v1834
        %v1836 = vpop.f32.mrb[0].mxu0
        %v1837 = vpop.f32.mrb[0].mxu0
        %v1838 = vadd.f32 %v545, %v1837
        %v1839 = vpop.f32.mrb[0].mxu0
        %1840 = vmatprep.mubr.bf16.mxu0 0
        %1841 = vmatmul.mubr.bf16.gmra.mrb[0].mxu0 %v1285
        %v1842 = vpop.f32.mrb[0].mxu0
        %v1843 = vadd.f32 %v545, %v1842
        %v1844 = vpop.f32.mrb[0].mxu0
        %v1845 = vpop.f32.mrb[0].mxu0
        %v1846 = vadd.f32 %v545, %v1845
        %v1847 = vpop.f32.mrb[0].mxu0
        %1848 = vmatprep.mubr.bf16.mxu0 0
        %1849 = vmatmul.mubr.bf16.gmra.mrb[0].mxu0 %v1288
        %v1850 = vpop.f32.mrb[0].mxu0
        %v1851 = vadd.f32 %v545, %v1850
        %v1852 = vpop.f32.mrb[0].mxu0
        %v1853 = vpop.f32.mrb[0].mxu0
        %v1854 = vadd.f32 %v545, %v1853
        %v1855 = vpop.f32.mrb[0].mxu0
        %1856 = vmatprep.mubr.bf16.mxu0 0
        %1857 = vmatmul.mubr.bf16.gmra.mrb[0].mxu0 %v1291
        %v1858 = vpop.f32.mrb[0].mxu0
        %v1859 = vadd.f32 %v545, %v1858
        %v1860 = vpop.f32.mrb[0].mxu0
        %v1861 = vpop.f32.mrb[0].mxu0
        %v1862 = vadd.f32 %v545, %v1861
        %v1863 = vpop.f32.mrb[0].mxu0
        %1864 = vmatprep.mubr.bf16.mxu0 0
        %1865 = vmatmul.mubr.bf16.gmra.mrb[0].mxu0 %v1294
        %v1866 = vpop.f32.mrb[0].mxu0
        %v1867 = vadd.f32 %v545, %v1866
        %v1868 = vpop.f32.mrb[0].mxu0
        %v1869 = vpop.f32.mrb[0].mxu0
        %v1870 = vadd.f32 %v545, %v1869
        %v1871 = vpop.f32.mrb[0].mxu0
        %1872 = vmatprep.mubr.bf16.mxu0 0
        %1873 = vmatmul.mubr.bf16.gmra.mrb[0].mxu0 %v1297
        %v1874 = vpop.f32.mrb[0].mxu0
        %v1875 = vadd.f32 %v545, %v1874
        %v1876 = vpop.f32.mrb[0].mxu0
        %v1877 = vpop.f32.mrb[0].mxu0
        %v1878 = vadd.f32 %v545, %v1877
        %v1879 = vpop.f32.mrb[0].mxu0
        %1880 = vmatprep.mubr.bf16.mxu0 0
        %1881 = vmatmul.mubr.bf16.gmra.mrb[0].mxu0 %v1300
        %v1882 = vpop.f32.mrb[0].mxu0
        %v1883 = vadd.f32 %v545, %v1882
        %v1884 = vpop.f32.mrb[0].mxu0
        %v1885 = vpop.f32.mrb[0].mxu0
        %v1886 = vadd.f32 %v545, %v1885
        %v1887 = vpop.f32.mrb[0].mxu0
        %1888 = vmatprep.mubr.bf16.mxu0 0
        %1889 = vmatmul.mubr.bf16.gmra.mrb[0].mxu0 %v1303
        %v1890 = vpop.f32.mrb[0].mxu0
        %v1891 = vadd.f32 %v545, %v1890
        %v1892 = vpop.f32.mrb[0].mxu0
        %v1893 = vpop.f32.mrb[0].mxu0
        %v1894 = vadd.f32 %v545, %v1893
        %v1895 = vpop.f32.mrb[0].mxu0
        %1896 = vmatprep.mubr.bf16.mxu0 0
        %1897 = vmatmul.mubr.bf16.gmra.mrb[0].mxu0 %v1306
        %v1898 = vpop.f32.mrb[0].mxu0
        %v1899 = vadd.f32 %v545, %v1898
        %v1900 = vpop.f32.mrb[0].mxu0
        %v1901 = vpop.f32.mrb[0].mxu0
        %v1902 = vadd.f32 %v545, %v1901
        %v1903 = vpop.f32.mrb[0].mxu0
        %1904 = vmatprep.mubr.bf16.mxu0 0
        %1905 = vmatmul.mubr.bf16.gmra.mrb[0].mxu0 %v1309
        %v1906 = vpop.f32.mrb[0].mxu0
        %v1907 = vadd.f32 %v545, %v1906
        %v1908 = vpop.f32.mrb[0].mxu0
        %v1909 = vpop.f32.mrb[0].mxu0
        %v1910 = vadd.f32 %v545, %v1909
        %v1911 = vpop.f32.mrb[0].mxu0
        %1912 = vmatprep.mubr.bf16.mxu0 0
        %1913 = vmatmul.mubr.bf16.gmra.mrb[0].mxu0 %v1312
        %v1914 = vpop.f32.mrb[0].mxu0
        %v1915 = vadd.f32 %v545, %v1914
        %v1916 = vpop.f32.mrb[0].mxu0
        %v1917 = vpop.f32.mrb[0].mxu0
        %v1918 = vadd.f32 %v545, %v1917
        %v1919 = vpop.f32.mrb[0].mxu0
        %1920 = vmatprep.mubr.bf16.mxu0 0
        %1921 = vmatmul.mubr.bf16.gmra.mrb[0].mxu0 %v1315
        %v1922 = vpop.f32.mrb[0].mxu0
        %v1923 = vadd.f32 %v545, %v1922
        %v1924 = vpop.f32.mrb[0].mxu0
        %v1925 = vpop.f32.mrb[0].mxu0
        %v1926 = vadd.f32 %v545, %v1925
        %v1927 = vpop.f32.mrb[0].mxu0
        %1928 = vmatprep.mubr.bf16.mxu0 0
        %1929 = vmatmul.mubr.bf16.gmra.mrb[0].mxu0 %v1318
        %v1930 = vpop.f32.mrb[0].mxu0
        %v1931 = vadd.f32 %v545, %v1930
        %v1932 = vpop.f32.mrb[0].mxu0
        %v1933 = vpop.f32.mrb[0].mxu0
        %v1934 = vadd.f32 %v545, %v1933
        %v1935 = vpop.f32.mrb[0].mxu0
        %1936 = vmatprep.mubr.bf16.mxu0 0
        %1937 = vmatmul.mubr.bf16.gmra.mrb[0].mxu0 %v1321
        %v1938 = vpop.f32.mrb[0].mxu0
        %v1939 = vadd.f32 %v545, %v1938
        %v1940 = vpop.f32.mrb[0].mxu0
        %v1941 = vpop.f32.mrb[0].mxu0
        %v1942 = vadd.f32 %v545, %v1941
        %v1943 = vpop.f32.mrb[0].mxu0
        %1944 = vmatprep.mubr.bf16.mxu0 0
        %1945 = vmatmul.mubr.bf16.gmra.mrb[0].mxu0 %v1324
        %v1946 = vpop.f32.mrb[0].mxu0
        %v1947 = vadd.f32 %v545, %v1946
        %v1948 = vpop.f32.mrb[0].mxu0
        %v1949 = vpop.f32.mrb[0].mxu0
        %v1950 = vadd.f32 %v545, %v1949
        %v1951 = vpop.f32.mrb[0].mxu0
        %1952 = vmatprep.mubr.bf16.mxu0 0
        %1953 = vmatmul.mubr.bf16.gmra.mrb[0].mxu0 %v1327
        %v1954 = vpop.f32.mrb[0].mxu0
        %v1955 = vadd.f32 %v545, %v1954
        %v1956 = vpop.f32.mrb[0].mxu0
        %v1957 = vpop.f32.mrb[0].mxu0
        %v1958 = vadd.f32 %v545, %v1957
        %v1959 = vpop.f32.mrb[0].mxu0
        %1960 = vmatprep.mubr.bf16.mxu0 0
        %1961 = vmatmul.mubr.bf16.gmra.mrb[0].mxu0 %v1330
        %v1962 = vpop.f32.mrb[0].mxu0
        %v1963 = vadd.f32 %v545, %v1962
        %v1964 = vpop.f32.mrb[0].mxu0
        %v1965 = vpop.f32.mrb[0].mxu0
        %v1966 = vadd.f32 %v545, %v1965
        %v1967 = vpop.f32.mrb[0].mxu0
        %1968 = vmatprep.mubr.bf16.mxu0 0
        %1969 = vmatmul.mubr.bf16.gmra.mrb[0].mxu0 %v1333
        %v1970 = vpop.f32.mrb[0].mxu0
        %v1971 = vadd.f32 %v545, %v1970
        %v1972 = vpop.f32.mrb[0].mxu0
        %v1973 = vpop.f32.mrb[0].mxu0
        %v1974 = vadd.f32 %v545, %v1973
        %v1975 = vpop.f32.mrb[0].mxu0
        %1976 = vmatprep.mubr.bf16.mxu0 0
        %1977 = vmatmul.mubr.bf16.gmra.mrb[0].mxu0 %v1336
        %v1978 = vpop.f32.mrb[0].mxu0
        %v1979 = vadd.f32 %v545, %v1978
        %v1980 = vpop.f32.mrb[0].mxu0
        %v1981 = vpop.f32.mrb[0].mxu0
        %v1982 = vadd.f32 %v545, %v1981
        %v1983 = vpop.f32.mrb[0].mxu0
        %1984 = vmatprep.mubr.bf16.mxu0 0
        %1985 = vmatmul.mubr.bf16.gmra.mrb[0].mxu0 %v1339
        %v1986 = vpop.f32.mrb[0].mxu0
        %v1987 = vadd.f32 %v545, %v1986
        %v1988 = vpop.f32.mrb[0].mxu0
        %v1989 = vpop.f32.mrb[0].mxu0
        %v1990 = vadd.f32 %v545, %v1989
        %v1991 = vpop.f32.mrb[0].mxu0
        %1992 = vmatprep.mubr.bf16.mxu0 0
        %1993 = vmatmul.mubr.bf16.gmra.mrb[0].mxu0 %v1342
        %v1994 = vpop.f32.mrb[0].mxu0
        %v1995 = vadd.f32 %v545, %v1994
        %v1996 = vpop.f32.mrb[0].mxu0
        %v1997 = vpop.f32.mrb[0].mxu0
        %v1998 = vadd.f32 %v545, %v1997
        %v1999 = vpop.f32.mrb[0].mxu0
        %2000 = vmatprep.mubr.bf16.mxu0 0
        %2001 = vmatmul.mubr.bf16.gmra.mrb[0].mxu0 %v1345
        %v2002 = vpop.f32.mrb[0].mxu0
        %v2003 = vadd.f32 %v545, %v2002
        %v2004 = vpop.f32.mrb[0].mxu0
        %v2005 = vpop.f32.mrb[0].mxu0
        %v2006 = vadd.f32 %v545, %v2005
        %v2007 = vpop.f32.mrb[0].mxu0
        %2008 = vmatprep.mubr.bf16.mxu0 0
        %2009 = vmatmul.mubr.bf16.gmra.mrb[0].mxu0 %v1348
        %v2010 = vpop.f32.mrb[0].mxu0
        %v2011 = vadd.f32 %v545, %v2010
        %v2012 = vpop.f32.mrb[0].mxu0
        %v2013 = vpop.f32.mrb[0].mxu0
        %v2014 = vadd.f32 %v545, %v2013
        %v2015 = vpop.f32.mrb[0].mxu0
        %2016 = vmatprep.mubr.bf16.mxu0 0
        %2017 = vmatmul.mubr.bf16.gmra.mrb[0].mxu0 %v1351
        %v2018 = vpop.f32.mrb[0].mxu0
        %v2019 = vadd.f32 %v545, %v2018
        %v2020 = vpop.f32.mrb[0].mxu0
        %v2021 = vpop.f32.mrb[0].mxu0
        %v2022 = vadd.f32 %v545, %v2021
        %v2023 = vpop.f32.mrb[0].mxu0
        %2024 = vmatprep.mubr.bf16.mxu0 0
        %2025 = vmatmul.mubr.bf16.gmra.mrb[0].mxu0 %v1354
        %v2026 = vpop.f32.mrb[0].mxu0
        %v2027 = vadd.f32 %v545, %v2026
        %v2028 = vpop.f32.mrb[0].mxu0
        %v2029 = vpop.f32.mrb[0].mxu0
        %v2030 = vadd.f32 %v545, %v2029
        %v2031 = vpop.f32.mrb[0].mxu0
        %2032 = vmatprep.mubr.bf16.mxu0 0
        %2033 = vmatmul.mubr.bf16.gmra.mrb[0].mxu0 %v1357
        %v2034 = vpop.f32.mrb[0].mxu0
        %v2035 = vadd.f32 %v545, %v2034
        %v2036 = vpop.f32.mrb[0].mxu0
        %v2037 = vpop.f32.mrb[0].mxu0
        %v2038 = vadd.f32 %v545, %v2037
        %v2039 = vpop.f32.mrb[0].mxu0
        %2040 = vmatprep.mubr.bf16.mxu0 0
        %2041 = vmatmul.mubr.bf16.gmra.mrb[0].mxu0 %v1360
        %v2042 = vpop.f32.mrb[0].mxu0
        %v2043 = vadd.f32 %v545, %v2042
        %v2044 = vpop.f32.mrb[0].mxu0
        %v2045 = vpop.f32.mrb[0].mxu0
        %v2046 = vadd.f32 %v545, %v2045
        %v2047 = vpop.f32.mrb[0].mxu0
        %2048 = vmatprep.mubr.bf16.mxu0 0
        %2049 = vmatmul.mubr.bf16.gmra.mrb[0].mxu0 %v1363
        %v2050 = vpop.f32.mrb[0].mxu0
        %v2051 = vadd.f32 %v545, %v2050
        %v2052 = vpop.f32.mrb[0].mxu0
        %v2053 = vpop.f32.mrb[0].mxu0
        %v2054 = vadd.f32 %v545, %v2053
        %v2055 = vpop.f32.mrb[0].mxu0
        %2056 = vmatprep.mubr.bf16.mxu0 0
        %2057 = vmatmul.mubr.bf16.gmra.mrb[0].mxu0 %v1366
        %v2058 = vpop.f32.mrb[0].mxu0
        %v2059 = vadd.f32 %v545, %v2058
        %v2060 = vpop.f32.mrb[0].mxu0
        %v2061 = vpop.f32.mrb[0].mxu0
        %v2062 = vadd.f32 %v545, %v2061
        %v2063 = vpop.f32.mrb[0].mxu0
        %2064 = vmatprep.mubr.bf16.mxu0 0
        %2065 = vmatmul.mubr.bf16.gmra.mrb[0].mxu0 %v1369
        %v2066 = vpop.f32.mrb[0].mxu0
        %v2067 = vadd.f32 %v545, %v2066
        %v2068 = vpop.f32.mrb[0].mxu0
        %v2069 = vpop.f32.mrb[0].mxu0
        %v2070 = vadd.f32 %v545, %v2069
        %v2071 = vpop.f32.mrb[0].mxu0
        %2072 = vmatprep.mubr.bf16.mxu0 0
        %2073 = vmatmul.mubr.bf16.gmra.mrb[0].mxu0 %v1372
        %v2074 = vpop.f32.mrb[0].mxu0
        %v2075 = vadd.f32 %v545, %v2074
        %v2076 = vpop.f32.mrb[0].mxu0
        %v2077 = vpop.f32.mrb[0].mxu0
        %v2078 = vadd.f32 %v545, %v2077
        %v2079 = vpop.f32.mrb[0].mxu0
        %2080 = vmatprep.mubr.bf16.mxu0 0
        %2081 = vmatmul.mubr.bf16.gmra.mrb[0].mxu0 %v1375
        %v2082 = vpop.f32.mrb[0].mxu0
        %v2083 = vadd.f32 %v545, %v2082
        %v2084 = vpop.f32.mrb[0].mxu0
        %v2085 = vpop.f32.mrb[0].mxu0
        %v2086 = vadd.f32 %v545, %v2085
        %v2087 = vpop.f32.mrb[0].mxu0
        %2088 = vmatprep.mubr.bf16.mxu0 0
        %2089 = vmatmul.mubr.bf16.gmra.mrb[0].mxu0 %v1378
        %v2090 = vpop.f32.mrb[0].mxu0
        %v2091 = vadd.f32 %v545, %v2090
        %v2092 = vpop.f32.mrb[0].mxu0
        %v2093 = vpop.f32.mrb[0].mxu0
        %v2094 = vadd.f32 %v545, %v2093
        %v2095 = vpop.f32.mrb[0].mxu0
        %2096 = vmatprep.mubr.bf16.mxu0 0
        %2097 = vmatmul.mubr.bf16.gmra.mrb[0].mxu0 %v1381
        %v2098 = vpop.f32.mrb[0].mxu0
        %v2099 = vadd.f32 %v545, %v2098
        %v2100 = vpop.f32.mrb[0].mxu0
        %v2101 = vpop.f32.mrb[0].mxu0
        %v2102 = vadd.f32 %v545, %v2101
        %v2103 = vpop.f32.mrb[0].mxu0
        %2104 = vmatprep.mubr.bf16.mxu0 0
        %2105 = vmatmul.mubr.bf16.gmra.mrb[0].mxu0 %v1384
        %v2106 = vpop.f32.mrb[0].mxu0
        %v2107 = vadd.f32 %v545, %v2106
        %v2108 = vpop.f32.mrb[0].mxu0
        %v2109 = vpop.f32.mrb[0].mxu0
        %v2110 = vadd.f32 %v545, %v2109
        %v2111 = vpop.f32.mrb[0].mxu0
        %2112 = vmatprep.mubr.bf16.mxu0 0
        %2113 = vmatmul.mubr.bf16.gmra.mrb[0].mxu0 %v1387
        %v2114 = vpop.f32.mrb[0].mxu0
        %v2115 = vadd.f32 %v545, %v2114
        %v2116 = vpop.f32.mrb[0].mxu0
        %v2117 = vpop.f32.mrb[0].mxu0
        %v2118 = vadd.f32 %v545, %v2117
        %v2119 = vpop.f32.mrb[0].mxu0
        %2120 = vmatprep.mubr.bf16.mxu0 0
        %2121 = vmatmul.mubr.bf16.gmra.mrb[0].mxu0 %v1390
        %v2122 = vpop.f32.mrb[0].mxu0
        %v2123 = vadd.f32 %v545, %v2122
        %v2124 = vpop.f32.mrb[0].mxu0
        %v2125 = vpop.f32.mrb[0].mxu0
        %v2126 = vadd.f32 %v545, %v2125
        %v2127 = vpop.f32.mrb[0].mxu0
        %2128 = vmatprep.mubr.bf16.mxu0 0
        %2129 = vmatmul.mubr.bf16.gmra.mrb[0].mxu0 %v1393
        %v2130 = vpop.f32.mrb[0].mxu0
        %v2131 = vadd.f32 %v545, %v2130
        %v2132 = vpop.f32.mrb[0].mxu0
        %v2133 = vpop.f32.mrb[0].mxu0
        %v2134 = vadd.f32 %v545, %v2133
        %v2135 = vpop.f32.mrb[0].mxu0
        %2136 = vmatprep.mubr.bf16.mxu0 0
        %2137 = vmatmul.mubr.bf16.gmra.mrb[0].mxu0 %v1396
        %v2138 = vpop.f32.mrb[0].mxu0
        %v2139 = vadd.f32 %v545, %v2138
        %v2140 = vpop.f32.mrb[0].mxu0
        %v2141 = vpop.f32.mrb[0].mxu0
        %v2142 = vadd.f32 %v545, %v2141
        %v2143 = vpop.f32.mrb[0].mxu0
        %2144 = vmatprep.mubr.bf16.mxu0 0
        %2145 = vmatmul.mubr.bf16.gmra.mrb[0].mxu0 %v1399
        %v2146 = vpop.f32.mrb[0].mxu0
        %v2147 = vadd.f32 %v545, %v2146
        %v2148 = vpop.f32.mrb[0].mxu0
        %v2149 = vpop.f32.mrb[0].mxu0
        %v2150 = vadd.f32 %v545, %v2149
        %v2151 = vpop.f32.mrb[0].mxu0
        %2152 = vmatprep.mubr.bf16.mxu0 0
        %2153 = vmatmul.mubr.bf16.gmra.mrb[0].mxu0 %v1402
        %v2154 = vpop.f32.mrb[0].mxu0
        %v2155 = vadd.f32 %v545, %v2154
        %v2156 = vpop.f32.mrb[0].mxu0
        %v2157 = vpop.f32.mrb[0].mxu0
        %v2158 = vadd.f32 %v545, %v2157
        %v2159 = vpop.f32.mrb[0].mxu0
        %2160 = vmatprep.mubr.bf16.mxu0 0
        %2161 = vmatmul.mubr.bf16.gmra.mrb[0].mxu0 %v1405
        %v2162 = vpop.f32.mrb[0].mxu0
        %v2163 = vadd.f32 %v545, %v2162
        %v2164 = vpop.f32.mrb[0].mxu0
        %v2165 = vpop.f32.mrb[0].mxu0
        %v2166 = vadd.f32 %v545, %v2165
        %v2167 = vpop.f32.mrb[0].mxu0
        %2168 = vmatprep.mubr.bf16.mxu0 0
        %2169 = vmatmul.mubr.bf16.gmra.mrb[0].mxu0 %v1408
        %v2170 = vpop.f32.mrb[0].mxu0
        %v2171 = vadd.f32 %v545, %v2170
        %v2172 = vpop.f32.mrb[0].mxu0
        %v2173 = vpop.f32.mrb[0].mxu0
        %v2174 = vadd.f32 %v545, %v2173
        %v2175 = vpop.f32.mrb[0].mxu0
        %2176 = vmatprep.mubr.bf16.mxu0 0
        %2177 = vmatmul.mubr.bf16.gmra.mrb[0].mxu0 %v1411
        %v2178 = vpop.f32.mrb[0].mxu0
        %v2179 = vadd.f32 %v545, %v2178
        %v2180 = vpop.f32.mrb[0].mxu0
        %v2181 = vpop.f32.mrb[0].mxu0
        %v2182 = vadd.f32 %v545, %v2181
        %v2183 = vpop.f32.mrb[0].mxu0
        %2184 = vmatprep.mubr.bf16.mxu0 0
        %2185 = vmatmul.mubr.bf16.gmra.mrb[0].mxu0 %v1414
        %v2186 = vpop.f32.mrb[0].mxu0
        %v2187 = vadd.f32 %v545, %v2186
        %v2188 = vpop.f32.mrb[0].mxu0
        %v2189 = vpop.f32.mrb[0].mxu0
        %v2190 = vadd.f32 %v545, %v2189
        %v2191 = vpop.f32.mrb[0].mxu0
        %2192 = vmatprep.mubr.bf16.mxu0 0
        %2193 = vmatmul.mubr.bf16.gmra.mrb[0].mxu0 %v1417
        %v2194 = vpop.f32.mrb[0].mxu0
        %v2195 = vadd.f32 %v545, %v2194
        %v2196 = vpop.f32.mrb[0].mxu0
        %v2197 = vpop.f32.mrb[0].mxu0
        %v2198 = vadd.f32 %v545, %v2197
        %v2199 = vpop.f32.mrb[0].mxu0
        %2200 = vmatprep.mubr.bf16.mxu0 0
        %2201 = vmatmul.mubr.bf16.gmra.mrb[0].mxu0 %v1420
        %v2202 = vpop.f32.mrb[0].mxu0
        %v2203 = vadd.f32 %v545, %v2202
        %v2204 = vpop.f32.mrb[0].mxu0
        %v2205 = vpop.f32.mrb[0].mxu0
        %v2206 = vadd.f32 %v545, %v2205
        %v2207 = vpop.f32.mrb[0].mxu0
        %2208 = vmatprep.mubr.bf16.mxu0 0
        %2209 = vmatmul.mubr.bf16.gmra.mrb[0].mxu0 %v1423
        %v2210 = vpop.f32.mrb[0].mxu0
        %v2211 = vadd.f32 %v545, %v2210
        %v2212 = vpop.f32.mrb[0].mxu0
        %v2213 = vpop.f32.mrb[0].mxu0
        %v2214 = vadd.f32 %v545, %v2213
        %v2215 = vpop.f32.mrb[0].mxu0
        %2216 = vmatprep.mubr.bf16.mxu0 0
        %2217 = vmatmul.mubr.bf16.gmra.mrb[0].mxu0 %v1426
        %v2218 = vpop.f32.mrb[0].mxu0
        %v2219 = vadd.f32 %v545, %v2218
        %v2220 = vpop.f32.mrb[0].mxu0
        %v2221 = vpop.f32.mrb[0].mxu0
        %v2222 = vadd.f32 %v545, %v2221
        %v2223 = vpop.f32.mrb[0].mxu0
        %2224 = vmatprep.mubr.bf16.mxu0 0
        %2225 = vmatmul.mubr.bf16.gmra.mrb[0].mxu0 %v1429
        %v2226 = vpop.f32.mrb[0].mxu0
        %v2227 = vadd.f32 %v545, %v2226
        %v2228 = vpop.f32.mrb[0].mxu0
        %v2229 = vpop.f32.mrb[0].mxu0
        %v2230 = vadd.f32 %v545, %v2229
        %v2231 = vpop.f32.mrb[0].mxu0
        %2232 = vmatprep.mubr.bf16.mxu0 0
        %2233 = vmatmul.mubr.bf16.gmra.mrb[0].mxu0 %v1432
        %v2234 = vpop.f32.mrb[0].mxu0
        %v2235 = vadd.f32 %v545, %v2234
        %v2236 = vpop.f32.mrb[0].mxu0
        %v2237 = vpop.f32.mrb[0].mxu0
        %v2238 = vadd.f32 %v545, %v2237
        %v2239 = vpop.f32.mrb[0].mxu0
        %2240 = vmatprep.mubr.bf16.mxu0 0
        %2241 = vmatmul.mubr.bf16.gmra.mrb[0].mxu0 %v1435
        %v2242 = vpop.f32.mrb[0].mxu0
        %v2243 = vadd.f32 %v545, %v2242
        %v2244 = vpop.f32.mrb[0].mxu0
        %v2245 = vpop.f32.mrb[0].mxu0
        %v2246 = vadd.f32 %v545, %v2245
        %v2247 = vpop.f32.mrb[0].mxu0
        %2248 = vmatprep.mubr.bf16.mxu0 0
        %2249 = vmatmul.mubr.bf16.gmra.mrb[0].mxu0 %v1438
        %v2250 = vpop.f32.mrb[0].mxu0
        %v2251 = vadd.f32 %v545, %v2250
        %v2252 = vpop.f32.mrb[0].mxu0
        %v2253 = vpop.f32.mrb[0].mxu0
        %v2254 = vadd.f32 %v545, %v2253
        %v2255 = vpop.f32.mrb[0].mxu0
        %2256 = vmatprep.mubr.bf16.mxu0 0
        %2257 = vmatmul.mubr.bf16.gmra.mrb[0].mxu0 %v1441
        %v2258 = vpop.f32.mrb[0].mxu0
        %v2259 = vadd.f32 %v545, %v2258
        %v2260 = vpop.f32.mrb[0].mxu0
        %v2261 = vpop.f32.mrb[0].mxu0
        %v2262 = vadd.f32 %v545, %v2261
        %v2263 = vpop.f32.mrb[0].mxu0
        %2264 = vmatprep.mubr.bf16.mxu0 0
        %2265 = vmatmul.mubr.bf16.gmra.mrb[0].mxu0 %v1444
        %v2266 = vpop.f32.mrb[0].mxu0
        %v2267 = vadd.f32 %v545, %v2266
        %v2268 = vpop.f32.mrb[0].mxu0
        %v2269 = vpop.f32.mrb[0].mxu0
        %v2270 = vadd.f32 %v545, %v2269
        %v2271 = vpop.f32.mrb[0].mxu0
        %2272 = vmatprep.mubr.bf16.mxu0 0
        %2273 = vmatmul.mubr.bf16.gmra.mrb[0].mxu0 %v1447
        %v2274 = vpop.f32.mrb[0].mxu0
        %v2275 = vadd.f32 %v545, %v2274
        %v2276 = vpop.f32.mrb[0].mxu0
        %v2277 = vpop.f32.mrb[0].mxu0
        %v2278 = vadd.f32 %v545, %v2277
        %v2279 = vpop.f32.mrb[0].mxu0
        %2280 = vmatprep.mubr.bf16.mxu0 0
        %2281 = vmatmul.mubr.bf16.gmra.mrb[0].mxu0 %v1450
        %v2282 = vpop.f32.mrb[0].mxu0
        %v2283 = vadd.f32 %v545, %v2282
        %v2284 = vpop.f32.mrb[0].mxu0
        %v2285 = vpop.f32.mrb[0].mxu0
        %v2286 = vadd.f32 %v545, %v2285
        %v2287 = vpop.f32.mrb[0].mxu0
        %2288 = vmatprep.mubr.bf16.mxu0 0
        %2289 = vmatmul.mubr.bf16.gmra.mrb[0].mxu0 %v1453
        %v2290 = vpop.f32.mrb[0].mxu0
        %v2291 = vadd.f32 %v545, %v2290
        %v2292 = vpop.f32.mrb[0].mxu0
        %v2293 = vpop.f32.mrb[0].mxu0
        %v2294 = vadd.f32 %v545, %v2293
        %v2295 = vpop.f32.mrb[0].mxu0
        %2296 = vmatprep.mubr.bf16.mxu0 0
        %2297 = vmatmul.mubr.bf16.gmra.mrb[0].mxu0 %v1456
        %v2298 = vpop.f32.mrb[0].mxu0
        %v2299 = vadd.f32 %v545, %v2298
        %v2300 = vpop.f32.mrb[0].mxu0
        %v2301 = vpop.f32.mrb[0].mxu0
        %v2302 = vadd.f32 %v545, %v2301
        %v2303 = vpop.f32.mrb[0].mxu0
        %2304 = vmatprep.mubr.bf16.mxu0 0
        %2305 = vmatmul.mubr.bf16.gmra.mrb[0].mxu0 %v1459
        %v2306 = vpop.f32.mrb[0].mxu0
        %v2307 = vadd.f32 %v545, %v2306
        %v2308 = vpop.f32.mrb[0].mxu0
        %v2309 = vpop.f32.mrb[0].mxu0
        %v2310 = vadd.f32 %v545, %v2309
        %v2311 = vpop.f32.mrb[0].mxu0
        %2312 = vmatprep.mubr.bf16.mxu0 0
        %2313 = vmatmul.mubr.bf16.gmra.mrb[0].mxu0 %v1462
        %v2314 = vpop.f32.mrb[0].mxu0
        %v2315 = vadd.f32 %v545, %v2314
        %v2316 = vpop.f32.mrb[0].mxu0
        %v2317 = vpop.f32.mrb[0].mxu0
        %v2318 = vadd.f32 %v545, %v2317
        %v2319 = vpop.f32.mrb[0].mxu0
        %2320 = vmatprep.mubr.bf16.mxu0 0
        %2321 = vmatmul.mubr.bf16.gmra.mrb[0].mxu0 %v1465
        %v2322 = vpop.f32.mrb[0].mxu0
        %v2323 = vadd.f32 %v545, %v2322
        %v2324 = vpop.f32.mrb[0].mxu0
        %v2325 = vpop.f32.mrb[0].mxu0
        %v2326 = vadd.f32 %v545, %v2325
        %v2327 = vpop.f32.mrb[0].mxu0
        %2328 = vmatprep.mubr.bf16.mxu0 0
        %2329 = vmatmul.mubr.bf16.gmra.mrb[0].mxu0 %v1468
        %v2330 = vpop.f32.mrb[0].mxu0
        %v2331 = vadd.f32 %v545, %v2330
        %v2332 = vpop.f32.mrb[0].mxu0
        %v2333 = vpop.f32.mrb[0].mxu0
        %v2334 = vadd.f32 %v545, %v2333
        %v2335 = vpop.f32.mrb[0].mxu0
        %2336 = vmatprep.mubr.bf16.mxu0 0
        %2337 = vmatmul.mubr.bf16.gmra.mrb[0].mxu0 %v1471
        %v2338 = vpop.f32.mrb[0].mxu0
        %v2339 = vadd.f32 %v545, %v2338
        %v2340 = vpop.f32.mrb[0].mxu0
        %v2341 = vpop.f32.mrb[0].mxu0
        %v2342 = vadd.f32 %v545, %v2341
        %v2343 = vpop.f32.mrb[0].mxu0
        %2344 = vmatprep.mubr.bf16.mxu0 0
        %2345 = vmatmul.mubr.bf16.gmra.mrb[0].mxu0 %v1474
        %v2346 = vpop.f32.mrb[0].mxu0
        %v2347 = vadd.f32 %v545, %v2346
        %v2348 = vpop.f32.mrb[0].mxu0
        %v2349 = vpop.f32.mrb[0].mxu0
        %v2350 = vadd.f32 %v545, %v2349
        %v2351 = vpop.f32.mrb[0].mxu0
        %2352 = vmatprep.mubr.bf16.mxu0 0
        %2353 = vmatmul.mubr.bf16.gmra.mrb[0].mxu0 %v1477
        %v2354 = vpop.f32.mrb[0].mxu0
        %v2355 = vadd.f32 %v545, %v2354
        %v2356 = vpop.f32.mrb[0].mxu0
        %v2357 = vpop.f32.mrb[0].mxu0
        %v2358 = vadd.f32 %v545, %v2357
        %v2359 = vpop.f32.mrb[0].mxu0
        %2360 = vmatprep.mubr.bf16.mxu0 0
        %2361 = vmatmul.mubr.bf16.gmra.mrb[0].mxu0 %v1480
        %v2362 = vpop.f32.mrb[0].mxu0
        %v2363 = vadd.f32 %v545, %v2362
        %v2364 = vpop.f32.mrb[0].mxu0
        %v2365 = vpop.f32.mrb[0].mxu0
        %v2366 = vadd.f32 %v545, %v2365
        %v2367 = vpop.f32.mrb[0].mxu0
        %2368 = vmatprep.mubr.bf16.mxu0 0
        %2369 = vmatmul.mubr.bf16.gmra.mrb[0].mxu0 %v1483
        %v2370 = vpop.f32.mrb[0].mxu0
        %v2371 = vadd.f32 %v545, %v2370
        %v2372 = vpop.f32.mrb[0].mxu0
        %v2373 = vpop.f32.mrb[0].mxu0
        %v2374 = vadd.f32 %v545, %v2373
        %v2375 = vpop.f32.mrb[0].mxu0
        %2376 = vmatprep.mubr.bf16.mxu0 0
        %2377 = vmatmul.mubr.bf16.gmra.mrb[0].mxu0 %v1486
        %v2378 = vpop.f32.mrb[0].mxu0
        %v2379 = vadd.f32 %v545, %v2378
        %v2380 = vpop.f32.mrb[0].mxu0
        %v2381 = vpop.f32.mrb[0].mxu0
        %v2382 = vadd.f32 %v545, %v2381
        %v2383 = vpop.f32.mrb[0].mxu0
        %2384 = vmatprep.mubr.bf16.mxu0 0
        %2385 = vmatmul.mubr.bf16.gmra.mrb[0].mxu0 %v1489
        %v2386 = vpop.f32.mrb[0].mxu0
        %v2387 = vadd.f32 %v545, %v2386
        %v2388 = vpop.f32.mrb[0].mxu0
        %v2389 = vpop.f32.mrb[0].mxu0
        %v2390 = vadd.f32 %v545, %v2389
        %v2391 = vpop.f32.mrb[0].mxu0
        %2392 = vmatprep.mubr.bf16.mxu0 0
        %2393 = vmatmul.mubr.bf16.gmra.mrb[0].mxu0 %v1492
        %v2394 = vpop.f32.mrb[0].mxu0
        %v2395 = vadd.f32 %v545, %v2394
        %v2396 = vpop.f32.mrb[0].mxu0
        %v2397 = vpop.f32.mrb[0].mxu0
        %v2398 = vadd.f32 %v545, %v2397
        %v2399 = vpop.f32.mrb[0].mxu0
        %2400 = vmatprep.mubr.bf16.mxu0 0
        %2401 = vmatmul.mubr.bf16.gmra.mrb[0].mxu0 %v1495
        %v2402 = vpop.f32.mrb[0].mxu0
        %v2403 = vadd.f32 %v545, %v2402
        %v2404 = vpop.f32.mrb[0].mxu0
        %v2405 = vpop.f32.mrb[0].mxu0
        %v2406 = vadd.f32 %v545, %v2405
        %v2407 = vpop.f32.mrb[0].mxu0
        %2408 = vmatprep.mubr.bf16.mxu0 0
        %2409 = vmatmul.mubr.bf16.gmra.mrb[0].mxu0 %v1498
        %v2410 = vpop.f32.mrb[0].mxu0
        %v2411 = vadd.f32 %v545, %v2410
        %v2412 = vpop.f32.mrb[0].mxu0
        %v2413 = vpop.f32.mrb[0].mxu0
        %v2414 = vadd.f32 %v545, %v2413
        %v2415 = vpop.f32.mrb[0].mxu0
        %2416 = vmatprep.mubr.bf16.mxu0 0
        %2417 = vmatmul.mubr.bf16.gmra.mrb[0].mxu0 %v1501
        %v2418 = vpop.f32.mrb[0].mxu0
        %v2419 = vadd.f32 %v545, %v2418
        %v2420 = vpop.f32.mrb[0].mxu0
        %v2421 = vpop.f32.mrb[0].mxu0
        %v2422 = vadd.f32 %v545, %v2421
        %v2423 = vpop.f32.mrb[0].mxu0
        %2424 = vmatprep.mubr.bf16.mxu0 0
        %2425 = vmatmul.mubr.bf16.gmra.mrb[0].mxu0 %v1504
        %v2426 = vpop.f32.mrb[0].mxu0
        %v2427 = vadd.f32 %v545, %v2426
        %v2428 = vpop.f32.mrb[0].mxu0
        %v2429 = vpop.f32.mrb[0].mxu0
        %v2430 = vadd.f32 %v545, %v2429
        %v2431 = vpop.f32.mrb[0].mxu0
        %2432 = vmatprep.mubr.bf16.mxu0 0
        %2433 = vmatmul.mubr.bf16.gmra.mrb[0].mxu0 %v1507
        %v2434 = vpop.f32.mrb[0].mxu0
        %v2435 = vadd.f32 %v545, %v2434
        %v2436 = vpop.f32.mrb[0].mxu0
        %v2437 = vpop.f32.mrb[0].mxu0
        %v2438 = vadd.f32 %v545, %v2437
        %v2439 = vpop.f32.mrb[0].mxu0
        %2440 = vmatprep.mubr.bf16.mxu0 0
        %2441 = vmatmul.mubr.bf16.gmra.mrb[0].mxu0 %v1510
        %v2442 = vpop.f32.mrb[0].mxu0
        %v2443 = vadd.f32 %v545, %v2442
        %v2444 = vpop.f32.mrb[0].mxu0
        %v2445 = vpop.f32.mrb[0].mxu0
        %v2446 = vadd.f32 %v545, %v2445
        %v2447 = vpop.f32.mrb[0].mxu0
        %2448 = vmatprep.mubr.bf16.mxu0 0
        %2449 = vmatmul.mubr.bf16.gmra.mrb[0].mxu0 %v1513
        %v2450 = vpop.f32.mrb[0].mxu0
        %v2451 = vadd.f32 %v545, %v2450
        %v2452 = vpop.f32.mrb[0].mxu0
        %v2453 = vpop.f32.mrb[0].mxu0
        %v2454 = vadd.f32 %v545, %v2453
        %v2455 = vpop.f32.mrb[0].mxu0
        %2456 = vmatprep.mubr.bf16.mxu0 0
        %2457 = vmatmul.mubr.bf16.gmra.mrb[0].mxu0 %v1516
        %v2458 = vpop.f32.mrb[0].mxu0
        %v2459 = vadd.f32 %v545, %v2458
        %v2460 = vpop.f32.mrb[0].mxu0
        %v2461 = vpop.f32.mrb[0].mxu0
        %v2462 = vadd.f32 %v545, %v2461
        %v2463 = vpop.f32.mrb[0].mxu0
        %2464 = vmatprep.mubr.bf16.mxu0 0
        %2465 = vmatmul.mubr.bf16.gmra.mrb[0].mxu0 %v1519
        %v2466 = vpop.f32.mrb[0].mxu0
        %v2467 = vadd.f32 %v545, %v2466
        %v2468 = vpop.f32.mrb[0].mxu0
        %v2469 = vpop.f32.mrb[0].mxu0
        %v2470 = vadd.f32 %v545, %v2469
        %v2471 = vpop.f32.mrb[0].mxu0
        %2472 = vmatprep.mubr.bf16.mxu0 0
        %2473 = vmatmul.mubr.bf16.gmra.mrb[0].mxu0 %v1522
        %v2474 = vpop.f32.mrb[0].mxu0
        %v2475 = vadd.f32 %v545, %v2474
        %v2476 = vpop.f32.mrb[0].mxu0
        %v2477 = vpop.f32.mrb[0].mxu0
        %v2478 = vadd.f32 %v545, %v2477
        %v2479 = vpop.f32.mrb[0].mxu0
        %2480 = vmatprep.mubr.bf16.mxu0 0
        %2481 = vmatmul.mubr.bf16.gmra.mrb[0].mxu0 %v1525
        %v2482 = vpop.f32.mrb[0].mxu0
        %v2483 = vadd.f32 %v545, %v2482
        %v2484 = vpop.f32.mrb[0].mxu0
        %v2485 = vpop.f32.mrb[0].mxu0
        %v2486 = vadd.f32 %v545, %v2485
        %v2487 = vpop.f32.mrb[0].mxu0
        %2488 = vmatprep.mubr.bf16.mxu0 0
        %2489 = vmatmul.mubr.bf16.gmra.mrb[0].mxu0 %v1528
        %v2490 = vpop.f32.mrb[0].mxu0
        %v2491 = vadd.f32 %v545, %v2490
        %v2492 = vpop.f32.mrb[0].mxu0
        %v2493 = vpop.f32.mrb[0].mxu0
        %v2494 = vadd.f32 %v545, %v2493
        %v2495 = vpop.f32.mrb[0].mxu0
        %2496 = vmatprep.mubr.bf16.mxu0 0
        %2497 = vmatmul.mubr.bf16.gmra.mrb[0].mxu0 %v1531
        %v2498 = vpop.f32.mrb[0].mxu0
        %v2499 = vadd.f32 %v545, %v2498
        %v2500 = vpop.f32.mrb[0].mxu0
        %v2501 = vpop.f32.mrb[0].mxu0
        %v2502 = vadd.f32 %v545, %v2501
        %v2503 = vpop.f32.mrb[0].mxu0
        %2504 = vmatprep.mubr.bf16.mxu0 0
        %2505 = vmatmul.mubr.bf16.gmra.mrb[0].mxu0 %v1534
        %v2506 = vpop.f32.mrb[0].mxu0
        %v2507 = vadd.f32 %v545, %v2506
        %v2508 = vpop.f32.mrb[0].mxu0
        %v2509 = vpop.f32.mrb[0].mxu0
        %v2510 = vadd.f32 %v545, %v2509
        %v2511 = vpop.f32.mrb[0].mxu0
        %2512 = vmatprep.mubr.bf16.mxu0 0
        %2513 = vmatmul.mubr.bf16.gmra.mrb[0].mxu0 %v1537
        %v2514 = vpop.f32.mrb[0].mxu0
        %v2515 = vadd.f32 %v545, %v2514
        %v2516 = vpop.f32.mrb[0].mxu0
        %v2517 = vpop.f32.mrb[0].mxu0
        %v2518 = vadd.f32 %v545, %v2517
        %v2519 = vpop.f32.mrb[0].mxu0
        %2520 = vmatprep.mubr.bf16.mxu0 0
        %2521 = vmatmul.mubr.bf16.gmra.mrb[0].mxu0 %v1540
        %v2522 = vpop.f32.mrb[0].mxu0
        %v2523 = vadd.f32 %v545, %v2522
        %v2524 = vpop.f32.mrb[0].mxu0
        %v2525 = vpop.f32.mrb[0].mxu0
        %v2526 = vadd.f32 %v545, %v2525
        %v2527 = vpop.f32.mrb[0].mxu0
        %2528 = vmatprep.mubr.bf16.mxu0 0
        %2529 = vmatmul.mubr.bf16.gmra.mrb[0].mxu0 %v1543
        %v2530 = vpop.f32.mrb[0].mxu0
        %v2531 = vadd.f32 %v545, %v2530
        %v2532 = vpop.f32.mrb[0].mxu0
        %v2533 = vpop.f32.mrb[0].mxu0
        %v2534 = vadd.f32 %v545, %v2533
        %v2535 = vpop.f32.mrb[0].mxu0
        %2536 = vmatprep.mubr.bf16.mxu0 0
        %2537 = vmatmul.mubr.bf16.gmra.mrb[0].mxu0 %v1546
        %v2538 = vpop.f32.mrb[0].mxu0
        %v2539 = vadd.f32 %v545, %v2538
        %v2540 = vpop.f32.mrb[0].mxu0
        %v2541 = vpop.f32.mrb[0].mxu0
        %v2542 = vadd.f32 %v545, %v2541
        %v2543 = vpop.f32.mrb[0].mxu0
        %2544 = vmatprep.mubr.bf16.mxu0 0
        %2545 = vmatmul.mubr.bf16.gmra.mrb[0].mxu0 %v1549
        %v2546 = vpop.f32.mrb[0].mxu0
        %v2547 = vadd.f32 %v545, %v2546
        %v2548 = vpop.f32.mrb[0].mxu0
        %v2549 = vpop.f32.mrb[0].mxu0
        %v2550 = vadd.f32 %v545, %v2549
        %v2551 = vpop.f32.mrb[0].mxu0
        %2552 = vmatprep.mubr.bf16.mxu0 0
        %2553 = vmatmul.mubr.bf16.gmra.mrb[0].mxu0 %v1552
        %v2554 = vpop.f32.mrb[0].mxu0
        %v2555 = vadd.f32 %v545, %v2554
        %v2556 = vpop.f32.mrb[0].mxu0
        %v2557 = vpop.f32.mrb[0].mxu0
        %v2558 = vadd.f32 %v545, %v2557
        %v2559 = vpop.f32.mrb[0].mxu0
        %2560 = vmatprep.mubr.bf16.mxu0 0
        %2561 = vmatmul.mubr.bf16.gmra.mrb[0].mxu0 %v1555
        %v2562 = vpop.f32.mrb[0].mxu0
        %v2563 = vadd.f32 %v545, %v2562
        %v2564 = vpop.f32.mrb[0].mxu0
        %v2565 = vpop.f32.mrb[0].mxu0
        %v2566 = vadd.f32 %v545, %v2565
        %v2567 = vpop.f32.mrb[0].mxu0
        %2568 = vmatprep.mubr.bf16.mxu0 0
        %2569 = vmatmul.mubr.bf16.gmra.mrb[0].mxu0 %v1558
        %v2570 = vpop.f32.mrb[0].mxu0
        %v2571 = vadd.f32 %v545, %v2570
        %v2572 = vpop.f32.mrb[0].mxu0
        %v2573 = vpop.f32.mrb[0].mxu0
        %v2574 = vadd.f32 %v545, %v2573
        %v2575 = vpop.f32.mrb[0].mxu0
        %2576 = vmatprep.mubr.bf16.mxu0 0
        %2577 = vmatmul.mubr.bf16.gmra.mrb[0].mxu0 %v1561
        %v2578 = vpop.f32.mrb[0].mxu0
        %v2579 = vadd.f32 %v545, %v2578
        %v2580 = vpop.f32.mrb[0].mxu0
        %v2581 = vpop.f32.mrb[0].mxu0
        %v2582 = vadd.f32 %v545, %v2581
        %v2583 = vpop.f32.mrb[0].mxu0
        %2584 = vmatprep.mubr.bf16.mxu0 0
        %2585 = vmatmul.mubr.bf16.gmra.mrb[0].mxu0 %v1564
        %v2586 = vpop.f32.mrb[0].mxu0
        %v2587 = vadd.f32 %v545, %v2586
        %v2588 = vpop.f32.mrb[0].mxu0
        %v2589 = vpop.f32.mrb[0].mxu0
        %v2590 = vadd.f32 %v545, %v2589
        %v2591 = vpop.f32.mrb[0].mxu0
        %2592 = vmatprep.mubr.bf16.mxu0 0
        %2593 = vmatmul.mubr.bf16.gmra.mrb[0].mxu0 %v1567
        %v2594 = vpop.f32.mrb[0].mxu0
        %v2595 = vadd.f32 %v545, %v2594
        %v2596 = vpop.f32.mrb[0].mxu0
        %v2597 = vpop.f32.mrb[0].mxu0
        %v2598 = vadd.f32 %v545, %v2597
        %v2599 = vpop.f32.mrb[0].mxu0
        %2600 = vmatprep.mubr.bf16.mxu0 0
        %2601 = vmatmul.mubr.bf16.gmra.mrb[0].mxu0 %v1570
        %v2602 = vpop.f32.mrb[0].mxu0
        %v2603 = vadd.f32 %v545, %v2602
        %v2604 = vpop.f32.mrb[0].mxu0
        %v2605 = vpop.f32.mrb[0].mxu0
        %v2606 = vadd.f32 %v545, %v2605
        %v2607 = vpop.f32.mrb[0].mxu0
        %2608 = vmatprep.mubr.bf16.mxu0 0
        %2609 = vmatmul.mubr.bf16.gmra.mrb[0].mxu0 %v1573
        %v2610 = vpop.f32.mrb[0].mxu0
        %v2611 = vadd.f32 %v545, %v2610
        %v2612 = vpop.f32.mrb[0].mxu0
        %v2613 = vpop.f32.mrb[0].mxu0
        %v2614 = vadd.f32 %v545, %v2613
        %v2615 = vpop.f32.mrb[0].mxu0
        %2616 = vmatprep.mubr.bf16.mxu0 0
        %2617 = vmatmul.mubr.bf16.gmra.mrb[0].mxu0 %v1576
        %v2618 = vpop.f32.mrb[0].mxu0
        %v2619 = vadd.f32 %v545, %v2618
        %v2620 = vpop.f32.mrb[0].mxu0
        %v2621 = vpop.f32.mrb[0].mxu0
        %v2622 = vadd.f32 %v545, %v2621
        %v2623 = vpop.f32.mrb[0].mxu0
        %2624 = vmatprep.mubr.bf16.mxu0 0
        %2625 = vmatmul.mubr.bf16.gmra.mrb[0].mxu0 %v1579
        %v2626 = vpop.f32.mrb[0].mxu0
        %v2627 = vadd.f32 %v545, %v2626
        %v2628 = vpop.f32.mrb[0].mxu0
        %v2629 = vpop.f32.mrb[0].mxu0
        %v2630 = vadd.f32 %v545, %v2629
        %v2631 = vpop.f32.mrb[0].mxu0
        %2632 = vmatprep.mubr.bf16.mxu0 0
        %2633 = vmatmul.mubr.bf16.gmra.mrb[0].mxu0 %v1582
        %v2634 = vpop.f32.mrb[0].mxu0
        %v2635 = vadd.f32 %v545, %v2634
        %v2636 = vpop.f32.mrb[0].mxu0
        %v2637 = vpop.f32.mrb[0].mxu0
        %v2638 = vadd.f32 %v545, %v2637
        %v2639 = vpop.f32.mrb[0].mxu0
        %2640 = vdwg.mxu0
        %v2641 = vmax.f32 %v1619, 0.0
        %v2642 = vmax.f32 %v1622, 0.0
        %v2643 = vmax.f32 %v1627, 0.0
        %v2644 = vmax.f32 %v1630, 0.0
        %v2645 = vmax.f32 %v1635, 0.0
        %v2646 = vmax.f32 %v1638, 0.0
        %v2647 = vmax.f32 %v1643, 0.0
        %v2648 = vmax.f32 %v1646, 0.0
        %v2649 = vmax.f32 %v1651, 0.0
        %v2650 = vmax.f32 %v1654, 0.0
        %v2651 = vmax.f32 %v1659, 0.0
        %v2652 = vmax.f32 %v1662, 0.0
        %v2653 = vmax.f32 %v1667, 0.0
        %v2654 = vmax.f32 %v1670, 0.0
        %v2655 = vmax.f32 %v1675, 0.0
        %v2656 = vmax.f32 %v1678, 0.0
        %v2657 = vmax.f32 %v1683, 0.0
        %v2658 = vmax.f32 %v1686, 0.0
        %v2659 = vmax.f32 %v1691, 0.0
        %v2660 = vmax.f32 %v1694, 0.0
        %v2661 = vmax.f32 %v1699, 0.0
        %v2662 = vmax.f32 %v1702, 0.0
        %v2663 = vmax.f32 %v1707, 0.0
        %v2664 = vmax.f32 %v1710, 0.0
        %v2665 = vmax.f32 %v1715, 0.0
        %v2666 = vmax.f32 %v1718, 0.0
        %v2667 = vmax.f32 %v1723, 0.0
        %v2668 = vmax.f32 %v1726, 0.0
        %v2669 = vmax.f32 %v1731, 0.0
        %v2670 = vmax.f32 %v1734, 0.0
        %v2671 = vmax.f32 %v1739, 0.0
        %v2672 = vmax.f32 %v1742, 0.0
        %v2673 = vmax.f32 %v1747, 0.0
        %v2674 = vmax.f32 %v1750, 0.0
        %v2675 = vmax.f32 %v1755, 0.0
        %v2676 = vmax.f32 %v1758, 0.0
        %v2677 = vmax.f32 %v1763, 0.0
        %v2678 = vmax.f32 %v1766, 0.0
        %v2679 = vmax.f32 %v1771, 0.0
        %v2680 = vmax.f32 %v1774, 0.0
        %v2681 = vmax.f32 %v1779, 0.0
        %v2682 = vmax.f32 %v1782, 0.0
        %v2683 = vmax.f32 %v1787, 0.0
        %v2684 = vmax.f32 %v1790, 0.0
        %v2685 = vmax.f32 %v1795, 0.0
        %v2686 = vmax.f32 %v1798, 0.0
        %v2687 = vmax.f32 %v1803, 0.0
        %v2688 = vmax.f32 %v1806, 0.0
        %v2689 = vmax.f32 %v1811, 0.0
        %v2690 = vmax.f32 %v1814, 0.0
        %v2691 = vmax.f32 %v1819, 0.0
        %v2692 = vmax.f32 %v1822, 0.0
        %v2693 = vmax.f32 %v1827, 0.0
        %v2694 = vmax.f32 %v1830, 0.0
        %v2695 = vmax.f32 %v1835, 0.0
        %v2696 = vmax.f32 %v1838, 0.0
        %v2697 = vmax.f32 %v1843, 0.0
        %v2698 = vmax.f32 %v1846, 0.0
        %v2699 = vmax.f32 %v1851, 0.0
        %v2700 = vmax.f32 %v1854, 0.0
        %v2701 = vmax.f32 %v1859, 0.0
        %v2702 = vmax.f32 %v1862, 0.0
        %v2703 = vmax.f32 %v1867, 0.0
        %v2704 = vmax.f32 %v1870, 0.0
        %v2705 = vmax.f32 %v1875, 0.0
        %v2706 = vmax.f32 %v1878, 0.0
        %v2707 = vmax.f32 %v1883, 0.0
        %v2708 = vmax.f32 %v1886, 0.0
        %v2709 = vmax.f32 %v1891, 0.0
        %v2710 = vmax.f32 %v1894, 0.0
        %v2711 = vmax.f32 %v1899, 0.0
        %v2712 = vmax.f32 %v1902, 0.0
        %v2713 = vmax.f32 %v1907, 0.0
        %v2714 = vmax.f32 %v1910, 0.0
        %v2715 = vmax.f32 %v1915, 0.0
        %v2716 = vmax.f32 %v1918, 0.0
        %v2717 = vmax.f32 %v1923, 0.0
        %v2718 = vmax.f32 %v1926, 0.0
        %v2719 = vmax.f32 %v1931, 0.0
        %v2720 = vmax.f32 %v1934, 0.0
        %v2721 = vmax.f32 %v1939, 0.0
        %v2722 = vmax.f32 %v1942, 0.0
        %v2723 = vmax.f32 %v1947, 0.0
        %v2724 = vmax.f32 %v1950, 0.0
        %v2725 = vmax.f32 %v1955, 0.0
        %v2726 = vmax.f32 %v1958, 0.0
        %v2727 = vmax.f32 %v1963, 0.0
        %v2728 = vmax.f32 %v1966, 0.0
        %v2729 = vmax.f32 %v1971, 0.0
        %v2730 = vmax.f32 %v1974, 0.0
        %v2731 = vmax.f32 %v1979, 0.0
        %v2732 = vmax.f32 %v1982, 0.0
        %v2733 = vmax.f32 %v1987, 0.0
        %v2734 = vmax.f32 %v1990, 0.0
        %v2735 = vmax.f32 %v1995, 0.0
        %v2736 = vmax.f32 %v1998, 0.0
        %v2737 = vmax.f32 %v2003, 0.0
        %v2738 = vmax.f32 %v2006, 0.0
        %v2739 = vmax.f32 %v2011, 0.0
        %v2740 = vmax.f32 %v2014, 0.0
        %v2741 = vmax.f32 %v2019, 0.0
        %v2742 = vmax.f32 %v2022, 0.0
        %v2743 = vmax.f32 %v2027, 0.0
        %v2744 = vmax.f32 %v2030, 0.0
        %v2745 = vmax.f32 %v2035, 0.0
        %v2746 = vmax.f32 %v2038, 0.0
        %v2747 = vmax.f32 %v2043, 0.0
        %v2748 = vmax.f32 %v2046, 0.0
        %v2749 = vmax.f32 %v2051, 0.0
        %v2750 = vmax.f32 %v2054, 0.0
        %v2751 = vmax.f32 %v2059, 0.0
        %v2752 = vmax.f32 %v2062, 0.0
        %v2753 = vmax.f32 %v2067, 0.0
        %v2754 = vmax.f32 %v2070, 0.0
        %v2755 = vmax.f32 %v2075, 0.0
        %v2756 = vmax.f32 %v2078, 0.0
        %v2757 = vmax.f32 %v2083, 0.0
        %v2758 = vmax.f32 %v2086, 0.0
        %v2759 = vmax.f32 %v2091, 0.0
        %v2760 = vmax.f32 %v2094, 0.0
        %v2761 = vmax.f32 %v2099, 0.0
        %v2762 = vmax.f32 %v2102, 0.0
        %v2763 = vmax.f32 %v2107, 0.0
        %v2764 = vmax.f32 %v2110, 0.0
        %v2765 = vmax.f32 %v2115, 0.0
        %v2766 = vmax.f32 %v2118, 0.0
        %v2767 = vmax.f32 %v2123, 0.0
        %v2768 = vmax.f32 %v2126, 0.0
        %v2769 = vmax.f32 %v2131, 0.0
        %v2770 = vmax.f32 %v2134, 0.0
        %v2771 = vmax.f32 %v2139, 0.0
        %v2772 = vmax.f32 %v2142, 0.0
        %v2773 = vmax.f32 %v2147, 0.0
        %v2774 = vmax.f32 %v2150, 0.0
        %v2775 = vmax.f32 %v2155, 0.0
        %v2776 = vmax.f32 %v2158, 0.0
        %v2777 = vmax.f32 %v2163, 0.0
        %v2778 = vmax.f32 %v2166, 0.0
        %v2779 = vmax.f32 %v2171, 0.0
        %v2780 = vmax.f32 %v2174, 0.0
        %v2781 = vmax.f32 %v2179, 0.0
        %v2782 = vmax.f32 %v2182, 0.0
        %v2783 = vmax.f32 %v2187, 0.0
        %v2784 = vmax.f32 %v2190, 0.0
        %v2785 = vmax.f32 %v2195, 0.0
        %v2786 = vmax.f32 %v2198, 0.0
        %v2787 = vmax.f32 %v2203, 0.0
        %v2788 = vmax.f32 %v2206, 0.0
        %v2789 = vmax.f32 %v2211, 0.0
        %v2790 = vmax.f32 %v2214, 0.0
        %v2791 = vmax.f32 %v2219, 0.0
        %v2792 = vmax.f32 %v2222, 0.0
        %v2793 = vmax.f32 %v2227, 0.0
        %v2794 = vmax.f32 %v2230, 0.0
        %v2795 = vmax.f32 %v2235, 0.0
        %v2796 = vmax.f32 %v2238, 0.0
        %v2797 = vmax.f32 %v2243, 0.0
        %v2798 = vmax.f32 %v2246, 0.0
        %v2799 = vmax.f32 %v2251, 0.0
        %v2800 = vmax.f32 %v2254, 0.0
        %v2801 = vmax.f32 %v2259, 0.0
        %v2802 = vmax.f32 %v2262, 0.0
        %v2803 = vmax.f32 %v2267, 0.0
        %v2804 = vmax.f32 %v2270, 0.0
        %v2805 = vmax.f32 %v2275, 0.0
        %v2806 = vmax.f32 %v2278, 0.0
        %v2807 = vmax.f32 %v2283, 0.0
        %v2808 = vmax.f32 %v2286, 0.0
        %v2809 = vmax.f32 %v2291, 0.0
        %v2810 = vmax.f32 %v2294, 0.0
        %v2811 = vmax.f32 %v2299, 0.0
        %v2812 = vmax.f32 %v2302, 0.0
        %v2813 = vmax.f32 %v2307, 0.0
        %v2814 = vmax.f32 %v2310, 0.0
        %v2815 = vmax.f32 %v2315, 0.0
        %v2816 = vmax.f32 %v2318, 0.0
        %v2817 = vmax.f32 %v2323, 0.0
        %v2818 = vmax.f32 %v2326, 0.0
        %v2819 = vmax.f32 %v2331, 0.0
        %v2820 = vmax.f32 %v2334, 0.0
        %v2821 = vmax.f32 %v2339, 0.0
        %v2822 = vmax.f32 %v2342, 0.0
        %v2823 = vmax.f32 %v2347, 0.0
        %v2824 = vmax.f32 %v2350, 0.0
        %v2825 = vmax.f32 %v2355, 0.0
        %v2826 = vmax.f32 %v2358, 0.0
        %v2827 = vmax.f32 %v2363, 0.0
        %v2828 = vmax.f32 %v2366, 0.0
        %v2829 = vmax.f32 %v2371, 0.0
        %v2830 = vmax.f32 %v2374, 0.0
        %v2831 = vmax.f32 %v2379, 0.0
        %v2832 = vmax.f32 %v2382, 0.0
        %v2833 = vmax.f32 %v2387, 0.0
        %v2834 = vmax.f32 %v2390, 0.0
        %v2835 = vmax.f32 %v2395, 0.0
        %v2836 = vmax.f32 %v2398, 0.0
        %v2837 = vmax.f32 %v2403, 0.0
        %v2838 = vmax.f32 %v2406, 0.0
        %v2839 = vmax.f32 %v2411, 0.0
        %v2840 = vmax.f32 %v2414, 0.0
        %v2841 = vmax.f32 %v2419, 0.0
        %v2842 = vmax.f32 %v2422, 0.0
        %v2843 = vmax.f32 %v2427, 0.0
        %v2844 = vmax.f32 %v2430, 0.0
        %v2845 = vmax.f32 %v2435, 0.0
        %v2846 = vmax.f32 %v2438, 0.0
        %v2847 = vmax.f32 %v2443, 0.0
        %v2848 = vmax.f32 %v2446, 0.0
        %v2849 = vmax.f32 %v2451, 0.0
        %v2850 = vmax.f32 %v2454, 0.0
        %v2851 = vmax.f32 %v2459, 0.0
        %v2852 = vmax.f32 %v2462, 0.0
        %v2853 = vmax.f32 %v2467, 0.0
        %v2854 = vmax.f32 %v2470, 0.0
        %v2855 = vmax.f32 %v2475, 0.0
        %v2856 = vmax.f32 %v2478, 0.0
        %v2857 = vmax.f32 %v2483, 0.0
        %v2858 = vmax.f32 %v2486, 0.0
        %v2859 = vmax.f32 %v2491, 0.0
        %v2860 = vmax.f32 %v2494, 0.0
        %v2861 = vmax.f32 %v2499, 0.0
        %v2862 = vmax.f32 %v2502, 0.0
        %v2863 = vmax.f32 %v2507, 0.0
        %v2864 = vmax.f32 %v2510, 0.0
        %v2865 = vmax.f32 %v2515, 0.0
        %v2866 = vmax.f32 %v2518, 0.0
        %v2867 = vmax.f32 %v2523, 0.0
        %v2868 = vmax.f32 %v2526, 0.0
        %v2869 = vmax.f32 %v2531, 0.0
        %v2870 = vmax.f32 %v2534, 0.0
        %v2871 = vmax.f32 %v2539, 0.0
        %v2872 = vmax.f32 %v2542, 0.0
        %v2873 = vmax.f32 %v2547, 0.0
        %v2874 = vmax.f32 %v2550, 0.0
        %v2875 = vmax.f32 %v2555, 0.0
        %v2876 = vmax.f32 %v2558, 0.0
        %v2877 = vmax.f32 %v2563, 0.0
        %v2878 = vmax.f32 %v2566, 0.0
        %v2879 = vmax.f32 %v2571, 0.0
        %v2880 = vmax.f32 %v2574, 0.0
        %v2881 = vmax.f32 %v2579, 0.0
        %v2882 = vmax.f32 %v2582, 0.0
        %v2883 = vmax.f32 %v2587, 0.0
        %v2884 = vmax.f32 %v2590, 0.0
        %v2885 = vmax.f32 %v2595, 0.0
        %v2886 = vmax.f32 %v2598, 0.0
        %v2887 = vmax.f32 %v2603, 0.0
        %v2888 = vmax.f32 %v2606, 0.0
        %v2889 = vmax.f32 %v2611, 0.0
        %v2890 = vmax.f32 %v2614, 0.0
        %v2891 = vmax.f32 %v2619, 0.0
        %v2892 = vmax.f32 %v2622, 0.0
        %v2893 = vmax.f32 %v2627, 0.0
        %v2894 = vmax.f32 %v2630, 0.0
        %v2895 = vmax.f32 %v2635, 0.0
        %v2896 = vmax.f32 %v2638, 0.0
        %v2897 = vadd.f32 %v2641, %v2642
        %v2898 = vadd.f32 %v2897, %v2643
        %v2899 = vadd.f32 %v2898, %v2644
        %v2900 = vadd.f32 %v2899, %v2645
        %v2901 = vadd.f32 %v2900, %v2646
        %v2902 = vadd.f32 %v2901, %v2647
        %v2903 = vadd.f32 %v2902, %v2648
        %v2904 = vadd.f32 %v2903, %v2649
        %v2905 = vadd.f32 %v2904, %v2650
        %v2906 = vadd.f32 %v2905, %v2651
        %v2907 = vadd.f32 %v2906, %v2652
        %v2908 = vadd.f32 %v2907, %v2653
        %v2909 = vadd.f32 %v2908, %v2654
        %v2910 = vadd.f32 %v2909, %v2655
        %v2911 = vadd.f32 %v2910, %v2656
        %v2912 = vadd.f32 %v2911, %v2657
        %v2913 = vadd.f32 %v2912, %v2658
        %v2914 = vadd.f32 %v2913, %v2659
        %v2915 = vadd.f32 %v2914, %v2660
        %v2916 = vadd.f32 %v2915, %v2661
        %v2917 = vadd.f32 %v2916, %v2662
        %v2918 = vadd.f32 %v2917, %v2663
        %v2919 = vadd.f32 %v2918, %v2664
        %v2920 = vadd.f32 %v2919, %v2665
        %v2921 = vadd.f32 %v2920, %v2666
        %v2922 = vadd.f32 %v2921, %v2667
        %v2923 = vadd.f32 %v2922, %v2668
        %v2924 = vadd.f32 %v2923, %v2669
        %v2925 = vadd.f32 %v2924, %v2670
        %v2926 = vadd.f32 %v2925, %v2671
        %v2927 = vadd.f32 %v2926, %v2672
        %v2928 = vrot.slane %v2927, 4
        %v2929 = vadd.f32 %v2927, %v2928
        %v2930 = vrot.slane %v2929, 2
        %v2931 = vadd.f32 %v2929, %v2930
        %v2932 = vrot.slane %v2931, 1
        %v2933 = vadd.f32 %v2931, %v2932
        %v2934 = vadd.f32 %v2673, %v2674
        %v2935 = vadd.f32 %v2934, %v2675
        %v2936 = vadd.f32 %v2935, %v2676
        %v2937 = vadd.f32 %v2936, %v2677
        %v2938 = vadd.f32 %v2937, %v2678
        %v2939 = vadd.f32 %v2938, %v2679
        %v2940 = vadd.f32 %v2939, %v2680
        %v2941 = vadd.f32 %v2940, %v2681
        %v2942 = vadd.f32 %v2941, %v2682
        %v2943 = vadd.f32 %v2942, %v2683
        %v2944 = vadd.f32 %v2943, %v2684
        %v2945 = vadd.f32 %v2944, %v2685
        %v2946 = vadd.f32 %v2945, %v2686
        %v2947 = vadd.f32 %v2946, %v2687
        %v2948 = vadd.f32 %v2947, %v2688
        %v2949 = vadd.f32 %v2948, %v2689
        %v2950 = vadd.f32 %v2949, %v2690
        %v2951 = vadd.f32 %v2950, %v2691
        %v2952 = vadd.f32 %v2951, %v2692
        %v2953 = vadd.f32 %v2952, %v2693
        %v2954 = vadd.f32 %v2953, %v2694
        %v2955 = vadd.f32 %v2954, %v2695
        %v2956 = vadd.f32 %v2955, %v2696
        %v2957 = vadd.f32 %v2956, %v2697
        %v2958 = vadd.f32 %v2957, %v2698
        %v2959 = vadd.f32 %v2958, %v2699
        %v2960 = vadd.f32 %v2959, %v2700
        %v2961 = vadd.f32 %v2960, %v2701
        %v2962 = vadd.f32 %v2961, %v2702
        %v2963 = vadd.f32 %v2962, %v2703
        %v2964 = vadd.f32 %v2963, %v2704
        %v2965 = vrot.slane %v2964, 4
        %v2966 = vadd.f32 %v2964, %v2965
        %v2967 = vrot.slane %v2966, 2
        %v2968 = vadd.f32 %v2966, %v2967
        %v2969 = vrot.slane %v2968, 1
        %v2970 = vadd.f32 %v2968, %v2969
        %v2971 = vadd.f32 %v2705, %v2706
        %v2972 = vadd.f32 %v2971, %v2707
        %v2973 = vadd.f32 %v2972, %v2708
        %v2974 = vadd.f32 %v2973, %v2709
        %v2975 = vadd.f32 %v2974, %v2710
        %v2976 = vadd.f32 %v2975, %v2711
        %v2977 = vadd.f32 %v2976, %v2712
        %v2978 = vadd.f32 %v2977, %v2713
        %v2979 = vadd.f32 %v2978, %v2714
        %v2980 = vadd.f32 %v2979, %v2715
        %v2981 = vadd.f32 %v2980, %v2716
        %v2982 = vadd.f32 %v2981, %v2717
        %v2983 = vadd.f32 %v2982, %v2718
        %v2984 = vadd.f32 %v2983, %v2719
        %v2985 = vadd.f32 %v2984, %v2720
        %v2986 = vadd.f32 %v2985, %v2721
        %v2987 = vadd.f32 %v2986, %v2722
        %v2988 = vadd.f32 %v2987, %v2723
        %v2989 = vadd.f32 %v2988, %v2724
        %v2990 = vadd.f32 %v2989, %v2725
        %v2991 = vadd.f32 %v2990, %v2726
        %v2992 = vadd.f32 %v2991, %v2727
        %v2993 = vadd.f32 %v2992, %v2728
        %v2994 = vadd.f32 %v2993, %v2729
        %v2995 = vadd.f32 %v2994, %v2730
        %v2996 = vadd.f32 %v2995, %v2731
        %v2997 = vadd.f32 %v2996, %v2732
        %v2998 = vadd.f32 %v2997, %v2733
        %v2999 = vadd.f32 %v2998, %v2734
        %v3000 = vadd.f32 %v2999, %v2735
        %v3001 = vadd.f32 %v3000, %v2736
        %v3002 = vrot.slane %v3001, 4
        %v3003 = vadd.f32 %v3001, %v3002
        %v3004 = vrot.slane %v3003, 2
        %v3005 = vadd.f32 %v3003, %v3004
        %v3006 = vrot.slane %v3005, 1
        %v3007 = vadd.f32 %v3005, %v3006
        %v3008 = vadd.f32 %v2737, %v2738
        %v3009 = vadd.f32 %v3008, %v2739
        %v3010 = vadd.f32 %v3009, %v2740
        %v3011 = vadd.f32 %v3010, %v2741
        %v3012 = vadd.f32 %v3011, %v2742
        %v3013 = vadd.f32 %v3012, %v2743
        %v3014 = vadd.f32 %v3013, %v2744
        %v3015 = vadd.f32 %v3014, %v2745
        %v3016 = vadd.f32 %v3015, %v2746
        %v3017 = vadd.f32 %v3016, %v2747
        %v3018 = vadd.f32 %v3017, %v2748
        %v3019 = vadd.f32 %v3018, %v2749
        %v3020 = vadd.f32 %v3019, %v2750
        %v3021 = vadd.f32 %v3020, %v2751
        %v3022 = vadd.f32 %v3021, %v2752
        %v3023 = vadd.f32 %v3022, %v2753
        %v3024 = vadd.f32 %v3023, %v2754
        %v3025 = vadd.f32 %v3024, %v2755
        %v3026 = vadd.f32 %v3025, %v2756
        %v3027 = vadd.f32 %v3026, %v2757
        %v3028 = vadd.f32 %v3027, %v2758
        %v3029 = vadd.f32 %v3028, %v2759
        %v3030 = vadd.f32 %v3029, %v2760
        %v3031 = vadd.f32 %v3030, %v2761
        %v3032 = vadd.f32 %v3031, %v2762
        %v3033 = vadd.f32 %v3032, %v2763
        %v3034 = vadd.f32 %v3033, %v2764
        %v3035 = vadd.f32 %v3034, %v2765
        %v3036 = vadd.f32 %v3035, %v2766
        %v3037 = vadd.f32 %v3036, %v2767
        %v3038 = vadd.f32 %v3037, %v2768
        %v3039 = vrot.slane %v3038, 4
        %v3040 = vadd.f32 %v3038, %v3039
        %v3041 = vrot.slane %v3040, 2
        %v3042 = vadd.f32 %v3040, %v3041
        %v3043 = vrot.slane %v3042, 1
        %v3044 = vadd.f32 %v3042, %v3043
        %v3045 = vadd.f32 %v2769, %v2770
        %v3046 = vadd.f32 %v3045, %v2771
        %v3047 = vadd.f32 %v3046, %v2772
        %v3048 = vadd.f32 %v3047, %v2773
        %v3049 = vadd.f32 %v3048, %v2774
        %v3050 = vadd.f32 %v3049, %v2775
        %v3051 = vadd.f32 %v3050, %v2776
        %v3052 = vadd.f32 %v3051, %v2777
        %v3053 = vadd.f32 %v3052, %v2778
        %v3054 = vadd.f32 %v3053, %v2779
        %v3055 = vadd.f32 %v3054, %v2780
        %v3056 = vadd.f32 %v3055, %v2781
        %v3057 = vadd.f32 %v3056, %v2782
        %v3058 = vadd.f32 %v3057, %v2783
        %v3059 = vadd.f32 %v3058, %v2784
        %v3060 = vadd.f32 %v3059, %v2785
        %v3061 = vadd.f32 %v3060, %v2786
        %v3062 = vadd.f32 %v3061, %v2787
        %v3063 = vadd.f32 %v3062, %v2788
        %v3064 = vadd.f32 %v3063, %v2789
        %v3065 = vadd.f32 %v3064, %v2790
        %v3066 = vadd.f32 %v3065, %v2791
        %v3067 = vadd.f32 %v3066, %v2792
        %v3068 = vadd.f32 %v3067, %v2793
        %v3069 = vadd.f32 %v3068, %v2794
        %v3070 = vadd.f32 %v3069, %v2795
        %v3071 = vadd.f32 %v3070, %v2796
        %v3072 = vadd.f32 %v3071, %v2797
        %v3073 = vadd.f32 %v3072, %v2798
        %v3074 = vadd.f32 %v3073, %v2799
        %v3075 = vadd.f32 %v3074, %v2800
        %v3076 = vrot.slane %v3075, 4
        %v3077 = vadd.f32 %v3075, %v3076
        %v3078 = vrot.slane %v3077, 2
        %v3079 = vadd.f32 %v3077, %v3078
        %v3080 = vrot.slane %v3079, 1
        %v3081 = vadd.f32 %v3079, %v3080
        %v3082 = vadd.f32 %v2801, %v2802
        %v3083 = vadd.f32 %v3082, %v2803
        %v3084 = vadd.f32 %v3083, %v2804
        %v3085 = vadd.f32 %v3084, %v2805
        %v3086 = vadd.f32 %v3085, %v2806
        %v3087 = vadd.f32 %v3086, %v2807
        %v3088 = vadd.f32 %v3087, %v2808
        %v3089 = vadd.f32 %v3088, %v2809
        %v3090 = vadd.f32 %v3089, %v2810
        %v3091 = vadd.f32 %v3090, %v2811
        %v3092 = vadd.f32 %v3091, %v2812
        %v3093 = vadd.f32 %v3092, %v2813
        %v3094 = vadd.f32 %v3093, %v2814
        %v3095 = vadd.f32 %v3094, %v2815
        %v3096 = vadd.f32 %v3095, %v2816
        %v3097 = vadd.f32 %v3096, %v2817
        %v3098 = vadd.f32 %v3097, %v2818
        %v3099 = vadd.f32 %v3098, %v2819
        %v3100 = vadd.f32 %v3099, %v2820
        %v3101 = vadd.f32 %v3100, %v2821
        %v3102 = vadd.f32 %v3101, %v2822
        %v3103 = vadd.f32 %v3102, %v2823
        %v3104 = vadd.f32 %v3103, %v2824
        %v3105 = vadd.f32 %v3104, %v2825
        %v3106 = vadd.f32 %v3105, %v2826
        %v3107 = vadd.f32 %v3106, %v2827
        %v3108 = vadd.f32 %v3107, %v2828
        %v3109 = vadd.f32 %v3108, %v2829
        %v3110 = vadd.f32 %v3109, %v2830
        %v3111 = vadd.f32 %v3110, %v2831
        %v3112 = vadd.f32 %v3111, %v2832
        %v3113 = vrot.slane %v3112, 4
        %v3114 = vadd.f32 %v3112, %v3113
        %v3115 = vrot.slane %v3114, 2
        %v3116 = vadd.f32 %v3114, %v3115
        %v3117 = vrot.slane %v3116, 1
        %v3118 = vadd.f32 %v3116, %v3117
        %v3119 = vadd.f32 %v2833, %v2834
        %v3120 = vadd.f32 %v3119, %v2835
        %v3121 = vadd.f32 %v3120, %v2836
        %v3122 = vadd.f32 %v3121, %v2837
        %v3123 = vadd.f32 %v3122, %v2838
        %v3124 = vadd.f32 %v3123, %v2839
        %v3125 = vadd.f32 %v3124, %v2840
        %v3126 = vadd.f32 %v3125, %v2841
        %v3127 = vadd.f32 %v3126, %v2842
        %v3128 = vadd.f32 %v3127, %v2843
        %v3129 = vadd.f32 %v3128, %v2844
        %v3130 = vadd.f32 %v3129, %v2845
        %v3131 = vadd.f32 %v3130, %v2846
        %v3132 = vadd.f32 %v3131, %v2847
        %v3133 = vadd.f32 %v3132, %v2848
        %v3134 = vadd.f32 %v3133, %v2849
        %v3135 = vadd.f32 %v3134, %v2850
        %v3136 = vadd.f32 %v3135, %v2851
        %v3137 = vadd.f32 %v3136, %v2852
        %v3138 = vadd.f32 %v3137, %v2853
        %v3139 = vadd.f32 %v3138, %v2854
        %v3140 = vadd.f32 %v3139, %v2855
        %v3141 = vadd.f32 %v3140, %v2856
        %v3142 = vadd.f32 %v3141, %v2857
        %v3143 = vadd.f32 %v3142, %v2858
        %v3144 = vadd.f32 %v3143, %v2859
        %v3145 = vadd.f32 %v3144, %v2860
        %v3146 = vadd.f32 %v3145, %v2861
        %v3147 = vadd.f32 %v3146, %v2862
        %v3148 = vadd.f32 %v3147, %v2863
        %v3149 = vadd.f32 %v3148, %v2864
        %v3150 = vrot.slane %v3149, 4
        %v3151 = vadd.f32 %v3149, %v3150
        %v3152 = vrot.slane %v3151, 2
        %v3153 = vadd.f32 %v3151, %v3152
        %v3154 = vrot.slane %v3153, 1
        %v3155 = vadd.f32 %v3153, %v3154
        %v3156 = vadd.f32 %v2865, %v2866
        %v3157 = vadd.f32 %v3156, %v2867
        %v3158 = vadd.f32 %v3157, %v2868
        %v3159 = vadd.f32 %v3158, %v2869
        %v3160 = vadd.f32 %v3159, %v2870
        %v3161 = vadd.f32 %v3160, %v2871
        %v3162 = vadd.f32 %v3161, %v2872
        %v3163 = vadd.f32 %v3162, %v2873
        %v3164 = vadd.f32 %v3163, %v2874
        %v3165 = vadd.f32 %v3164, %v2875
        %v3166 = vadd.f32 %v3165, %v2876
        %v3167 = vadd.f32 %v3166, %v2877
        %v3168 = vadd.f32 %v3167, %v2878
        %v3169 = vadd.f32 %v3168, %v2879
        %v3170 = vadd.f32 %v3169, %v2880
        %v3171 = vadd.f32 %v3170, %v2881
        %v3172 = vadd.f32 %v3171, %v2882
        %v3173 = vadd.f32 %v3172, %v2883
        %v3174 = vadd.f32 %v3173, %v2884
        %v3175 = vadd.f32 %v3174, %v2885
        %v3176 = vadd.f32 %v3175, %v2886
        %v3177 = vadd.f32 %v3176, %v2887
        %v3178 = vadd.f32 %v3177, %v2888
        %v3179 = vadd.f32 %v3178, %v2889
        %v3180 = vadd.f32 %v3179, %v2890
        %v3181 = vadd.f32 %v3180, %v2891
        %v3182 = vadd.f32 %v3181, %v2892
        %v3183 = vadd.f32 %v3182, %v2893
        %v3184 = vadd.f32 %v3183, %v2894
        %v3185 = vadd.f32 %v3184, %v2895
        %v3186 = vadd.f32 %v3185, %v2896
        %v3187 = vrot.slane %v3186, 4
        %v3188 = vadd.f32 %v3186, %v3187
        %v3189 = vrot.slane %v3188, 2
        %v3190 = vadd.f32 %v3188, %v3189
        %v3191 = vrot.slane %v3190, 1
        %v3192 = vadd.f32 %v3190, %v3191
        %v3193 = vpack.c.bf16 %v2933, %v2933
        %v3194 = vpack.c.bf16 %v2970, %v2970
        %v3195 = vpack.c.bf16 %v3007, %v3007
        %v3196 = vpack.c.bf16 %v3044, %v3044
        %v3197 = vpack.c.bf16 %v3081, %v3081
        %v3198 = vpack.c.bf16 %v3118, %v3118
        %v3199 = vpack.c.bf16 %v3155, %v3155
        %v3200 = vpack.c.bf16 %v3192, %v3192
        %v3201 = vld [vmem:[%s3] sm:$0xf]
        %v3202 = vld [vmem:[%s3 + $0x4] sm:$0xf]
        %v3203 = vld [vmem:[%s3 + $0x8] sm:$0xf]
        %v3204 = vld [vmem:[%s3 + $0xc] sm:$0xf]
        %v3205 = vld [vmem:[%s3 + $0x10] sm:$0xf]
        %v3206 = vld [vmem:[%s3 + $0x14] sm:$0xf]
        %v3207 = vld [vmem:[%s3 + $0x18] sm:$0xf]
        %v3208 = vld [vmem:[%s3 + $0x1c] sm:$0xf]
        %v3209 = vld [vmem:[%s3 + $0x20] sm:$0xf]
        %v3210 = vld [vmem:[%s3 + $0x24] sm:$0xf]
        %v3211 = vld [vmem:[%s3 + $0x28] sm:$0xf]
        %v3212 = vld [vmem:[%s3 + $0x2c] sm:$0xf]
        %v3213 = vld [vmem:[%s3 + $0x30] sm:$0xf]
        %v3214 = vld [vmem:[%s3 + $0x34] sm:$0xf]
        %v3215 = vld [vmem:[%s3 + $0x38] sm:$0xf]
        %v3216 = vld [vmem:[%s3 + $0x3c] sm:$0xf]
        %v3217 = vld [vmem:[%s4] sm:$0x1]
        %v3219 = vlaneseq
        %v3220 = vshrl.u32 %v3219, 7
        %v3221 = vsub.s32 0, %v3220
        %v3222 = vrot.slane %v3217, %v3221
        %v3232 = vunpack.c.l.b16 %v3193
        %v3233 = vunpack.c.l.b16 %v3194
        %v3234 = vunpack.c.l.b16 %v3195
        %v3235 = vunpack.c.l.b16 %v3196
        %v3236 = vunpack.c.l.b16 %v3197
        %v3237 = vunpack.c.l.b16 %v3198
        %v3238 = vunpack.c.l.b16 %v3199
        %v3239 = vunpack.c.l.b16 %v3200
        %vm3240 = vcmask 1041409
        %v3241 = vsel %vm3240, %v3233, %v3232
        %vm3242 = vcmask 1042434
        %v3243 = vsel %vm3242, %v3234, %v3241
        %vm3244 = vcmask 1043459
        %v3245 = vsel %vm3244, %v3235, %v3243
        %vm3246 = vcmask 1044484
        %v3247 = vsel %vm3246, %v3236, %v3245
        %vm3248 = vcmask 1045509
        %v3249 = vsel %vm3248, %v3237, %v3247
        %vm3250 = vcmask 1046534
        %v3251 = vsel %vm3250, %v3238, %v3249
        %vm3252 = vcmask 1047559
        %v3253 = vsel %vm3252, %v3239, %v3251
        %v3254 = vpack.c.b16 %v3253, %v3253
        %v3272 = vunpack.c.l.b16 %v3201
        %v3273 = vunpack.c.l.b16 %v3202
        %v3274 = vunpack.c.l.b16 %v3203
        %v3275 = vunpack.c.l.b16 %v3204
        %v3276 = vunpack.c.l.b16 %v3205
        %v3277 = vunpack.c.l.b16 %v3206
        %v3278 = vunpack.c.l.b16 %v3207
        %v3279 = vunpack.c.l.b16 %v3208
        %v3280 = vunpack.c.l.b16 %v3209
        %v3281 = vunpack.c.l.b16 %v3210
        %v3282 = vunpack.c.l.b16 %v3211
        %v3283 = vunpack.c.l.b16 %v3212
        %v3284 = vunpack.c.l.b16 %v3213
        %v3285 = vunpack.c.l.b16 %v3214
        %v3286 = vunpack.c.l.b16 %v3215
        %v3287 = vunpack.c.l.b16 %v3216
        %v3288 = vpack.c.b16 %v3273, %v3272
        %v3289 = vpack.c.b16 %v3275, %v3274
        %v3290 = vpack.c.b16 %v3277, %v3276
        %v3291 = vpack.c.b16 %v3279, %v3278
        %v3292 = vpack.c.b16 %v3281, %v3280
        %v3293 = vpack.c.b16 %v3283, %v3282
        %v3294 = vpack.c.b16 %v3285, %v3284
        %v3295 = vpack.c.b16 %v3287, %v3286
        %3304 = vmatprep.subr.bf16.mxu0 0
        %3305 = vmatpush1.bf16.msra.mxu0 %v3288
        %3306 = vmatprep.subr.bf16.mxu0 0
        %3307 = vmatpush1.bf16.msra.mxu0 %v3289
        %3308 = vmatprep.subr.bf16.mxu0 0
        %3309 = vmatpush1.bf16.msra.mxu0 %v3290
        %3310 = vmatprep.subr.bf16.mxu0 0
        %3311 = vmatpush1.bf16.msra.mxu0 %v3291
        %3312 = vmatprep.subr.bf16.mxu0 0
        %3313 = vmatpush1.bf16.msra.mxu0 %v3292
        %3314 = vmatprep.subr.bf16.mxu0 0
        %3315 = vmatpush1.bf16.msra.mxu0 %v3293
        %3316 = vmatprep.subr.bf16.mxu0 0
        %3317 = vmatpush1.bf16.msra.mxu0 %v3294
        %3318 = vmatprep.subr.bf16.mxu0 0
        %3319 = vmatpush1.bf16.msra.mxu0 %v3295
        %3320 = vmatprep.subr.bf16.mxu0 0
        %3321 = vmatpush1.bf16.msra.mxu0 0
        %3322 = vmatprep.subr.bf16.mxu0 0
        %3323 = vmatpush1.bf16.msra.mxu0 0
        %3324 = vmatprep.subr.bf16.mxu0 0
        %3325 = vmatpush1.bf16.msra.mxu0 0
        %3326 = vmatprep.subr.bf16.mxu0 0
        %3327 = vmatpush1.bf16.msra.mxu0 0
        %3328 = vmatprep.subr.bf16.mxu0 0
        %3329 = vmatpush1.bf16.msra.mxu0 0
        %3330 = vmatprep.subr.bf16.mxu0 0
        %3331 = vmatpush1.bf16.msra.mxu0 0
        %3332 = vmatprep.subr.bf16.mxu0 0
        %3333 = vmatpush1.bf16.msra.mxu0 0
        %3334 = vmatprep.subr.bf16.mxu0 0
        %3335 = vmatpush1.bf16.msra.mxu0 0
        %3336 = vmatprep.mubr.bf16.mxu0 0
        %3337 = vmatmul.mubr.bf16.gmra.mrb[0].mxu0 %v3254
        %v3338 = vpop.f32.mrb[0].mxu0
        %v3339 = vadd.f32 %v3222, %v3338
        %v3340 = vpop.f32.mrb[0].mxu0
        %v3341 = vpop.f32.mrb[0].mxu0
        %v3342 = vpop.f32.mrb[0].mxu0
        %3343 = vdwg.mxu0
        %v3345 = vcombine.high %v3339, %v3339
        %v3347 = vunpack.c.l.s4 1983009808
        %v3348 = vunpack.c.0.s8 %v3347
        %v3349 = vlaneseq
        %v3350 = vshrl.u32 %v3349, 7
        %v3351 = vsub.s32 %v3348, %v3350
        %v3352 = vrot.slane %v3339, %v3351
        %v3354 = vunpack.c.l.s4 1983009808
        %v3355 = vunpack.c.0.s8 %v3354
        %v3356 = vlaneseq
        %v3357 = vshrl.u32 %v3356, 7
        %v3358 = vsub.s32 %v3355, %v3357
        %v3359 = vrot.slane %v3345, %v3358
        %v3360 = vcombine.high %v3352, %v3352
        %v3361 = vcombine.high %v3359, %v3359
        %vm3366 = vcmask 1041408
        %v3367 = vsel %vm3366, %v3352, 0.0
        %v3368 = vrot.slane %v3367, 4
        %v3369 = vadd.f32 %v3367, %v3368
        %v3370 = vrot.slane %v3369, 2
        %v3371 = vadd.f32 %v3369, %v3370
        %v3372 = vrot.slane %v3371, 1
        %v3373 = vadd.f32 %v3371, %v3372
        %v3374 = vsel %vm3366, %v3360, 0.0
        %v3375 = vrot.slane %v3374, 4
        %v3376 = vadd.f32 %v3374, %v3375
        %v3377 = vrot.slane %v3376, 2
        %v3378 = vadd.f32 %v3376, %v3377
        %v3379 = vrot.slane %v3378, 1
        %v3380 = vadd.f32 %v3378, %v3379
        %v3381 = vsel %vm3366, %v3359, 0.0
        %v3382 = vrot.slane %v3381, 4
        %v3383 = vadd.f32 %v3381, %v3382
        %v3384 = vrot.slane %v3383, 2
        %v3385 = vadd.f32 %v3383, %v3384
        %v3386 = vrot.slane %v3385, 1
        %v3387 = vadd.f32 %v3385, %v3386
        %v3388 = vsel %vm3366, %v3361, 0.0
        %v3389 = vrot.slane %v3388, 4
        %v3390 = vadd.f32 %v3388, %v3389
        %v3391 = vrot.slane %v3390, 2
        %v3392 = vadd.f32 %v3390, %v3391
        %v3393 = vrot.slane %v3392, 1
        %v3394 = vadd.f32 %v3392, %v3393
        %v3395 = vrcp.pop 2.0
        %v3396 = vmul.f32 %v3373, %v3395
        %v3397 = vmul.f32 %v3380, %v3395
        %v3398 = vmul.f32 %v3387, %v3395
        %v3399 = vmul.f32 %v3394, %v3395
        %v3400 = vsub.f32 %v3352, %v3396
        %v3401 = vsub.f32 %v3360, %v3397
        %v3402 = vsub.f32 %v3359, %v3398
        %v3403 = vsub.f32 %v3361, %v3399
        %v3404 = vmul.f32 %v3400, %v3400
        %v3405 = vmul.f32 %v3401, %v3401
        %v3406 = vmul.f32 %v3402, %v3402
        %v3407 = vmul.f32 %v3403, %v3403
        %v3408 = vsel %vm3366, %v3404, 0.0
        %v3409 = vrot.slane %v3408, 4
        %v3410 = vadd.f32 %v3408, %v3409
        %v3411 = vrot.slane %v3410, 2
        %v3412 = vadd.f32 %v3410, %v3411
        %v3413 = vrot.slane %v3412, 1
        %v3414 = vadd.f32 %v3412, %v3413
        %v3415 = vsel %vm3366, %v3405, 0.0
        %v3416 = vrot.slane %v3415, 4
        %v3417 = vadd.f32 %v3415, %v3416
        %v3418 = vrot.slane %v3417, 2
        %v3419 = vadd.f32 %v3417, %v3418
        %v3420 = vrot.slane %v3419, 1
        %v3421 = vadd.f32 %v3419, %v3420
        %v3422 = vsel %vm3366, %v3406, 0.0
        %v3423 = vrot.slane %v3422, 4
        %v3424 = vadd.f32 %v3422, %v3423
        %v3425 = vrot.slane %v3424, 2
        %v3426 = vadd.f32 %v3424, %v3425
        %v3427 = vrot.slane %v3426, 1
        %v3428 = vadd.f32 %v3426, %v3427
        %v3429 = vsel %vm3366, %v3407, 0.0
        %v3430 = vrot.slane %v3429, 4
        %v3431 = vadd.f32 %v3429, %v3430
        %v3432 = vrot.slane %v3431, 2
        %v3433 = vadd.f32 %v3431, %v3432
        %v3434 = vrot.slane %v3433, 1
        %v3435 = vadd.f32 %v3433, %v3434
        %v3436 = vmul.f32 %v3414, %v3395
        %v3437 = vmul.f32 %v3421, %v3395
        %v3438 = vmul.f32 %v3428, %v3395
        %v3439 = vmul.f32 %v3435, %v3395
        %v3440 = vadd.f32 %v3436, 1e-05
        %v3441 = vadd.f32 %v3437, 1e-05
        %v3442 = vadd.f32 %v3438, 1e-05
        %v3443 = vadd.f32 %v3439, 1e-05
        %v3444 = vrsqrt.pop %v3440
        %v3445 = vrsqrt.pop %v3441
        %v3446 = vrsqrt.pop %v3442
        %v3447 = vrsqrt.pop %v3443
        %v3448 = vmul.f32 %v3400, %v3444
        %v3449 = vmul.f32 %v3401, %v3445
        %v3450 = vmul.f32 %v3402, %v3446
        %v3451 = vmul.f32 %v3403, %v3447
        %v3452 = vld [vmem:[%s5] sm:$0x1]
        %v3454 = vlaneseq
        %v3455 = vshrl.u32 %v3454, 7
        %v3456 = vsub.s32 0, %v3455
        %v3457 = vrot.slane %v3452, %v3456
        %v3458 = vcombine.high %v3457, %v3457
        %v3460 = vunpack.c.l.s4 1983009808
        %v3461 = vunpack.c.0.s8 %v3460
        %v3462 = vlaneseq
        %v3463 = vshrl.u32 %v3462, 7
        %v3464 = vsub.s32 %v3461, %v3463
        %v3465 = vrot.slane %v3457, %v3464
        %v3467 = vunpack.c.l.s4 1983009808
        %v3468 = vunpack.c.0.s8 %v3467
        %v3469 = vlaneseq
        %v3470 = vshrl.u32 %v3469, 7
        %v3471 = vsub.s32 %v3468, %v3470
        %v3472 = vrot.slane %v3458, %v3471
        %v3473 = vcombine.high %v3465, %v3465
        %v3474 = vcombine.high %v3472, %v3472
        %v3479 = vmul.f32 %v3448, %v3465
        %v3480 = vmul.f32 %v3449, %v3473
        %v3481 = vmul.f32 %v3450, %v3472
        %v3482 = vmul.f32 %v3451, %v3474
        %v3483 = vld [vmem:[%s6] sm:$0x1]
        %v3485 = vlaneseq
        %v3486 = vshrl.u32 %v3485, 7
        %v3487 = vsub.s32 0, %v3486
        %v3488 = vrot.slane %v3483, %v3487
        %v3489 = vcombine.high %v3488, %v3488
        %v3491 = vunpack.c.l.s4 1983009808
        %v3492 = vunpack.c.0.s8 %v3491
        %v3493 = vlaneseq
        %v3494 = vshrl.u32 %v3493, 7
        %v3495 = vsub.s32 %v3492, %v3494
        %v3496 = vrot.slane %v3488, %v3495
        %v3498 = vunpack.c.l.s4 1983009808
        %v3499 = vunpack.c.0.s8 %v3498
        %v3500 = vlaneseq
        %v3501 = vshrl.u32 %v3500, 7
        %v3502 = vsub.s32 %v3499, %v3501
        %v3503 = vrot.slane %v3489, %v3502
        %v3504 = vcombine.high %v3496, %v3496
        %v3505 = vcombine.high %v3503, %v3503
        %v3510 = vadd.f32 %v3479, %v3496
        %v3511 = vadd.f32 %v3480, %v3504
        %v3512 = vadd.f32 %v3481, %v3503
        %v3513 = vadd.f32 %v3482, %v3505
        %v3518 = vcombine.low %v3510, %v3511
        %v3519 = vcombine.low %v3512, %v3513
        %v3521 = vunpack.c.l.s4 1983009808
        %v3522 = vunpack.c.0.s8 %v3521
        %v3523 = vlaneseq
        %v3524 = vshrl.u32 %v3523, 7
        %v3525 = vsub.s32 %v3522, %v3524
        %v3526 = vrot.slane %v3518, %v3525
        %v3528 = vunpack.c.l.s4 1983009808
        %v3529 = vunpack.c.0.s8 %v3528
        %v3530 = vlaneseq
        %v3531 = vshrl.u32 %v3530, 7
        %v3532 = vsub.s32 %v3529, %v3531
        %v3533 = vrot.slane %v3519, %v3532
        %v3534 = vcombine.low %v3526, %v3533
        %3536 = vst [vmem:[%s272] sm:$0xff] %v3534
        %s3537 = sand.u32 %s181, 1
        %s3538 = scalar_lea.sflag [#allocation3], %s3537
        %s3539 = sand.u32 %s181, 1
        %s3540 = smul.addr %s3539, 8
        %s3541 = scalar_lea.vmem [#allocation2], %s3540
        // Predicated region
        $region49: #{tpu_custom_call.1} parent=47 // pred_check
          %p3542 = pneg %p191
        $region50: #{tpu_custom_call.1} parent=47 // pred_check_branch
          %3544 = sbr.rel (%p3542) target = $region52
        $region51: #{tpu_custom_call.1} parent=47 // pred_region
          %s3546 = ssub.s32 128, 128
          %3547 = vsyncadd %s3538, %s3546
          %s3548 = smul.addr %s21, 128
          %s3549 = scalar_lea.hbm %s7, %s3548
          %s3551 = sshll.u32 %s3541, 4
          %s3552 = int_to_ptr.vmem [resolvable:$true] %s3551
          %3554 = dma.vmem_to_hbm [thread:$0]  %s3552, 128, %s3549, %s3538
        $region52: #{tpu_custom_call.1} parent=47 // pred_fallthru
          _
      $region48: #{tpu_custom_call.1} parent=5 // pred_fallthru
        _
      %p3555 = scmp.le.s32.totalorder 2, %s16
      // Predicated region
      $region53: #{tpu_custom_call.1} parent=5 // pred_check
        %p3556 = pneg %p3555
      $region54: #{tpu_custom_call.1} parent=5 // pred_check_branch
        %3558 = sbr.rel (%p3556) target = $region56
      $region55: #{tpu_custom_call.1} parent=5 // pred_region
        %s3559 = ssub.s32 %s16, 2
        // Predicated region
        $region57: #{tpu_custom_call.1} parent=55 // pred_check
          %p3560 = pneg %p197
        $region58: #{tpu_custom_call.1} parent=55 // pred_check_branch
          %3562 = sbr.rel (%p3560) target = $region60
        $region59: #{tpu_custom_call.1} parent=55 // pred_region
          %s3563 = sand.u32 %s182, 1
          %s3564 = scalar_lea.sflag [#allocation3], %s3563
          %s3565 = sand.u32 %s182, 1
          %s3566 = smul.addr %s3565, 8
          %s3567 = scalar_lea.vmem [#allocation2], %s3566
          %3568 = dma.done %s3564, 128
        $region60: #{tpu_custom_call.1} parent=55 // pred_fallthru
          _
      $region56: #{tpu_custom_call.1} parent=5 // pred_fallthru
        _
    $region6: #{tpu_custom_call.1} parent=1 // loop_footer
      %s20 = sadd.s32 1, %s16
    $region7: #{tpu_custom_call.1} parent=1 // loop_footer_branch
      %15 = sbr.rel target = $region3
    $region8: #{tpu_custom_call.1} parent=1 // loop_exit
      _
    %3569 = vsyncpa [#allocation3], 1
    %s3570 = scalar_lea.sflag [#allocation3], 1
    %3571 = vsyncpa %s3570, 1

</llo_original>
